<compile_context>
chip_gen: v6e
topology: v6e:2x2x1
jax: 0.10.0
libtpu: 0.0.40
codegen_flags: <defaults>
</compile_context>

<pallas_src>
import math
import jax
import jax.numpy as jnp
from jax import lax
from jax.experimental import pallas as pl
from jax.experimental.pallas import tpu as pltpu

N_HEAD = 4
EPS = 1e-5  # nn.LayerNorm default


def _layernorm(h, g, b):
    # stats kept in f32
    mu = jnp.mean(h, axis=-1, keepdims=True)
    var = jnp.mean((h - mu) ** 2, axis=-1, keepdims=True)
    return (h - mu) * lax.rsqrt(var + EPS) * g + b


def block_kernel(x_ref, ln1g_ref, ln1b_ref, wattn_ref, battn_ref,
                 wproj_ref, bproj_ref, ln2g_ref, ln2b_ref,
                 wfc_ref, bfc_ref, wcp_ref, bcp_ref, o_ref):
    bblk, T, C = x_ref.shape
    hd = C // N_HEAD

    x2d = x_ref[...].reshape(bblk * T, C)                         # (bblk*T, C), f32

    # ---------------- attention branch: x + attn(ln_1(x)) ----------------
    h = _layernorm(x2d, ln1g_ref[0], ln1b_ref[0])                 # f32
    qkv = jnp.dot(h.astype(jnp.bfloat16), wattn_ref[...],
                  preferred_element_type=jnp.float32) + battn_ref[0]
    # relu(q), relu(k), relu(v); 1/sqrt(hd) is pre-folded into the q columns of wattn/battn
    qkv = jnp.maximum(qkv, 0.0)
    q3 = qkv[:, :C].reshape(bblk, T, C).astype(jnp.bfloat16)
    k3 = qkv[:, C:2 * C].reshape(bblk, T, C).astype(jnp.bfloat16)
    v3 = qkv[:, 2 * C:].reshape(bblk, T, C).astype(jnp.bfloat16)

    # causal mask generated in-kernel (iota + compare == free VPU work, zero HBM traffic)
    row = lax.broadcasted_iota(jnp.int32, (T, T), 0)
    col = lax.broadcasted_iota(jnp.int32, (T, T), 1)
    mask = jnp.broadcast_to((col <= row).astype(jnp.float32), (bblk, T, T))  # hoisted once

    ys = []
    for hh in range(N_HEAD):                                      # static loop, N_HEAD is small
        sl = slice(hh * hd, (hh + 1) * hd)
        s = jnp.einsum('bqd,bkd->bqk', q3[:, :, sl], k3[:, :, sl],
                       preferred_element_type=jnp.float32)        # (bblk, T, T) f32
        p = jnp.maximum(s, 0.0) * mask                            # relu + causal (== -inf then relu)
        yh = jnp.einsum('bqk,bkd->bqd', p.astype(jnp.bfloat16), v3[:, :, sl],
                        preferred_element_type=jnp.float32)       # (bblk, T, hd) f32 acc
        ys.append(yh.astype(jnp.bfloat16))
    # one lane-dense slab instead of N_HEAD masked partial stores into a scratch
    y2d = jnp.concatenate(ys, axis=-1).reshape(bblk * T, C)       # (bblk*T, C) bf16

    y2d = jnp.dot(y2d, wproj_ref[...],
                  preferred_element_type=jnp.float32) + bproj_ref[0]
    # TODO(synk): attn/resid/mlp Dropout layers are treated as identity (eval-mode semantics)
    x1 = x2d + y2d                                                # f32 residual

    # ---------------- MLP branch: x + c_proj(relu(c_fc(ln_2(x)))) ----------------
    h2 = _layernorm(x1, ln2g_ref[0], ln2b_ref[0])
    hid = jnp.dot(h2.astype(jnp.bfloat16), wfc_ref[...],
                  preferred_element_type=jnp.float32) + bfc_ref[0]
    hid = jnp.maximum(hid, 0.0)
    out = jnp.dot(hid.astype(jnp.bfloat16), wcp_ref[...],
                  preferred_element_type=jnp.float32) + bcp_ref[0]

    o_ref[...] = (x1 + out).reshape(bblk, T, C).astype(o_ref.dtype)


PARAM_ORDER = ["ln1g", "ln1b", "wattnT", "battn", "wprojT", "bproj",
               "ln2g", "ln2b", "wfcT", "bfc", "wcpT", "bcp"]
_BF16_WEIGHTS = ("wattnT", "wprojT", "wfcT", "wcpT")


def _vmem_budget_bytes():
    """Generation-aware VMEM budget (~48 MiB on v7x, ~96 MiB on v5e/v6e)."""
    try:
        cap = int(pltpu.get_tpu_info().vmem_capacity_bytes)
        return (cap * 3) // 4
    except Exception:
        return 48 * 1024 * 1024  # safe on every generation (v7x only has 64 MiB)


def _pick_bblk(B, T, C, budget_bytes, weight_bytes):
    """Largest divisor of B that (a) keeps >=2 grid steps (v7x megacore) and (b) fits VMEM."""
    def est(bb):
        rows = bb * T
        io = 2 * 2 * rows * C * 4            # x block + out block, double-buffered, f32
        scores = bb * T * T * (4 + 2)        # one head's f32 scores + bf16 probs live at a time
        work = 8 * rows * C * 4              # qkv / h / y / hid working values (rough)
        return weight_bytes + io + scores + work

    cap_div = max(1, B // 2)                 # keep >=2 grid steps so both v7x TCs get work
    best = 1
    for d in range(1, B + 1):
        if B % d == 0 and d <= cap_div and est(d) <= budget_bytes:
            best = max(best, d)
    return best


def block_forward(x, params, *, bblk=None):
    B, T, C = x.shape
    assert C % N_HEAD == 0
    hd = C // N_HEAD

    # ---- host-side weight prep ----
    p = {k: jnp.asarray(v) for k, v in params.items()}
    scale = 1.0 / math.sqrt(hd)
    # fold 1/sqrt(hd) into the q columns of c_attn (relu commutes with a positive scale)
    p["wattnT"] = p["wattnT"].at[:, :C].multiply(scale)
    p["battn"] = p["battn"].at[:, :C].multiply(scale)
    # pre-cast the big weight matrices to bf16 (MXU operands, halves weight DMA)
    for k in _BF16_WEIGHTS:
        p[k] = p[k].astype(jnp.bfloat16)
    pins = [p[k] for k in PARAM_ORDER]
    weight_bytes = sum(int(a.size) * a.dtype.itemsize for a in pins)

    budget = _vmem_budget_bytes()
    if bblk is None:
        bblk = _pick_bblk(B, T, C, budget, weight_bytes)
    assert B % bblk == 0
    grid = (B // bblk,)

    flops = 2 * B * T * (8 * C * C + 2 * T * C)   # qkv + scores + att@v + proj + fc + c_proj
    bytes_accessed = 2 * B * T * C * x.dtype.itemsize + weight_bytes

    def build(single_buffer):
        def const2d(a):
            if single_buffer:
                # constant block index across the grid -> no point double-buffering it
                return pl.BlockSpec(a.shape, lambda b: (0, 0), pipeline_mode=pl.Buffered(1))
            return pl.BlockSpec(a.shape, lambda b: (0, 0))

        in_specs = ([pl.BlockSpec((bblk, T, C), lambda b: (b, 0, 0))]
                    + [const2d(a) for a in pins])

        return pl.pallas_call(
            block_kernel,
            out_shape=jax.ShapeDtypeStruct((B, T, C), x.dtype),
            grid=grid,
            in_specs=in_specs,
            out_specs=pl.BlockSpec((bblk, T, C), lambda b: (b, 0, 0)),
            compiler_params=pltpu.CompilerParams(
                dimension_semantics=("parallel",),
                vmem_limit_bytes=int(budget)),
            cost_estimate=pl.CostEstimate(
                flops=flops, transcendentals=2 * B * T, bytes_accessed=bytes_accessed),
        )

    try:
        return build(single_buffer=True)(x, *pins)
    except Exception:
        # TODO(synk): pl.Buffered(1) unsupported on this jax build; fall back to default buffering
        return build(single_buffer=False)(x, *pins)


# ------------------ pure-JAX fp32 reference for verification ------------------
def ref_block(x, p):
    def ln(h, g, b):
        mu = h.mean(-1, keepdims=True)
        var = ((h - mu) ** 2).mean(-1, keepdims=True)
        return (h - mu) / jnp.sqrt(var + EPS) * g + b

    B, T, C = x.shape
    hd = C // N_HEAD
    h = ln(x, p["ln1g"][0], p["ln1b"][0])
    qkv = jnp.maximum(h @ p["wattnT"] + p["battn"][0], 0.0)
    q, k, v = jnp.split(qkv, 3, axis=-1)
    qh = q.reshape(B, T, N_HEAD, hd).transpose(0, 2, 1, 3)
    kh = k.reshape(B, T, N_HEAD, hd).transpose(0, 2, 1, 3)
    vh = v.reshape(B, T, N_HEAD, hd).transpose(0, 2, 1, 3)
    att = (qh @ kh.transpose(0, 1, 3, 2)) / math.sqrt(hd)
    mask = jnp.tril(jnp.ones((T, T), bool))
    att = jnp.maximum(jnp.where(mask, att, -jnp.inf), 0.0)
    y = (att @ vh).transpose(0, 2, 1, 3).reshape(B, T, C)
    y = y @ p["wprojT"] + p["bproj"][0]
    x = x + y
    h2 = ln(x, p["ln2g"][0], p["ln2b"][0])
    hid = jnp.maximum(h2 @ p["wfcT"] + p["bfc"][0], 0.0)
    return x + hid @ p["wcpT"] + p["bcp"][0]


if __name__ == "__main__":
    B, T, C = 2, 8, 32
    key = jax.random.PRNGKey(0)
    ks = jax.random.split(key, 12)

    params = {
        "ln1g":   (1.0 + 0.1 * jax.random.normal(ks[0], (1, C))).astype(jnp.float32),
        "ln1b":   (0.01 * jax.random.normal(ks[1], (1, C))).astype(jnp.float32),
        "wattnT": (0.02 * jax.random.normal(ks[2], (C, 3 * C))).astype(jnp.float32),
        "battn":  (0.01 * jax.random.normal(ks[3], (1, 3 * C))).astype(jnp.float32),
        "wprojT": (0.02 * jax.random.normal(ks[4], (C, C))).astype(jnp.float32),
        "bproj":  (0.01 * jax.random.normal(ks[5], (1, C))).astype(jnp.float32),
        "ln2g":   (1.0 + 0.1 * jax.random.normal(ks[6], (1, C))).astype(jnp.float32),
        "ln2b":   (0.01 * jax.random.normal(ks[7], (1, C))).astype(jnp.float32),
        "wfcT":   (0.02 * jax.random.normal(ks[8], (C, 2 * C))).astype(jnp.float32),
        "bfc":    (0.01 * jax.random.normal(ks[9], (1, 2 * C))).astype(jnp.float32),
        "wcpT":   (0.02 * jax.random.normal(ks[10], (2 * C, C))).astype(jnp.float32),
        "bcp":    (0.01 * jax.random.normal(ks[11], (1, C))).astype(jnp.float32),
    }

    x = jax.random.normal(jax.random.PRNGKey(42), (B, T, C), dtype=jnp.float32)

    out = jax.block_until_ready(block_forward(x, params))
    ref = jax.block_until_ready(ref_block(x, params))

    assert out.shape == (B, T, C)
    # bf16 MXU operands with f32 accumulation -> small deviation vs the fp32 reference
    assert jnp.allclose(out, ref, atol=2e-2, rtol=2e-2), "mismatch vs pure-JAX reference"
    print("KERNEL_OK")
</pallas_src>

<mosaic_0001>
module attributes {stable_mosaic.version = 11 : i64} {
  func.func @block_kernel(%arg0: i32, %arg1: memref<1x8x32xf32, #tpu.memory_space<vmem>>, %arg2: memref<1x32xf32, #tpu.memory_space<vmem>>, %arg3: memref<1x32xf32, #tpu.memory_space<vmem>>, %arg4: memref<32x96xbf16, #tpu.memory_space<vmem>>, %arg5: memref<1x96xf32, #tpu.memory_space<vmem>>, %arg6: memref<32x32xbf16, #tpu.memory_space<vmem>>, %arg7: memref<1x32xf32, #tpu.memory_space<vmem>>, %arg8: memref<1x32xf32, #tpu.memory_space<vmem>>, %arg9: memref<1x32xf32, #tpu.memory_space<vmem>>, %arg10: memref<32x64xbf16, #tpu.memory_space<vmem>>, %arg11: memref<1x64xf32, #tpu.memory_space<vmem>>, %arg12: memref<64x32xbf16, #tpu.memory_space<vmem>>, %arg13: memref<1x32xf32, #tpu.memory_space<vmem>>, %arg14: memref<1x8x32xf32, #tpu.memory_space<vmem>>) attributes {dimension_semantics = [#tpu.dimension_semantics<parallel>], iteration_bounds = array<i64: 2>, scalar_prefetch = 0 : i64, scratch_operands = 0 : i64, tpu.core_type = #tpu.core_type<tc>, window_params = [{transform_indices = @transform_0, window_bounds = array<i64: 1, 8, 32>}, {pipeline_mode = #tpu.pipeline_mode<synchronous>, transform_indices = @transform_1, window_bounds = array<i64: 1, 32>}, {pipeline_mode = #tpu.pipeline_mode<synchronous>, transform_indices = @transform_2, window_bounds = array<i64: 1, 32>}, {pipeline_mode = #tpu.pipeline_mode<synchronous>, transform_indices = @transform_3, window_bounds = array<i64: 32, 96>}, {pipeline_mode = #tpu.pipeline_mode<synchronous>, transform_indices = @transform_4, window_bounds = array<i64: 1, 96>}, {pipeline_mode = #tpu.pipeline_mode<synchronous>, transform_indices = @transform_5, window_bounds = array<i64: 32, 32>}, {pipeline_mode = #tpu.pipeline_mode<synchronous>, transform_indices = @transform_6, window_bounds = array<i64: 1, 32>}, {pipeline_mode = #tpu.pipeline_mode<synchronous>, transform_indices = @transform_7, window_bounds = array<i64: 1, 32>}, {pipeline_mode = #tpu.pipeline_mode<synchronous>, transform_indices = @transform_8, window_bounds = array<i64: 1, 32>}, {pipeline_mode = #tpu.pipeline_mode<synchronous>, transform_indices = @transform_9, window_bounds = array<i64: 32, 64>}, {pipeline_mode = #tpu.pipeline_mode<synchronous>, transform_indices = @transform_10, window_bounds = array<i64: 1, 64>}, {pipeline_mode = #tpu.pipeline_mode<synchronous>, transform_indices = @transform_11, window_bounds = array<i64: 64, 32>}, {pipeline_mode = #tpu.pipeline_mode<synchronous>, transform_indices = @transform_12, window_bounds = array<i64: 1, 32>}, {transform_indices = @transform_13, window_bounds = array<i64: 1, 8, 32>}]} {
    %c0 = arith.constant 0 : index
    %c0_0 = arith.constant 0 : index
    %c0_1 = arith.constant 0 : index
    %0 = vector.load %arg1[%c0, %c0_0, %c0_1] : memref<1x8x32xf32, #tpu.memory_space<vmem>>, vector<1x8x32xf32>
    %1 = vector.shape_cast %0 : vector<1x8x32xf32> to vector<8x32xf32>
    %c0_2 = arith.constant 0 : index
    %c0_3 = arith.constant 0 : index
    %2 = vector.load %arg2[%c0_2, %c0_3] : memref<1x32xf32, #tpu.memory_space<vmem>>, vector<1x32xf32>
    %3 = vector.shape_cast %2 : vector<1x32xf32> to vector<32xf32>
    %c0_4 = arith.constant 0 : index
    %c0_5 = arith.constant 0 : index
    %4 = vector.load %arg3[%c0_4, %c0_5] : memref<1x32xf32, #tpu.memory_space<vmem>>, vector<1x32xf32>
    %5 = vector.shape_cast %4 : vector<1x32xf32> to vector<32xf32>
    %cst = arith.constant dense<0.000000e+00> : vector<8xf32>
    %6 = vector.multi_reduction <add>, %1, %cst [1] : vector<8x32xf32> to vector<8xf32>
    %7 = vector.shape_cast %6 : vector<8xf32> to vector<8x1xf32>
    %cst_6 = arith.constant 3.200000e+01 : f32
    %8 = vector.broadcast %cst_6 : f32 to vector<8x1xf32>
    %9 = arith.divf %7, %8 : vector<8x1xf32>
    %10 = vector.broadcast %9 : vector<8x1xf32> to vector<8x32xf32>
    %11 = arith.subf %1, %10 : vector<8x32xf32>
    %12 = arith.mulf %11, %11 : vector<8x32xf32>
    %cst_7 = arith.constant dense<0.000000e+00> : vector<8xf32>
    %13 = vector.multi_reduction <add>, %12, %cst_7 [1] : vector<8x32xf32> to vector<8xf32>
    %14 = vector.shape_cast %13 : vector<8xf32> to vector<8x1xf32>
    %cst_8 = arith.constant 3.200000e+01 : f32
    %15 = vector.broadcast %cst_8 : f32 to vector<8x1xf32>
    %16 = arith.divf %14, %15 : vector<8x1xf32>
    %17 = vector.broadcast %9 : vector<8x1xf32> to vector<8x32xf32>
    %18 = arith.subf %1, %17 : vector<8x32xf32>
    %cst_9 = arith.constant 9.99999974E-6 : f32
    %19 = vector.broadcast %cst_9 : f32 to vector<8x1xf32>
    %20 = arith.addf %16, %19 : vector<8x1xf32>
    %21 = math.rsqrt %20 : vector<8x1xf32>
    %22 = vector.broadcast %21 : vector<8x1xf32> to vector<8x32xf32>
    %23 = arith.mulf %18, %22 : vector<8x32xf32>
    %24 = vector.shape_cast %3 : vector<32xf32> to vector<1x32xf32>
    %25 = vector.broadcast %24 : vector<1x32xf32> to vector<8x32xf32>
    %26 = arith.mulf %23, %25 : vector<8x32xf32>
    %27 = vector.shape_cast %5 : vector<32xf32> to vector<1x32xf32>
    %28 = vector.broadcast %27 : vector<1x32xf32> to vector<8x32xf32>
    %29 = arith.addf %26, %28 : vector<8x32xf32>
    %30 = arith.truncf %29 : vector<8x32xf32> to vector<8x32xbf16>
    %c0_10 = arith.constant 0 : index
    %c0_11 = arith.constant 0 : index
    %31 = vector.load %arg4[%c0_10, %c0_11] : memref<32x96xbf16, #tpu.memory_space<vmem>>, vector<32x96xbf16>
    %cst_12 = arith.constant dense<0.000000e+00> : vector<8x96xf32>
    %32 = tpu.matmul %30, %31, %cst_12 {dimension_numbers = #tpu.dot_dimension_numbers<[1], [0], [0], [1], [0, 0, 1, 1], [], []>} : vector<8x32xbf16>, vector<32x96xbf16>, vector<8x96xf32> -> vector<8x96xf32>
    %c0_13 = arith.constant 0 : index
    %c0_14 = arith.constant 0 : index
    %33 = vector.load %arg5[%c0_13, %c0_14] : memref<1x96xf32, #tpu.memory_space<vmem>>, vector<1x96xf32>
    %34 = vector.shape_cast %33 : vector<1x96xf32> to vector<96xf32>
    %35 = vector.shape_cast %34 : vector<96xf32> to vector<1x96xf32>
    %36 = vector.broadcast %35 : vector<1x96xf32> to vector<8x96xf32>
    %37 = arith.addf %32, %36 : vector<8x96xf32>
    %cst_15 = arith.constant 0.000000e+00 : f32
    %38 = vector.broadcast %cst_15 : f32 to vector<8x96xf32>
    %39 = arith.maximumf %37, %38 : vector<8x96xf32>
    %40 = vector.extract_strided_slice %39 {offsets = [0, 0], sizes = [8, 32], strides = [1, 1]} : vector<8x96xf32> to vector<8x32xf32>
    %41 = vector.shape_cast %40 : vector<8x32xf32> to vector<1x8x32xf32>
    %42 = arith.truncf %41 : vector<1x8x32xf32> to vector<1x8x32xbf16>
    %43 = vector.extract_strided_slice %39 {offsets = [0, 32], sizes = [8, 32], strides = [1, 1]} : vector<8x96xf32> to vector<8x32xf32>
    %44 = vector.shape_cast %43 : vector<8x32xf32> to vector<1x8x32xf32>
    %45 = arith.truncf %44 : vector<1x8x32xf32> to vector<1x8x32xbf16>
    %46 = vector.extract_strided_slice %39 {offsets = [0, 64], sizes = [8, 32], strides = [1, 1]} : vector<8x96xf32> to vector<8x32xf32>
    %47 = vector.shape_cast %46 : vector<8x32xf32> to vector<1x8x32xf32>
    %48 = arith.truncf %47 : vector<1x8x32xf32> to vector<1x8x32xbf16>
    %49 = tpu.iota {dimensions = array<i32: 0>} : vector<8x8xi32>
    %50 = tpu.iota {dimensions = array<i32: 1>} : vector<8x8xi32>
    %51 = arith.cmpi sle, %50, %49 : vector<8x8xi32>
    %52 = arith.extui %51 : vector<8x8xi1> to vector<8x8xi32>
    %53 = arith.sitofp %52 : vector<8x8xi32> to vector<8x8xf32>
    %54 = vector.shape_cast %53 : vector<8x8xf32> to vector<1x8x8xf32>
    %55 = vector.extract_strided_slice %42 {offsets = [0, 0, 0], sizes = [1, 8, 8], strides = [1, 1, 1]} : vector<1x8x32xbf16> to vector<1x8x8xbf16>
    %56 = vector.extract_strided_slice %45 {offsets = [0, 0, 0], sizes = [1, 8, 8], strides = [1, 1, 1]} : vector<1x8x32xbf16> to vector<1x8x8xbf16>
    "tpu.trace_start"() <{level = 10 : i32, message = "bqd,bkd->bqk"}> : () -> ()
    %cst_16 = arith.constant dense<0.000000e+00> : vector<1x8x8xf32>
    %57 = tpu.matmul %55, %56, %cst_16 {dimension_numbers = #tpu.dot_dimension_numbers<[2], [2], [1], [1], [0, 0, 0, 1, 1, 1], [0], [0]>} : vector<1x8x8xbf16>, vector<1x8x8xbf16>, vector<1x8x8xf32> -> vector<1x8x8xf32>
    "tpu.trace_stop"() : () -> ()
    %cst_17 = arith.constant 0.000000e+00 : f32
    %58 = vector.broadcast %cst_17 : f32 to vector<1x8x8xf32>
    %59 = arith.maximumf %57, %58 : vector<1x8x8xf32>
    %60 = arith.mulf %59, %54 : vector<1x8x8xf32>
    %61 = arith.truncf %60 : vector<1x8x8xf32> to vector<1x8x8xbf16>
    %62 = vector.extract_strided_slice %48 {offsets = [0, 0, 0], sizes = [1, 8, 8], strides = [1, 1, 1]} : vector<1x8x32xbf16> to vector<1x8x8xbf16>
    "tpu.trace_start"() <{level = 10 : i32, message = "bqk,bkd->bqd"}> : () -> ()
    %cst_18 = arith.constant dense<0.000000e+00> : vector<1x8x8xf32>
    %63 = tpu.matmul %61, %62, %cst_18 {dimension_numbers = #tpu.dot_dimension_numbers<[2], [1], [1], [2], [0, 0, 0, 1, 1, 2], [0], [0]>} : vector<1x8x8xbf16>, vector<1x8x8xbf16>, vector<1x8x8xf32> -> vector<1x8x8xf32>
    "tpu.trace_stop"() : () -> ()
    %64 = arith.truncf %63 : vector<1x8x8xf32> to vector<1x8x8xbf16>
    %65 = vector.extract_strided_slice %42 {offsets = [0, 0, 8], sizes = [1, 8, 8], strides = [1, 1, 1]} : vector<1x8x32xbf16> to vector<1x8x8xbf16>
    %66 = vector.extract_strided_slice %45 {offsets = [0, 0, 8], sizes = [1, 8, 8], strides = [1, 1, 1]} : vector<1x8x32xbf16> to vector<1x8x8xbf16>
    "tpu.trace_start"() <{level = 10 : i32, message = "bqd,bkd->bqk"}> : () -> ()
    %cst_19 = arith.constant dense<0.000000e+00> : vector<1x8x8xf32>
    %67 = tpu.matmul %65, %66, %cst_19 {dimension_numbers = #tpu.dot_dimension_numbers<[2], [2], [1], [1], [0, 0, 0, 1, 1, 1], [0], [0]>} : vector<1x8x8xbf16>, vector<1x8x8xbf16>, vector<1x8x8xf32> -> vector<1x8x8xf32>
    "tpu.trace_stop"() : () -> ()
    %cst_20 = arith.constant 0.000000e+00 : f32
    %68 = vector.broadcast %cst_20 : f32 to vector<1x8x8xf32>
    %69 = arith.maximumf %67, %68 : vector<1x8x8xf32>
    %70 = arith.mulf %69, %54 : vector<1x8x8xf32>
    %71 = arith.truncf %70 : vector<1x8x8xf32> to vector<1x8x8xbf16>
    %72 = vector.extract_strided_slice %48 {offsets = [0, 0, 8], sizes = [1, 8, 8], strides = [1, 1, 1]} : vector<1x8x32xbf16> to vector<1x8x8xbf16>
    "tpu.trace_start"() <{level = 10 : i32, message = "bqk,bkd->bqd"}> : () -> ()
    %cst_21 = arith.constant dense<0.000000e+00> : vector<1x8x8xf32>
    %73 = tpu.matmul %71, %72, %cst_21 {dimension_numbers = #tpu.dot_dimension_numbers<[2], [1], [1], [2], [0, 0, 0, 1, 1, 2], [0], [0]>} : vector<1x8x8xbf16>, vector<1x8x8xbf16>, vector<1x8x8xf32> -> vector<1x8x8xf32>
    "tpu.trace_stop"() : () -> ()
    %74 = arith.truncf %73 : vector<1x8x8xf32> to vector<1x8x8xbf16>
    %75 = vector.extract_strided_slice %42 {offsets = [0, 0, 16], sizes = [1, 8, 8], strides = [1, 1, 1]} : vector<1x8x32xbf16> to vector<1x8x8xbf16>
    %76 = vector.extract_strided_slice %45 {offsets = [0, 0, 16], sizes = [1, 8, 8], strides = [1, 1, 1]} : vector<1x8x32xbf16> to vector<1x8x8xbf16>
    "tpu.trace_start"() <{level = 10 : i32, message = "bqd,bkd->bqk"}> : () -> ()
    %cst_22 = arith.constant dense<0.000000e+00> : vector<1x8x8xf32>
    %77 = tpu.matmul %75, %76, %cst_22 {dimension_numbers = #tpu.dot_dimension_numbers<[2], [2], [1], [1], [0, 0, 0, 1, 1, 1], [0], [0]>} : vector<1x8x8xbf16>, vector<1x8x8xbf16>, vector<1x8x8xf32> -> vector<1x8x8xf32>
    "tpu.trace_stop"() : () -> ()
    %cst_23 = arith.constant 0.000000e+00 : f32
    %78 = vector.broadcast %cst_23 : f32 to vector<1x8x8xf32>
    %79 = arith.maximumf %77, %78 : vector<1x8x8xf32>
    %80 = arith.mulf %79, %54 : vector<1x8x8xf32>
    %81 = arith.truncf %80 : vector<1x8x8xf32> to vector<1x8x8xbf16>
    %82 = vector.extract_strided_slice %48 {offsets = [0, 0, 16], sizes = [1, 8, 8], strides = [1, 1, 1]} : vector<1x8x32xbf16> to vector<1x8x8xbf16>
    "tpu.trace_start"() <{level = 10 : i32, message = "bqk,bkd->bqd"}> : () -> ()
    %cst_24 = arith.constant dense<0.000000e+00> : vector<1x8x8xf32>
    %83 = tpu.matmul %81, %82, %cst_24 {dimension_numbers = #tpu.dot_dimension_numbers<[2], [1], [1], [2], [0, 0, 0, 1, 1, 2], [0], [0]>} : vector<1x8x8xbf16>, vector<1x8x8xbf16>, vector<1x8x8xf32> -> vector<1x8x8xf32>
    "tpu.trace_stop"() : () -> ()
    %84 = arith.truncf %83 : vector<1x8x8xf32> to vector<1x8x8xbf16>
    %85 = vector.extract_strided_slice %42 {offsets = [0, 0, 24], sizes = [1, 8, 8], strides = [1, 1, 1]} : vector<1x8x32xbf16> to vector<1x8x8xbf16>
    %86 = vector.extract_strided_slice %45 {offsets = [0, 0, 24], sizes = [1, 8, 8], strides = [1, 1, 1]} : vector<1x8x32xbf16> to vector<1x8x8xbf16>
    "tpu.trace_start"() <{level = 10 : i32, message = "bqd,bkd->bqk"}> : () -> ()
    %cst_25 = arith.constant dense<0.000000e+00> : vector<1x8x8xf32>
    %87 = tpu.matmul %85, %86, %cst_25 {dimension_numbers = #tpu.dot_dimension_numbers<[2], [2], [1], [1], [0, 0, 0, 1, 1, 1], [0], [0]>} : vector<1x8x8xbf16>, vector<1x8x8xbf16>, vector<1x8x8xf32> -> vector<1x8x8xf32>
    "tpu.trace_stop"() : () -> ()
    %cst_26 = arith.constant 0.000000e+00 : f32
    %88 = vector.broadcast %cst_26 : f32 to vector<1x8x8xf32>
    %89 = arith.maximumf %87, %88 : vector<1x8x8xf32>
    %90 = arith.mulf %89, %54 : vector<1x8x8xf32>
    %91 = arith.truncf %90 : vector<1x8x8xf32> to vector<1x8x8xbf16>
    %92 = vector.extract_strided_slice %48 {offsets = [0, 0, 24], sizes = [1, 8, 8], strides = [1, 1, 1]} : vector<1x8x32xbf16> to vector<1x8x8xbf16>
    "tpu.trace_start"() <{level = 10 : i32, message = "bqk,bkd->bqd"}> : () -> ()
    %cst_27 = arith.constant dense<0.000000e+00> : vector<1x8x8xf32>
    %93 = tpu.matmul %91, %92, %cst_27 {dimension_numbers = #tpu.dot_dimension_numbers<[2], [1], [1], [2], [0, 0, 0, 1, 1, 2], [0], [0]>} : vector<1x8x8xbf16>, vector<1x8x8xbf16>, vector<1x8x8xf32> -> vector<1x8x8xf32>
    "tpu.trace_stop"() : () -> ()
    %94 = arith.truncf %93 : vector<1x8x8xf32> to vector<1x8x8xbf16>
    %95 = tpu.concatenate %64, %74, %84, %94 in 2 : vector<1x8x8xbf16>, vector<1x8x8xbf16>, vector<1x8x8xbf16>, vector<1x8x8xbf16> -> vector<1x8x32xbf16>
    %96 = vector.shape_cast %95 : vector<1x8x32xbf16> to vector<8x32xbf16>
    %c0_28 = arith.constant 0 : index
    %c0_29 = arith.constant 0 : index
    %97 = vector.load %arg6[%c0_28, %c0_29] : memref<32x32xbf16, #tpu.memory_space<vmem>>, vector<32x32xbf16>
    %cst_30 = arith.constant dense<0.000000e+00> : vector<8x32xf32>
    %98 = tpu.matmul %96, %97, %cst_30 {dimension_numbers = #tpu.dot_dimension_numbers<[1], [0], [0], [1], [0, 0, 1, 1], [], []>} : vector<8x32xbf16>, vector<32x32xbf16>, vector<8x32xf32> -> vector<8x32xf32>
    %c0_31 = arith.constant 0 : index
    %c0_32 = arith.constant 0 : index
    %99 = vector.load %arg7[%c0_31, %c0_32] : memref<1x32xf32, #tpu.memory_space<vmem>>, vector<1x32xf32>
    %100 = vector.shape_cast %99 : vector<1x32xf32> to vector<32xf32>
    %101 = vector.shape_cast %100 : vector<32xf32> to vector<1x32xf32>
    %102 = vector.broadcast %101 : vector<1x32xf32> to vector<8x32xf32>
    %103 = arith.addf %98, %102 : vector<8x32xf32>
    %104 = arith.addf %1, %103 : vector<8x32xf32>
    %c0_33 = arith.constant 0 : index
    %c0_34 = arith.constant 0 : index
    %105 = vector.load %arg8[%c0_33, %c0_34] : memref<1x32xf32, #tpu.memory_space<vmem>>, vector<1x32xf32>
    %106 = vector.shape_cast %105 : vector<1x32xf32> to vector<32xf32>
    %c0_35 = arith.constant 0 : index
    %c0_36 = arith.constant 0 : index
    %107 = vector.load %arg9[%c0_35, %c0_36] : memref<1x32xf32, #tpu.memory_space<vmem>>, vector<1x32xf32>
    %108 = vector.shape_cast %107 : vector<1x32xf32> to vector<32xf32>
    %cst_37 = arith.constant dense<0.000000e+00> : vector<8xf32>
    %109 = vector.multi_reduction <add>, %104, %cst_37 [1] : vector<8x32xf32> to vector<8xf32>
    %110 = vector.shape_cast %109 : vector<8xf32> to vector<8x1xf32>
    %cst_38 = arith.constant 3.200000e+01 : f32
    %111 = vector.broadcast %cst_38 : f32 to vector<8x1xf32>
    %112 = arith.divf %110, %111 : vector<8x1xf32>
    %113 = vector.broadcast %112 : vector<8x1xf32> to vector<8x32xf32>
    %114 = arith.subf %104, %113 : vector<8x32xf32>
    %115 = arith.mulf %114, %114 : vector<8x32xf32>
    %cst_39 = arith.constant dense<0.000000e+00> : vector<8xf32>
    %116 = vector.multi_reduction <add>, %115, %cst_39 [1] : vector<8x32xf32> to vector<8xf32>
    %117 = vector.shape_cast %116 : vector<8xf32> to vector<8x1xf32>
    %cst_40 = arith.constant 3.200000e+01 : f32
    %118 = vector.broadcast %cst_40 : f32 to vector<8x1xf32>
    %119 = arith.divf %117, %118 : vector<8x1xf32>
    %120 = vector.broadcast %112 : vector<8x1xf32> to vector<8x32xf32>
    %121 = arith.subf %104, %120 : vector<8x32xf32>
    %cst_41 = arith.constant 9.99999974E-6 : f32
    %122 = vector.broadcast %cst_41 : f32 to vector<8x1xf32>
    %123 = arith.addf %119, %122 : vector<8x1xf32>
    %124 = math.rsqrt %123 : vector<8x1xf32>
    %125 = vector.broadcast %124 : vector<8x1xf32> to vector<8x32xf32>
    %126 = arith.mulf %121, %125 : vector<8x32xf32>
    %127 = vector.shape_cast %106 : vector<32xf32> to vector<1x32xf32>
    %128 = vector.broadcast %127 : vector<1x32xf32> to vector<8x32xf32>
    %129 = arith.mulf %126, %128 : vector<8x32xf32>
    %130 = vector.shape_cast %108 : vector<32xf32> to vector<1x32xf32>
    %131 = vector.broadcast %130 : vector<1x32xf32> to vector<8x32xf32>
    %132 = arith.addf %129, %131 : vector<8x32xf32>
    %133 = arith.truncf %132 : vector<8x32xf32> to vector<8x32xbf16>
    %c0_42 = arith.constant 0 : index
    %c0_43 = arith.constant 0 : index
    %134 = vector.load %arg10[%c0_42, %c0_43] : memref<32x64xbf16, #tpu.memory_space<vmem>>, vector<32x64xbf16>
    %cst_44 = arith.constant dense<0.000000e+00> : vector<8x64xf32>
    %135 = tpu.matmul %133, %134, %cst_44 {dimension_numbers = #tpu.dot_dimension_numbers<[1], [0], [0], [1], [0, 0, 1, 1], [], []>} : vector<8x32xbf16>, vector<32x64xbf16>, vector<8x64xf32> -> vector<8x64xf32>
    %c0_45 = arith.constant 0 : index
    %c0_46 = arith.constant 0 : index
    %136 = vector.load %arg11[%c0_45, %c0_46] : memref<1x64xf32, #tpu.memory_space<vmem>>, vector<1x64xf32>
    %137 = vector.shape_cast %136 : vector<1x64xf32> to vector<64xf32>
    %138 = vector.shape_cast %137 : vector<64xf32> to vector<1x64xf32>
    %139 = vector.broadcast %138 : vector<1x64xf32> to vector<8x64xf32>
    %140 = arith.addf %135, %139 : vector<8x64xf32>
    %cst_47 = arith.constant 0.000000e+00 : f32
    %141 = vector.broadcast %cst_47 : f32 to vector<8x64xf32>
    %142 = arith.maximumf %140, %141 : vector<8x64xf32>
    %143 = arith.truncf %142 : vector<8x64xf32> to vector<8x64xbf16>
    %c0_48 = arith.constant 0 : index
    %c0_49 = arith.constant 0 : index
    %144 = vector.load %arg12[%c0_48, %c0_49] : memref<64x32xbf16, #tpu.memory_space<vmem>>, vector<64x32xbf16>
    %cst_50 = arith.constant dense<0.000000e+00> : vector<8x32xf32>
    %145 = tpu.matmul %143, %144, %cst_50 {dimension_numbers = #tpu.dot_dimension_numbers<[1], [0], [0], [1], [0, 0, 1, 1], [], []>} : vector<8x64xbf16>, vector<64x32xbf16>, vector<8x32xf32> -> vector<8x32xf32>
    %c0_51 = arith.constant 0 : index
    %c0_52 = arith.constant 0 : index
    %146 = vector.load %arg13[%c0_51, %c0_52] : memref<1x32xf32, #tpu.memory_space<vmem>>, vector<1x32xf32>
    %147 = vector.shape_cast %146 : vector<1x32xf32> to vector<32xf32>
    %148 = vector.shape_cast %147 : vector<32xf32> to vector<1x32xf32>
    %149 = vector.broadcast %148 : vector<1x32xf32> to vector<8x32xf32>
    %150 = arith.addf %145, %149 : vector<8x32xf32>
    %151 = arith.addf %104, %150 : vector<8x32xf32>
    %152 = vector.shape_cast %151 : vector<8x32xf32> to vector<1x8x32xf32>
    %c0_53 = arith.constant 0 : index
    %c0_54 = arith.constant 0 : index
    %c0_55 = arith.constant 0 : index
    %153 = vector.load %arg14[%c0_53, %c0_54, %c0_55] : memref<1x8x32xf32, #tpu.memory_space<vmem>>, vector<1x8x32xf32>
    tpu.vector_store %arg14[%c0_53, %c0_54, %c0_55], %152 {strides = array<i32>} : memref<1x8x32xf32, #tpu.memory_space<vmem>>, vector<1x8x32xf32>,
    return
  }
  func.func @transform_0(%arg0: i32) -> (i32, i32, i32) {
    %c0_i32 = arith.constant 0 : i32
    %c0_i32_0 = arith.constant 0 : i32
    %c0_i32_1 = arith.constant 0 : i32
    return %arg0, %c0_i32, %c0_i32_0 : i32, i32, i32
  }
  func.func @transform_1(%arg0: i32) -> (i32, i32) {
    %c0_i32 = arith.constant 0 : i32
    %c0_i32_0 = arith.constant 0 : i32
    %c0_i32_1 = arith.constant 0 : i32
    return %c0_i32, %c0_i32_0 : i32, i32
  }
  func.func @transform_2(%arg0: i32) -> (i32, i32) {
    %c0_i32 = arith.constant 0 : i32
    %c0_i32_0 = arith.constant 0 : i32
    %c0_i32_1 = arith.constant 0 : i32
    return %c0_i32, %c0_i32_0 : i32, i32
  }
  func.func @transform_3(%arg0: i32) -> (i32, i32) {
    %c0_i32 = arith.constant 0 : i32
    %c0_i32_0 = arith.constant 0 : i32
    %c0_i32_1 = arith.constant 0 : i32
    return %c0_i32, %c0_i32_0 : i32, i32
  }
  func.func @transform_4(%arg0: i32) -> (i32, i32) {
    %c0_i32 = arith.constant 0 : i32
    %c0_i32_0 = arith.constant 0 : i32
    %c0_i32_1 = arith.constant 0 : i32
    return %c0_i32, %c0_i32_0 : i32, i32
  }
  func.func @transform_5(%arg0: i32) -> (i32, i32) {
    %c0_i32 = arith.constant 0 : i32
    %c0_i32_0 = arith.constant 0 : i32
    %c0_i32_1 = arith.constant 0 : i32
    return %c0_i32, %c0_i32_0 : i32, i32
  }
  func.func @transform_6(%arg0: i32) -> (i32, i32) {
    %c0_i32 = arith.constant 0 : i32
    %c0_i32_0 = arith.constant 0 : i32
    %c0_i32_1 = arith.constant 0 : i32
    return %c0_i32, %c0_i32_0 : i32, i32
  }
  func.func @transform_7(%arg0: i32) -> (i32, i32) {
    %c0_i32 = arith.constant 0 : i32
    %c0_i32_0 = arith.constant 0 : i32
    %c0_i32_1 = arith.constant 0 : i32
    return %c0_i32, %c0_i32_0 : i32, i32
  }
  func.func @transform_8(%arg0: i32) -> (i32, i32) {
    %c0_i32 = arith.constant 0 : i32
    %c0_i32_0 = arith.constant 0 : i32
    %c0_i32_1 = arith.constant 0 : i32
    return %c0_i32, %c0_i32_0 : i32, i32
  }
  func.func @transform_9(%arg0: i32) -> (i32, i32) {
    %c0_i32 = arith.constant 0 : i32
    %c0_i32_0 = arith.constant 0 : i32
    %c0_i32_1 = arith.constant 0 : i32
    return %c0_i32, %c0_i32_0 : i32, i32
  }
  func.func @transform_10(%arg0: i32) -> (i32, i32) {
    %c0_i32 = arith.constant 0 : i32
    %c0_i32_0 = arith.constant 0 : i32
    %c0_i32_1 = arith.constant 0 : i32
    return %c0_i32, %c0_i32_0 : i32, i32
  }
  func.func @transform_11(%arg0: i32) -> (i32, i32) {
    %c0_i32 = arith.constant 0 : i32
    %c0_i32_0 = arith.constant 0 : i32
    %c0_i32_1 = arith.constant 0 : i32
    return %c0_i32, %c0_i32_0 : i32, i32
  }
  func.func @transform_12(%arg0: i32) -> (i32, i32) {
    %c0_i32 = arith.constant 0 : i32
    %c0_i32_0 = arith.constant 0 : i32
    %c0_i32_1 = arith.constant 0 : i32
    return %c0_i32, %c0_i32_0 : i32, i32
  }
  func.func @transform_13(%arg0: i32) -> (i32, i32, i32) {
    %c0_i32 = arith.constant 0 : i32
    %c0_i32_0 = arith.constant 0 : i32
    %c0_i32_1 = arith.constant 0 : i32
    return %arg0, %c0_i32, %c0_i32_0 : i32, i32, i32
  }
}

module attributes {stable_mosaic.version = 11 : i64} {
  func.func @block_kernel(%arg0: i32, %arg1: memref<1x8x32xf32, #tpu.memory_space<vmem>>, %arg2: memref<1x32xf32, #tpu.memory_space<vmem>>, %arg3: memref<1x32xf32, #tpu.memory_space<vmem>>, %arg4: memref<32x96xbf16, #tpu.memory_space<vmem>>, %arg5: memref<1x96xf32, #tpu.memory_space<vmem>>, %arg6: memref<32x32xbf16, #tpu.memory_space<vmem>>, %arg7: memref<1x32xf32, #tpu.memory_space<vmem>>, %arg8: memref<1x32xf32, #tpu.memory_space<vmem>>, %arg9: memref<1x32xf32, #tpu.memory_space<vmem>>, %arg10: memref<32x64xbf16, #tpu.memory_space<vmem>>, %arg11: memref<1x64xf32, #tpu.memory_space<vmem>>, %arg12: memref<64x32xbf16, #tpu.memory_space<vmem>>, %arg13: memref<1x32xf32, #tpu.memory_space<vmem>>, %arg14: memref<1x8x32xf32, #tpu.memory_space<vmem>>) attributes {dimension_semantics = [#tpu.dimension_semantics<parallel>], iteration_bounds = array<i64: 2>, scalar_prefetch = 0 : i64, scratch_operands = 0 : i64, tpu.core_type = #tpu.core_type<tc>, window_params = [{transform_indices = @transform_0, window_bounds = array<i64: 1, 8, 32>}, {pipeline_mode = #tpu.pipeline_mode<synchronous>, transform_indices = @transform_1, window_bounds = array<i64: 1, 32>}, {pipeline_mode = #tpu.pipeline_mode<synchronous>, transform_indices = @transform_2, window_bounds = array<i64: 1, 32>}, {pipeline_mode = #tpu.pipeline_mode<synchronous>, transform_indices = @transform_3, window_bounds = array<i64: 32, 96>}, {pipeline_mode = #tpu.pipeline_mode<synchronous>, transform_indices = @transform_4, window_bounds = array<i64: 1, 96>}, {pipeline_mode = #tpu.pipeline_mode<synchronous>, transform_indices = @transform_5, window_bounds = array<i64: 32, 32>}, {pipeline_mode = #tpu.pipeline_mode<synchronous>, transform_indices = @transform_6, window_bounds = array<i64: 1, 32>}, {pipeline_mode = #tpu.pipeline_mode<synchronous>, transform_indices = @transform_7, window_bounds = array<i64: 1, 32>}, {pipeline_mode = #tpu.pipeline_mode<synchronous>, transform_indices = @transform_8, window_bounds = array<i64: 1, 32>}, {pipeline_mode = #tpu.pipeline_mode<synchronous>, transform_indices = @transform_9, window_bounds = array<i64: 32, 64>}, {pipeline_mode = #tpu.pipeline_mode<synchronous>, transform_indices = @transform_10, window_bounds = array<i64: 1, 64>}, {pipeline_mode = #tpu.pipeline_mode<synchronous>, transform_indices = @transform_11, window_bounds = array<i64: 64, 32>}, {pipeline_mode = #tpu.pipeline_mode<synchronous>, transform_indices = @transform_12, window_bounds = array<i64: 1, 32>}, {transform_indices = @transform_13, window_bounds = array<i64: 1, 8, 32>}]} {
    %c0 = arith.constant 0 : index
    %c0_0 = arith.constant 0 : index
    %c0_1 = arith.constant 0 : index
    %0 = vector.load %arg1[%c0, %c0_0, %c0_1] : memref<1x8x32xf32, #tpu.memory_space<vmem>>, vector<1x8x32xf32>
    %1 = vector.shape_cast %0 : vector<1x8x32xf32> to vector<8x32xf32>
    %c0_2 = arith.constant 0 : index
    %c0_3 = arith.constant 0 : index
    %2 = vector.load %arg2[%c0_2, %c0_3] : memref<1x32xf32, #tpu.memory_space<vmem>>, vector<1x32xf32>
    %3 = vector.shape_cast %2 : vector<1x32xf32> to vector<32xf32>
    %c0_4 = arith.constant 0 : index
    %c0_5 = arith.constant 0 : index
    %4 = vector.load %arg3[%c0_4, %c0_5] : memref<1x32xf32, #tpu.memory_space<vmem>>, vector<1x32xf32>
    %5 = vector.shape_cast %4 : vector<1x32xf32> to vector<32xf32>
    %cst = arith.constant dense<0.000000e+00> : vector<8xf32>
    %6 = vector.multi_reduction <add>, %1, %cst [1] : vector<8x32xf32> to vector<8xf32>
    %7 = vector.shape_cast %6 : vector<8xf32> to vector<8x1xf32>
    %cst_6 = arith.constant 3.200000e+01 : f32
    %8 = vector.broadcast %cst_6 : f32 to vector<8x1xf32>
    %9 = arith.divf %7, %8 : vector<8x1xf32>
    %10 = vector.broadcast %9 : vector<8x1xf32> to vector<8x32xf32>
    %11 = arith.subf %1, %10 : vector<8x32xf32>
    %12 = arith.mulf %11, %11 : vector<8x32xf32>
    %cst_7 = arith.constant dense<0.000000e+00> : vector<8xf32>
    %13 = vector.multi_reduction <add>, %12, %cst_7 [1] : vector<8x32xf32> to vector<8xf32>
    %14 = vector.shape_cast %13 : vector<8xf32> to vector<8x1xf32>
    %cst_8 = arith.constant 3.200000e+01 : f32
    %15 = vector.broadcast %cst_8 : f32 to vector<8x1xf32>
    %16 = arith.divf %14, %15 : vector<8x1xf32>
    %17 = vector.broadcast %9 : vector<8x1xf32> to vector<8x32xf32>
    %18 = arith.subf %1, %17 : vector<8x32xf32>
    %cst_9 = arith.constant 9.99999974E-6 : f32
    %19 = vector.broadcast %cst_9 : f32 to vector<8x1xf32>
    %20 = arith.addf %16, %19 : vector<8x1xf32>
    %21 = math.rsqrt %20 : vector<8x1xf32>
    %22 = vector.broadcast %21 : vector<8x1xf32> to vector<8x32xf32>
    %23 = arith.mulf %18, %22 : vector<8x32xf32>
    %24 = vector.shape_cast %3 : vector<32xf32> to vector<1x32xf32>
    %25 = vector.broadcast %24 : vector<1x32xf32> to vector<8x32xf32>
    %26 = arith.mulf %23, %25 : vector<8x32xf32>
    %27 = vector.shape_cast %5 : vector<32xf32> to vector<1x32xf32>
    %28 = vector.broadcast %27 : vector<1x32xf32> to vector<8x32xf32>
    %29 = arith.addf %26, %28 : vector<8x32xf32>
    %30 = arith.truncf %29 : vector<8x32xf32> to vector<8x32xbf16>
    %c0_10 = arith.constant 0 : index
    %c0_11 = arith.constant 0 : index
    %31 = vector.load %arg4[%c0_10, %c0_11] : memref<32x96xbf16, #tpu.memory_space<vmem>>, vector<32x96xbf16>
    %cst_12 = arith.constant dense<0.000000e+00> : vector<8x96xf32>
    %32 = tpu.matmul %30, %31, %cst_12 {dimension_numbers = #tpu.dot_dimension_numbers<[1], [0], [0], [1], [0, 0, 1, 1], [], []>} : vector<8x32xbf16>, vector<32x96xbf16>, vector<8x96xf32> -> vector<8x96xf32>
    %c0_13 = arith.constant 0 : index
    %c0_14 = arith.constant 0 : index
    %33 = vector.load %arg5[%c0_13, %c0_14] : memref<1x96xf32, #tpu.memory_space<vmem>>, vector<1x96xf32>
    %34 = vector.shape_cast %33 : vector<1x96xf32> to vector<96xf32>
    %35 = vector.shape_cast %34 : vector<96xf32> to vector<1x96xf32>
    %36 = vector.broadcast %35 : vector<1x96xf32> to vector<8x96xf32>
    %37 = arith.addf %32, %36 : vector<8x96xf32>
    %cst_15 = arith.constant 0.000000e+00 : f32
    %38 = vector.broadcast %cst_15 : f32 to vector<8x96xf32>
    %39 = arith.maximumf %37, %38 : vector<8x96xf32>
    %40 = vector.extract_strided_slice %39 {offsets = [0, 0], sizes = [8, 32], strides = [1, 1]} : vector<8x96xf32> to vector<8x32xf32>
    %41 = vector.shape_cast %40 : vector<8x32xf32> to vector<1x8x32xf32>
    %42 = arith.truncf %41 : vector<1x8x32xf32> to vector<1x8x32xbf16>
    %43 = vector.extract_strided_slice %39 {offsets = [0, 32], sizes = [8, 32], strides = [1, 1]} : vector<8x96xf32> to vector<8x32xf32>
    %44 = vector.shape_cast %43 : vector<8x32xf32> to vector<1x8x32xf32>
    %45 = arith.truncf %44 : vector<1x8x32xf32> to vector<1x8x32xbf16>
    %46 = vector.extract_strided_slice %39 {offsets = [0, 64], sizes = [8, 32], strides = [1, 1]} : vector<8x96xf32> to vector<8x32xf32>
    %47 = vector.shape_cast %46 : vector<8x32xf32> to vector<1x8x32xf32>
    %48 = arith.truncf %47 : vector<1x8x32xf32> to vector<1x8x32xbf16>
    %49 = tpu.iota {dimensions = array<i32: 0>} : vector<8x8xi32>
    %50 = tpu.iota {dimensions = array<i32: 1>} : vector<8x8xi32>
    %51 = arith.cmpi sle, %50, %49 : vector<8x8xi32>
    %52 = arith.extui %51 : vector<8x8xi1> to vector<8x8xi32>
    %53 = arith.sitofp %52 : vector<8x8xi32> to vector<8x8xf32>
    %54 = vector.shape_cast %53 : vector<8x8xf32> to vector<1x8x8xf32>
    %55 = vector.extract_strided_slice %42 {offsets = [0, 0, 0], sizes = [1, 8, 8], strides = [1, 1, 1]} : vector<1x8x32xbf16> to vector<1x8x8xbf16>
    %56 = vector.extract_strided_slice %45 {offsets = [0, 0, 0], sizes = [1, 8, 8], strides = [1, 1, 1]} : vector<1x8x32xbf16> to vector<1x8x8xbf16>
    "tpu.trace_start"() <{level = 10 : i32, message = "bqd,bkd->bqk"}> : () -> ()
    %cst_16 = arith.constant dense<0.000000e+00> : vector<1x8x8xf32>
    %57 = tpu.matmul %55, %56, %cst_16 {dimension_numbers = #tpu.dot_dimension_numbers<[2], [2], [1], [1], [0, 0, 0, 1, 1, 1], [0], [0]>} : vector<1x8x8xbf16>, vector<1x8x8xbf16>, vector<1x8x8xf32> -> vector<1x8x8xf32>
    "tpu.trace_stop"() : () -> ()
    %cst_17 = arith.constant 0.000000e+00 : f32
    %58 = vector.broadcast %cst_17 : f32 to vector<1x8x8xf32>
    %59 = arith.maximumf %57, %58 : vector<1x8x8xf32>
    %60 = arith.mulf %59, %54 : vector<1x8x8xf32>
    %61 = arith.truncf %60 : vector<1x8x8xf32> to vector<1x8x8xbf16>
    %62 = vector.extract_strided_slice %48 {offsets = [0, 0, 0], sizes = [1, 8, 8], strides = [1, 1, 1]} : vector<1x8x32xbf16> to vector<1x8x8xbf16>
    "tpu.trace_start"() <{level = 10 : i32, message = "bqk,bkd->bqd"}> : () -> ()
    %cst_18 = arith.constant dense<0.000000e+00> : vector<1x8x8xf32>
    %63 = tpu.matmul %61, %62, %cst_18 {dimension_numbers = #tpu.dot_dimension_numbers<[2], [1], [1], [2], [0, 0, 0, 1, 1, 2], [0], [0]>} : vector<1x8x8xbf16>, vector<1x8x8xbf16>, vector<1x8x8xf32> -> vector<1x8x8xf32>
    "tpu.trace_stop"() : () -> ()
    %64 = arith.truncf %63 : vector<1x8x8xf32> to vector<1x8x8xbf16>
    %65 = vector.extract_strided_slice %42 {offsets = [0, 0, 8], sizes = [1, 8, 8], strides = [1, 1, 1]} : vector<1x8x32xbf16> to vector<1x8x8xbf16>
    %66 = vector.extract_strided_slice %45 {offsets = [0, 0, 8], sizes = [1, 8, 8], strides = [1, 1, 1]} : vector<1x8x32xbf16> to vector<1x8x8xbf16>
    "tpu.trace_start"() <{level = 10 : i32, message = "bqd,bkd->bqk"}> : () -> ()
    %cst_19 = arith.constant dense<0.000000e+00> : vector<1x8x8xf32>
    %67 = tpu.matmul %65, %66, %cst_19 {dimension_numbers = #tpu.dot_dimension_numbers<[2], [2], [1], [1], [0, 0, 0, 1, 1, 1], [0], [0]>} : vector<1x8x8xbf16>, vector<1x8x8xbf16>, vector<1x8x8xf32> -> vector<1x8x8xf32>
    "tpu.trace_stop"() : () -> ()
    %cst_20 = arith.constant 0.000000e+00 : f32
    %68 = vector.broadcast %cst_20 : f32 to vector<1x8x8xf32>
    %69 = arith.maximumf %67, %68 : vector<1x8x8xf32>
    %70 = arith.mulf %69, %54 : vector<1x8x8xf32>
    %71 = arith.truncf %70 : vector<1x8x8xf32> to vector<1x8x8xbf16>
    %72 = vector.extract_strided_slice %48 {offsets = [0, 0, 8], sizes = [1, 8, 8], strides = [1, 1, 1]} : vector<1x8x32xbf16> to vector<1x8x8xbf16>
    "tpu.trace_start"() <{level = 10 : i32, message = "bqk,bkd->bqd"}> : () -> ()
    %cst_21 = arith.constant dense<0.000000e+00> : vector<1x8x8xf32>
    %73 = tpu.matmul %71, %72, %cst_21 {dimension_numbers = #tpu.dot_dimension_numbers<[2], [1], [1], [2], [0, 0, 0, 1, 1, 2], [0], [0]>} : vector<1x8x8xbf16>, vector<1x8x8xbf16>, vector<1x8x8xf32> -> vector<1x8x8xf32>
    "tpu.trace_stop"() : () -> ()
    %74 = arith.truncf %73 : vector<1x8x8xf32> to vector<1x8x8xbf16>
    %75 = vector.extract_strided_slice %42 {offsets = [0, 0, 16], sizes = [1, 8, 8], strides = [1, 1, 1]} : vector<1x8x32xbf16> to vector<1x8x8xbf16>
    %76 = vector.extract_strided_slice %45 {offsets = [0, 0, 16], sizes = [1, 8, 8], strides = [1, 1, 1]} : vector<1x8x32xbf16> to vector<1x8x8xbf16>
    "tpu.trace_start"() <{level = 10 : i32, message = "bqd,bkd->bqk"}> : () -> ()
    %cst_22 = arith.constant dense<0.000000e+00> : vector<1x8x8xf32>
    %77 = tpu.matmul %75, %76, %cst_22 {dimension_numbers = #tpu.dot_dimension_numbers<[2], [2], [1], [1], [0, 0, 0, 1, 1, 1], [0], [0]>} : vector<1x8x8xbf16>, vector<1x8x8xbf16>, vector<1x8x8xf32> -> vector<1x8x8xf32>
    "tpu.trace_stop"() : () -> ()
    %cst_23 = arith.constant 0.000000e+00 : f32
    %78 = vector.broadcast %cst_23 : f32 to vector<1x8x8xf32>
    %79 = arith.maximumf %77, %78 : vector<1x8x8xf32>
    %80 = arith.mulf %79, %54 : vector<1x8x8xf32>
    %81 = arith.truncf %80 : vector<1x8x8xf32> to vector<1x8x8xbf16>
    %82 = vector.extract_strided_slice %48 {offsets = [0, 0, 16], sizes = [1, 8, 8], strides = [1, 1, 1]} : vector<1x8x32xbf16> to vector<1x8x8xbf16>
    "tpu.trace_start"() <{level = 10 : i32, message = "bqk,bkd->bqd"}> : () -> ()
    %cst_24 = arith.constant dense<0.000000e+00> : vector<1x8x8xf32>
    %83 = tpu.matmul %81, %82, %cst_24 {dimension_numbers = #tpu.dot_dimension_numbers<[2], [1], [1], [2], [0, 0, 0, 1, 1, 2], [0], [0]>} : vector<1x8x8xbf16>, vector<1x8x8xbf16>, vector<1x8x8xf32> -> vector<1x8x8xf32>
    "tpu.trace_stop"() : () -> ()
    %84 = arith.truncf %83 : vector<1x8x8xf32> to vector<1x8x8xbf16>
    %85 = vector.extract_strided_slice %42 {offsets = [0, 0, 24], sizes = [1, 8, 8], strides = [1, 1, 1]} : vector<1x8x32xbf16> to vector<1x8x8xbf16>
    %86 = vector.extract_strided_slice %45 {offsets = [0, 0, 24], sizes = [1, 8, 8], strides = [1, 1, 1]} : vector<1x8x32xbf16> to vector<1x8x8xbf16>
    "tpu.trace_start"() <{level = 10 : i32, message = "bqd,bkd->bqk"}> : () -> ()
    %cst_25 = arith.constant dense<0.000000e+00> : vector<1x8x8xf32>
    %87 = tpu.matmul %85, %86, %cst_25 {dimension_numbers = #tpu.dot_dimension_numbers<[2], [2], [1], [1], [0, 0, 0, 1, 1, 1], [0], [0]>} : vector<1x8x8xbf16>, vector<1x8x8xbf16>, vector<1x8x8xf32> -> vector<1x8x8xf32>
    "tpu.trace_stop"() : () -> ()
    %cst_26 = arith.constant 0.000000e+00 : f32
    %88 = vector.broadcast %cst_26 : f32 to vector<1x8x8xf32>
    %89 = arith.maximumf %87, %88 : vector<1x8x8xf32>
    %90 = arith.mulf %89, %54 : vector<1x8x8xf32>
    %91 = arith.truncf %90 : vector<1x8x8xf32> to vector<1x8x8xbf16>
    %92 = vector.extract_strided_slice %48 {offsets = [0, 0, 24], sizes = [1, 8, 8], strides = [1, 1, 1]} : vector<1x8x32xbf16> to vector<1x8x8xbf16>
    "tpu.trace_start"() <{level = 10 : i32, message = "bqk,bkd->bqd"}> : () -> ()
    %cst_27 = arith.constant dense<0.000000e+00> : vector<1x8x8xf32>
    %93 = tpu.matmul %91, %92, %cst_27 {dimension_numbers = #tpu.dot_dimension_numbers<[2], [1], [1], [2], [0, 0, 0, 1, 1, 2], [0], [0]>} : vector<1x8x8xbf16>, vector<1x8x8xbf16>, vector<1x8x8xf32> -> vector<1x8x8xf32>
    "tpu.trace_stop"() : () -> ()
    %94 = arith.truncf %93 : vector<1x8x8xf32> to vector<1x8x8xbf16>
    %95 = tpu.concatenate %64, %74, %84, %94 in 2 : vector<1x8x8xbf16>, vector<1x8x8xbf16>, vector<1x8x8xbf16>, vector<1x8x8xbf16> -> vector<1x8x32xbf16>
    %96 = vector.shape_cast %95 : vector<1x8x32xbf16> to vector<8x32xbf16>
    %c0_28 = arith.constant 0 : index
    %c0_29 = arith.constant 0 : index
    %97 = vector.load %arg6[%c0_28, %c0_29] : memref<32x32xbf16, #tpu.memory_space<vmem>>, vector<32x32xbf16>
    %cst_30 = arith.constant dense<0.000000e+00> : vector<8x32xf32>
    %98 = tpu.matmul %96, %97, %cst_30 {dimension_numbers = #tpu.dot_dimension_numbers<[1], [0], [0], [1], [0, 0, 1, 1], [], []>} : vector<8x32xbf16>, vector<32x32xbf16>, vector<8x32xf32> -> vector<8x32xf32>
    %c0_31 = arith.constant 0 : index
    %c0_32 = arith.constant 0 : index
    %99 = vector.load %arg7[%c0_31, %c0_32] : memref<1x32xf32, #tpu.memory_space<vmem>>, vector<1x32xf32>
    %100 = vector.shape_cast %99 : vector<1x32xf32> to vector<32xf32>
    %101 = vector.shape_cast %100 : vector<32xf32> to vector<1x32xf32>
    %102 = vector.broadcast %101 : vector<1x32xf32> to vector<8x32xf32>
    %103 = arith.addf %98, %102 : vector<8x32xf32>
    %104 = arith.addf %1, %103 : vector<8x32xf32>
    %c0_33 = arith.constant 0 : index
    %c0_34 = arith.constant 0 : index
    %105 = vector.load %arg8[%c0_33, %c0_34] : memref<1x32xf32, #tpu.memory_space<vmem>>, vector<1x32xf32>
    %106 = vector.shape_cast %105 : vector<1x32xf32> to vector<32xf32>
    %c0_35 = arith.constant 0 : index
    %c0_36 = arith.constant 0 : index
    %107 = vector.load %arg9[%c0_35, %c0_36] : memref<1x32xf32, #tpu.memory_space<vmem>>, vector<1x32xf32>
    %108 = vector.shape_cast %107 : vector<1x32xf32> to vector<32xf32>
    %cst_37 = arith.constant dense<0.000000e+00> : vector<8xf32>
    %109 = vector.multi_reduction <add>, %104, %cst_37 [1] : vector<8x32xf32> to vector<8xf32>
    %110 = vector.shape_cast %109 : vector<8xf32> to vector<8x1xf32>
    %cst_38 = arith.constant 3.200000e+01 : f32
    %111 = vector.broadcast %cst_38 : f32 to vector<8x1xf32>
    %112 = arith.divf %110, %111 : vector<8x1xf32>
    %113 = vector.broadcast %112 : vector<8x1xf32> to vector<8x32xf32>
    %114 = arith.subf %104, %113 : vector<8x32xf32>
    %115 = arith.mulf %114, %114 : vector<8x32xf32>
    %cst_39 = arith.constant dense<0.000000e+00> : vector<8xf32>
    %116 = vector.multi_reduction <add>, %115, %cst_39 [1] : vector<8x32xf32> to vector<8xf32>
    %117 = vector.shape_cast %116 : vector<8xf32> to vector<8x1xf32>
    %cst_40 = arith.constant 3.200000e+01 : f32
    %118 = vector.broadcast %cst_40 : f32 to vector<8x1xf32>
    %119 = arith.divf %117, %118 : vector<8x1xf32>
    %120 = vector.broadcast %112 : vector<8x1xf32> to vector<8x32xf32>
    %121 = arith.subf %104, %120 : vector<8x32xf32>
    %cst_41 = arith.constant 9.99999974E-6 : f32
    %122 = vector.broadcast %cst_41 : f32 to vector<8x1xf32>
    %123 = arith.addf %119, %122 : vector<8x1xf32>
    %124 = math.rsqrt %123 : vector<8x1xf32>
    %125 = vector.broadcast %124 : vector<8x1xf32> to vector<8x32xf32>
    %126 = arith.mulf %121, %125 : vector<8x32xf32>
    %127 = vector.shape_cast %106 : vector<32xf32> to vector<1x32xf32>
    %128 = vector.broadcast %127 : vector<1x32xf32> to vector<8x32xf32>
    %129 = arith.mulf %126, %128 : vector<8x32xf32>
    %130 = vector.shape_cast %108 : vector<32xf32> to vector<1x32xf32>
    %131 = vector.broadcast %130 : vector<1x32xf32> to vector<8x32xf32>
    %132 = arith.addf %129, %131 : vector<8x32xf32>
    %133 = arith.truncf %132 : vector<8x32xf32> to vector<8x32xbf16>
    %c0_42 = arith.constant 0 : index
    %c0_43 = arith.constant 0 : index
    %134 = vector.load %arg10[%c0_42, %c0_43] : memref<32x64xbf16, #tpu.memory_space<vmem>>, vector<32x64xbf16>
    %cst_44 = arith.constant dense<0.000000e+00> : vector<8x64xf32>
    %135 = tpu.matmul %133, %134, %cst_44 {dimension_numbers = #tpu.dot_dimension_numbers<[1], [0], [0], [1], [0, 0, 1, 1], [], []>} : vector<8x32xbf16>, vector<32x64xbf16>, vector<8x64xf32> -> vector<8x64xf32>
    %c0_45 = arith.constant 0 : index
    %c0_46 = arith.constant 0 : index
    %136 = vector.load %arg11[%c0_45, %c0_46] : memref<1x64xf32, #tpu.memory_space<vmem>>, vector<1x64xf32>
    %137 = vector.shape_cast %136 : vector<1x64xf32> to vector<64xf32>
    %138 = vector.shape_cast %137 : vector<64xf32> to vector<1x64xf32>
    %139 = vector.broadcast %138 : vector<1x64xf32> to vector<8x64xf32>
    %140 = arith.addf %135, %139 : vector<8x64xf32>
    %cst_47 = arith.constant 0.000000e+00 : f32
    %141 = vector.broadcast %cst_47 : f32 to vector<8x64xf32>
    %142 = arith.maximumf %140, %141 : vector<8x64xf32>
    %143 = arith.truncf %142 : vector<8x64xf32> to vector<8x64xbf16>
    %c0_48 = arith.constant 0 : index
    %c0_49 = arith.constant 0 : index
    %144 = vector.load %arg12[%c0_48, %c0_49] : memref<64x32xbf16, #tpu.memory_space<vmem>>, vector<64x32xbf16>
    %cst_50 = arith.constant dense<0.000000e+00> : vector<8x32xf32>
    %145 = tpu.matmul %143, %144, %cst_50 {dimension_numbers = #tpu.dot_dimension_numbers<[1], [0], [0], [1], [0, 0, 1, 1], [], []>} : vector<8x64xbf16>, vector<64x32xbf16>, vector<8x32xf32> -> vector<8x32xf32>
    %c0_51 = arith.constant 0 : index
    %c0_52 = arith.constant 0 : index
    %146 = vector.load %arg13[%c0_51, %c0_52] : memref<1x32xf32, #tpu.memory_space<vmem>>, vector<1x32xf32>
    %147 = vector.shape_cast %146 : vector<1x32xf32> to vector<32xf32>
    %148 = vector.shape_cast %147 : vector<32xf32> to vector<1x32xf32>
    %149 = vector.broadcast %148 : vector<1x32xf32> to vector<8x32xf32>
    %150 = arith.addf %145, %149 : vector<8x32xf32>
    %151 = arith.addf %104, %150 : vector<8x32xf32>
    %152 = vector.shape_cast %151 : vector<8x32xf32> to vector<1x8x32xf32>
    %c0_53 = arith.constant 0 : index
    %c0_54 = arith.constant 0 : index
    %c0_55 = arith.constant 0 : index
    %153 = vector.load %arg14[%c0_53, %c0_54, %c0_55] : memref<1x8x32xf32, #tpu.memory_space<vmem>>, vector<1x8x32xf32>
    tpu.vector_store %arg14[%c0_53, %c0_54, %c0_55], %152 {strides = array<i32>} : memref<1x8x32xf32, #tpu.memory_space<vmem>>, vector<1x8x32xf32>,
    return
  }
  func.func @transform_0(%arg0: i32) -> (i32, i32, i32) {
    %c0_i32 = arith.constant 0 : i32
    %c0_i32_0 = arith.constant 0 : i32
    %c0_i32_1 = arith.constant 0 : i32
    return %arg0, %c0_i32, %c0_i32_0 : i32, i32, i32
  }
  func.func @transform_1(%arg0: i32) -> (i32, i32) {
    %c0_i32 = arith.constant 0 : i32
    %c0_i32_0 = arith.constant 0 : i32
    %c0_i32_1 = arith.constant 0 : i32
    return %c0_i32, %c0_i32_0 : i32, i32
  }
  func.func @transform_2(%arg0: i32) -> (i32, i32) {
    %c0_i32 = arith.constant 0 : i32
    %c0_i32_0 = arith.constant 0 : i32
    %c0_i32_1 = arith.constant 0 : i32
    return %c0_i32, %c0_i32_0 : i32, i32
  }
  func.func @transform_3(%arg0: i32) -> (i32, i32) {
    %c0_i32 = arith.constant 0 : i32
    %c0_i32_0 = arith.constant 0 : i32
    %c0_i32_1 = arith.constant 0 : i32
    return %c0_i32, %c0_i32_0 : i32, i32
  }
  func.func @transform_4(%arg0: i32) -> (i32, i32) {
    %c0_i32 = arith.constant 0 : i32
    %c0_i32_0 = arith.constant 0 : i32
    %c0_i32_1 = arith.constant 0 : i32
    return %c0_i32, %c0_i32_0 : i32, i32
  }
  func.func @transform_5(%arg0: i32) -> (i32, i32) {
    %c0_i32 = arith.constant 0 : i32
    %c0_i32_0 = arith.constant 0 : i32
    %c0_i32_1 = arith.constant 0 : i32
    return %c0_i32, %c0_i32_0 : i32, i32
  }
  func.func @transform_6(%arg0: i32) -> (i32, i32) {
    %c0_i32 = arith.constant 0 : i32
    %c0_i32_0 = arith.constant 0 : i32
    %c0_i32_1 = arith.constant 0 : i32
    return %c0_i32, %c0_i32_0 : i32, i32
  }
  func.func @transform_7(%arg0: i32) -> (i32, i32) {
    %c0_i32 = arith.constant 0 : i32
    %c0_i32_0 = arith.constant 0 : i32
    %c0_i32_1 = arith.constant 0 : i32
    return %c0_i32, %c0_i32_0 : i32, i32
  }
  func.func @transform_8(%arg0: i32) -> (i32, i32) {
    %c0_i32 = arith.constant 0 : i32
    %c0_i32_0 = arith.constant 0 : i32
    %c0_i32_1 = arith.constant 0 : i32
    return %c0_i32, %c0_i32_0 : i32, i32
  }
  func.func @transform_9(%arg0: i32) -> (i32, i32) {
    %c0_i32 = arith.constant 0 : i32
    %c0_i32_0 = arith.constant 0 : i32
    %c0_i32_1 = arith.constant 0 : i32
    return %c0_i32, %c0_i32_0 : i32, i32
  }
  func.func @transform_10(%arg0: i32) -> (i32, i32) {
    %c0_i32 = arith.constant 0 : i32
    %c0_i32_0 = arith.constant 0 : i32
    %c0_i32_1 = arith.constant 0 : i32
    return %c0_i32, %c0_i32_0 : i32, i32
  }
  func.func @transform_11(%arg0: i32) -> (i32, i32) {
    %c0_i32 = arith.constant 0 : i32
    %c0_i32_0 = arith.constant 0 : i32
    %c0_i32_1 = arith.constant 0 : i32
    return %c0_i32, %c0_i32_0 : i32, i32
  }
  func.func @transform_12(%arg0: i32) -> (i32, i32) {
    %c0_i32 = arith.constant 0 : i32
    %c0_i32_0 = arith.constant 0 : i32
    %c0_i32_1 = arith.constant 0 : i32
    return %c0_i32, %c0_i32_0 : i32, i32
  }
  func.func @transform_13(%arg0: i32) -> (i32, i32, i32) {
    %c0_i32 = arith.constant 0 : i32
    %c0_i32_0 = arith.constant 0 : i32
    %c0_i32_1 = arith.constant 0 : i32
    return %arg0, %c0_i32, %c0_i32_0 : i32, i32, i32
  }
}

</mosaic_0001>

<llo_original>
// kernel: tpu_custom_call.1
$region0: #{tpu_custom_call.1}
  #allocation0 [shape = 'u32[]', space=smem, size = 0x4, offset = 0x4, fixed_abs, tag = 'smem constant byte address 0x4 - core index']
  #allocation1 [shape = 'u32[144,128]{1,0:T(1,128)}', space=vmem, size = 0x12000, scoped, tag = 'internal scratch']
  %s0 = inlined_call_operand.vmem [shape: f32[2,8,32], index: 0, kind: input, shape index: {}]
  %s1 = inlined_call_operand.vmem [shape: f32[1,32], index: 1, kind: input, shape index: {}]
  %s2 = inlined_call_operand.vmem [shape: f32[1,32], index: 2, kind: input, shape index: {}]
  %s3 = inlined_call_operand.vmem [shape: bf16[32,96], index: 3, kind: input, shape index: {}]
  %s4 = inlined_call_operand.vmem [shape: f32[1,96], index: 4, kind: input, shape index: {}]
  %s5 = inlined_call_operand.vmem [shape: bf16[32,32], index: 5, kind: input, shape index: {}]
  %s6 = inlined_call_operand.vmem [shape: f32[1,32], index: 6, kind: input, shape index: {}]
  %s7 = inlined_call_operand.hbm [shape: f32[1,32], index: 7, kind: input, shape index: {}]
  %s8 = inlined_call_operand.hbm [shape: f32[1,32], index: 8, kind: input, shape index: {}]
  %s9 = inlined_call_operand.hbm [shape: bf16[32,64], index: 9, kind: input, shape index: {}]
  %s10 = inlined_call_operand.hbm [shape: f32[1,64], index: 10, kind: input, shape index: {}]
  %s11 = inlined_call_operand.vmem [shape: bf16[64,32], index: 11, kind: input, shape index: {}]
  %s12 = inlined_call_operand.vmem [shape: f32[1,32], index: 12, kind: input, shape index: {}]
  %s13 = inlined_call_operand.hbm [shape: f32[2,8,32], index: 13, kind: output, shape index: {}]
  %s14 = sld [smem:[#allocation0]]
  $region101: #{tpu_custom_call.1} parent=0
    _
  %s16 = ssub.s32 1, %s14
  %s17 = scalar_select 0, %s16, %s14
  $region1: #{tpu_custom_call.1} parent=0
    #allocation2 [shape = 'u8[512]{0}', space=vmem, size = 0x400, scoped, tag = 'input window, operand 7, single buffered']
    #allocation3 [shape = 's32[2]{0}', space=sflag, size = 0x8, scoped, tag = 'scoped memory for tpu_custom_call.1']
    #allocation4 [shape = 's32[2]{0}', space=sflag, size = 0x8, scoped, tag = 'scoped memory for tpu_custom_call.1']
    #allocation5 [shape = 'u8[512]{0}', space=vmem, size = 0x400, scoped, tag = 'input window, operand 8, single buffered']
    #allocation6 [shape = 's32[1]{0}', space=sflag, size = 0x4, scoped, tag = 'scoped memory for tpu_custom_call.1']
    #allocation7 [shape = 'u8[8192]{0}', space=vmem, size = 0x2000, scoped, tag = 'input window, operand 9, single buffered']
    #allocation8 [shape = 'u8[512]{0}', space=vmem, size = 0x400, scoped, tag = 'input window, operand 10, single buffered']
    #allocation9 [shape = 's32[1]{0}', space=sflag, size = 0x4, scoped, tag = 'scoped memory for tpu_custom_call.1']
    #allocation10 [shape = 'u8[8192]{0}', space=vmem, size = 0x2000, scoped, tag = 'output window, operand 0']
    %18 = vsyncpa [#allocation3], 0
    %19 = vsyncpa [#allocation6], 0
    %20 = vsyncpa [#allocation9], 0
    %21 = vsyncpa [#allocation4], 0
    %s22 = scalar_lea.sflag [#allocation4], 1
    %23 = vsyncpa %s22, 0
    loop: start=0, step=1, limit=4
    $region2: #{tpu_custom_call.1} parent=1 // loop_pre_header
      _
    $region3: #{tpu_custom_call.1} parent=1 // loop_header
      %s25 = sphi 0, %s29
      %p26 = scmp.ge.s32.totalorder %s25, 4
      %s35 = sphi 0, %s37
      %s38 = sphi 0, %s35
      %s39 = sphi 0, %s38
      %s55 = sphi 0, %s39
      %s59 = sphi 0, %s59
      %s61 = sphi 0, %s59
      %s62 = sphi 0, %s61
      %s76 = sphi 0, %s62
      %s80 = sphi 0, %s80
      %s82 = sphi 0, %s80
      %s83 = sphi 0, %s82
      %s97 = sphi 0, %s83
      %s101 = sphi 0, %s101
      %s103 = sphi 0, %s101
      %s104 = sphi 0, %s103
      %s118 = sphi 0, %s104
      %s122 = sphi 0, %s122
      %s124 = sphi 0, %s122
      %s125 = sphi 0, %s124
      %s139 = sphi 0, %s125
      %s143 = sphi 0, %s143
      %s145 = sphi 0, %s143
      %s146 = sphi 0, %s145
      %s160 = sphi 0, %s146
      %s164 = sphi 0, %s164
      %s166 = sphi 0, %s164
      %s167 = sphi 0, %s166
      %s181 = sphi 0, %s167
      %s185 = sphi 0, %s185
      %s187 = sphi 0, %s185
      %s188 = sphi 0, %s187
      %s202 = sphi 0, %s188
      %s206 = sphi 0, %s206
      %s208 = sphi 0, %s206
      %s209 = sphi 0, %s208
      %s223 = sphi 0, %s209
      %s227 = sphi 0, %s227
      %s229 = sphi 0, %s227
      %s230 = sphi 0, %s229
      %s244 = sphi 0, %s230
      %s248 = sphi 0, %s248
      %s250 = sphi 0, %s248
      %s251 = sphi 0, %s250
      %s265 = sphi 0, %s251
      %s269 = sphi 0, %s269
      %s271 = sphi 0, %s269
      %s272 = sphi 0, %s271
      %s286 = sphi 0, %s272
      %s290 = sphi 0, %s290
      %s292 = sphi 0, %s290
      %s293 = sphi 0, %s292
      %s307 = sphi 0, %s293
      %s313 = sphi 0, %s315
      %s316 = sphi 0, %s313
      %s317 = sphi 0, %s316
      %s333 = sphi 0, %s317
    $region4: #{tpu_custom_call.1} parent=1 // loop_header_branch
      %28 = sbr.rel (%p26) target = $region8
    $region5: #{tpu_custom_call.1} parent=1 // loop_body
      %s30 = ssub.s32 %s25, 1
      %s31 = ssub.s32 %s25, 2
      %s32 = sadd.s32 %s25, 1
      %s33 = ssub.s32 %s25, %s32
      %p34 = scmp.eq.s32.totalorder %s33, 0
      %s36 = sadd.s32 %s35, 1
      %s37 = scalar_select %p34, %s35, %s36
      %p40 = pneg %p34
      %p41 = scmp.eq.s32.totalorder %s25, 1
      %p42 = por %p40, %p41
      %p43 = scmp.ne.s32.totalorder %s35, %s38
      %p44 = scmp.eq.s32.totalorder %s25, 0
      %p45 = por %p43, %p44
      %p46 = scmp.ne.s32.totalorder %s35, %s38
      %p47 = scmp.eq.s32.totalorder %s30, 1
      %p48 = por %p46, %p47
      %p49 = scmp.ne.s32.totalorder %s38, %s39
      %p50 = scmp.eq.s32.totalorder %s30, 0
      %p51 = por %p49, %p50
      %p52 = scmp.ne.s32.totalorder %s38, %s39
      %p53 = scmp.eq.s32.totalorder %s31, 1
      %p54 = por %p52, %p53
      %p56 = scmp.ne.s32.totalorder %s39, %s55
      %p57 = scmp.eq.s32.totalorder %s31, 0
      %p58 = por %p56, %p57
      %s60 = sadd.s32 %s59, 1
      %p63 = scmp.eq.s32.totalorder %s25, 1
      %p64 = scmp.ne.s32.totalorder %s59, %s61
      %p65 = scmp.eq.s32.totalorder %s25, 0
      %p66 = por %p64, %p65
      %p67 = scmp.ne.s32.totalorder %s59, %s61
      %p68 = scmp.eq.s32.totalorder %s30, 1
      %p69 = por %p67, %p68
      %p70 = scmp.ne.s32.totalorder %s61, %s62
      %p71 = scmp.eq.s32.totalorder %s30, 0
      %p72 = por %p70, %p71
      %p73 = scmp.ne.s32.totalorder %s61, %s62
      %p74 = scmp.eq.s32.totalorder %s31, 1
      %p75 = por %p73, %p74
      %p77 = scmp.ne.s32.totalorder %s62, %s76
      %p78 = scmp.eq.s32.totalorder %s31, 0
      %p79 = por %p77, %p78
      %s81 = sadd.s32 %s80, 1
      %p84 = scmp.eq.s32.totalorder %s25, 1
      %p85 = scmp.ne.s32.totalorder %s80, %s82
      %p86 = scmp.eq.s32.totalorder %s25, 0
      %p87 = por %p85, %p86
      %p88 = scmp.ne.s32.totalorder %s80, %s82
      %p89 = scmp.eq.s32.totalorder %s30, 1
      %p90 = por %p88, %p89
      %p91 = scmp.ne.s32.totalorder %s82, %s83
      %p92 = scmp.eq.s32.totalorder %s30, 0
      %p93 = por %p91, %p92
      %p94 = scmp.ne.s32.totalorder %s82, %s83
      %p95 = scmp.eq.s32.totalorder %s31, 1
      %p96 = por %p94, %p95
      %p98 = scmp.ne.s32.totalorder %s83, %s97
      %p99 = scmp.eq.s32.totalorder %s31, 0
      %p100 = por %p98, %p99
      %s102 = sadd.s32 %s101, 1
      %p105 = scmp.eq.s32.totalorder %s25, 1
      %p106 = scmp.ne.s32.totalorder %s101, %s103
      %p107 = scmp.eq.s32.totalorder %s25, 0
      %p108 = por %p106, %p107
      %p109 = scmp.ne.s32.totalorder %s101, %s103
      %p110 = scmp.eq.s32.totalorder %s30, 1
      %p111 = por %p109, %p110
      %p112 = scmp.ne.s32.totalorder %s103, %s104
      %p113 = scmp.eq.s32.totalorder %s30, 0
      %p114 = por %p112, %p113
      %p115 = scmp.ne.s32.totalorder %s103, %s104
      %p116 = scmp.eq.s32.totalorder %s31, 1
      %p117 = por %p115, %p116
      %p119 = scmp.ne.s32.totalorder %s104, %s118
      %p120 = scmp.eq.s32.totalorder %s31, 0
      %p121 = por %p119, %p120
      %s123 = sadd.s32 %s122, 1
      %p126 = scmp.eq.s32.totalorder %s25, 1
      %p127 = scmp.ne.s32.totalorder %s122, %s124
      %p128 = scmp.eq.s32.totalorder %s25, 0
      %p129 = por %p127, %p128
      %p130 = scmp.ne.s32.totalorder %s122, %s124
      %p131 = scmp.eq.s32.totalorder %s30, 1
      %p132 = por %p130, %p131
      %p133 = scmp.ne.s32.totalorder %s124, %s125
      %p134 = scmp.eq.s32.totalorder %s30, 0
      %p135 = por %p133, %p134
      %p136 = scmp.ne.s32.totalorder %s124, %s125
      %p137 = scmp.eq.s32.totalorder %s31, 1
      %p138 = por %p136, %p137
      %p140 = scmp.ne.s32.totalorder %s125, %s139
      %p141 = scmp.eq.s32.totalorder %s31, 0
      %p142 = por %p140, %p141
      %s144 = sadd.s32 %s143, 1
      %p147 = scmp.eq.s32.totalorder %s25, 1
      %p148 = scmp.ne.s32.totalorder %s143, %s145
      %p149 = scmp.eq.s32.totalorder %s25, 0
      %p150 = por %p148, %p149
      %p151 = scmp.ne.s32.totalorder %s143, %s145
      %p152 = scmp.eq.s32.totalorder %s30, 1
      %p153 = por %p151, %p152
      %p154 = scmp.ne.s32.totalorder %s145, %s146
      %p155 = scmp.eq.s32.totalorder %s30, 0
      %p156 = por %p154, %p155
      %p157 = scmp.ne.s32.totalorder %s145, %s146
      %p158 = scmp.eq.s32.totalorder %s31, 1
      %p159 = por %p157, %p158
      %p161 = scmp.ne.s32.totalorder %s146, %s160
      %p162 = scmp.eq.s32.totalorder %s31, 0
      %p163 = por %p161, %p162
      %s165 = sadd.s32 %s164, 1
      %p168 = scmp.eq.s32.totalorder %s25, 1
      %p169 = scmp.ne.s32.totalorder %s164, %s166
      %p170 = scmp.eq.s32.totalorder %s25, 0
      %p171 = por %p169, %p170
      %p172 = scmp.ne.s32.totalorder %s164, %s166
      %p173 = scmp.eq.s32.totalorder %s30, 1
      %p174 = por %p172, %p173
      %p175 = scmp.ne.s32.totalorder %s166, %s167
      %p176 = scmp.eq.s32.totalorder %s30, 0
      %p177 = por %p175, %p176
      %p178 = scmp.ne.s32.totalorder %s166, %s167
      %p179 = scmp.eq.s32.totalorder %s31, 1
      %p180 = por %p178, %p179
      %p182 = scmp.ne.s32.totalorder %s167, %s181
      %p183 = scmp.eq.s32.totalorder %s31, 0
      %p184 = por %p182, %p183
      %s186 = sadd.s32 %s185, 1
      %p189 = scmp.eq.s32.totalorder %s25, 1
      %p190 = scmp.ne.s32.totalorder %s185, %s187
      %p191 = scmp.eq.s32.totalorder %s25, 0
      %p192 = por %p190, %p191
      %p193 = scmp.ne.s32.totalorder %s185, %s187
      %p194 = scmp.eq.s32.totalorder %s30, 1
      %p195 = por %p193, %p194
      %p196 = scmp.ne.s32.totalorder %s187, %s188
      %p197 = scmp.eq.s32.totalorder %s30, 0
      %p198 = por %p196, %p197
      %p199 = scmp.ne.s32.totalorder %s187, %s188
      %p200 = scmp.eq.s32.totalorder %s31, 1
      %p201 = por %p199, %p200
      %p203 = scmp.ne.s32.totalorder %s188, %s202
      %p204 = scmp.eq.s32.totalorder %s31, 0
      %p205 = por %p203, %p204
      %s207 = sadd.s32 %s206, 1
      %p210 = scmp.eq.s32.totalorder %s25, 1
      %p211 = scmp.ne.s32.totalorder %s206, %s208
      %p212 = scmp.eq.s32.totalorder %s25, 0
      %p213 = por %p211, %p212
      %p214 = scmp.ne.s32.totalorder %s206, %s208
      %p215 = scmp.eq.s32.totalorder %s30, 1
      %p216 = por %p214, %p215
      %p217 = scmp.ne.s32.totalorder %s208, %s209
      %p218 = scmp.eq.s32.totalorder %s30, 0
      %p219 = por %p217, %p218
      %p220 = scmp.ne.s32.totalorder %s208, %s209
      %p221 = scmp.eq.s32.totalorder %s31, 1
      %p222 = por %p220, %p221
      %p224 = scmp.ne.s32.totalorder %s209, %s223
      %p225 = scmp.eq.s32.totalorder %s31, 0
      %p226 = por %p224, %p225
      %s228 = sadd.s32 %s227, 1
      %p231 = scmp.eq.s32.totalorder %s25, 1
      %p232 = scmp.ne.s32.totalorder %s227, %s229
      %p233 = scmp.eq.s32.totalorder %s25, 0
      %p234 = por %p232, %p233
      %p235 = scmp.ne.s32.totalorder %s227, %s229
      %p236 = scmp.eq.s32.totalorder %s30, 1
      %p237 = por %p235, %p236
      %p238 = scmp.ne.s32.totalorder %s229, %s230
      %p239 = scmp.eq.s32.totalorder %s30, 0
      %p240 = por %p238, %p239
      %p241 = scmp.ne.s32.totalorder %s229, %s230
      %p242 = scmp.eq.s32.totalorder %s31, 1
      %p243 = por %p241, %p242
      %p245 = scmp.ne.s32.totalorder %s230, %s244
      %p246 = scmp.eq.s32.totalorder %s31, 0
      %p247 = por %p245, %p246
      %s249 = sadd.s32 %s248, 1
      %p252 = scmp.eq.s32.totalorder %s25, 1
      %p253 = scmp.ne.s32.totalorder %s248, %s250
      %p254 = scmp.eq.s32.totalorder %s25, 0
      %p255 = por %p253, %p254
      %p256 = scmp.ne.s32.totalorder %s248, %s250
      %p257 = scmp.eq.s32.totalorder %s30, 1
      %p258 = por %p256, %p257
      %p259 = scmp.ne.s32.totalorder %s250, %s251
      %p260 = scmp.eq.s32.totalorder %s30, 0
      %p261 = por %p259, %p260
      %p262 = scmp.ne.s32.totalorder %s250, %s251
      %p263 = scmp.eq.s32.totalorder %s31, 1
      %p264 = por %p262, %p263
      %p266 = scmp.ne.s32.totalorder %s251, %s265
      %p267 = scmp.eq.s32.totalorder %s31, 0
      %p268 = por %p266, %p267
      %s270 = sadd.s32 %s269, 1
      %p273 = scmp.eq.s32.totalorder %s25, 1
      %p274 = scmp.ne.s32.totalorder %s269, %s271
      %p275 = scmp.eq.s32.totalorder %s25, 0
      %p276 = por %p274, %p275
      %p277 = scmp.ne.s32.totalorder %s269, %s271
      %p278 = scmp.eq.s32.totalorder %s30, 1
      %p279 = por %p277, %p278
      %p280 = scmp.ne.s32.totalorder %s271, %s272
      %p281 = scmp.eq.s32.totalorder %s30, 0
      %p282 = por %p280, %p281
      %p283 = scmp.ne.s32.totalorder %s271, %s272
      %p284 = scmp.eq.s32.totalorder %s31, 1
      %p285 = por %p283, %p284
      %p287 = scmp.ne.s32.totalorder %s272, %s286
      %p288 = scmp.eq.s32.totalorder %s31, 0
      %p289 = por %p287, %p288
      %s291 = sadd.s32 %s290, 1
      %p294 = scmp.eq.s32.totalorder %s25, 1
      %p295 = scmp.ne.s32.totalorder %s290, %s292
      %p296 = scmp.eq.s32.totalorder %s25, 0
      %p297 = por %p295, %p296
      %p298 = scmp.ne.s32.totalorder %s290, %s292
      %p299 = scmp.eq.s32.totalorder %s30, 1
      %p300 = por %p298, %p299
      %p301 = scmp.ne.s32.totalorder %s292, %s293
      %p302 = scmp.eq.s32.totalorder %s30, 0
      %p303 = por %p301, %p302
      %p304 = scmp.ne.s32.totalorder %s292, %s293
      %p305 = scmp.eq.s32.totalorder %s31, 1
      %p306 = por %p304, %p305
      %p308 = scmp.ne.s32.totalorder %s293, %s307
      %p309 = scmp.eq.s32.totalorder %s31, 0
      %p310 = por %p308, %p309
      %s311 = ssub.s32 %s25, %s32
      %p312 = scmp.eq.s32.totalorder %s311, 0
      %s314 = sadd.s32 %s313, 1
      %s315 = scalar_select %p312, %s313, %s314
      %p318 = pneg %p312
      %p319 = scmp.eq.s32.totalorder %s25, 1
      %p320 = por %p318, %p319
      %p321 = scmp.ne.s32.totalorder %s313, %s316
      %p322 = scmp.eq.s32.totalorder %s25, 0
      %p323 = por %p321, %p322
      %p324 = scmp.ne.s32.totalorder %s313, %s316
      %p325 = scmp.eq.s32.totalorder %s30, 1
      %p326 = por %p324, %p325
      %p327 = scmp.ne.s32.totalorder %s316, %s317
      %p328 = scmp.eq.s32.totalorder %s30, 0
      %p329 = por %p327, %p328
      %p330 = scmp.ne.s32.totalorder %s316, %s317
      %p331 = scmp.eq.s32.totalorder %s31, 1
      %p332 = por %p330, %p331
      %p334 = scmp.ne.s32.totalorder %s317, %s333
      %p335 = scmp.eq.s32.totalorder %s31, 0
      %p336 = por %p334, %p335
      %p337 = scmp.le.s32.totalorder 1, %s25
      %p338 = scmp.lt.s32.totalorder %s25, 3
      %p339 = pnand %p337, %p338
      %p340 = pneg %p339
      // Predicated region
      $region9: #{tpu_custom_call.1} parent=5 // pred_check
        _
      $region10: #{tpu_custom_call.1} parent=5 // pred_check_branch
        %342 = sbr.rel (%p339) target = $region12
      $region11: #{tpu_custom_call.1} parent=5 // pred_region
        %s343 = ssub.s32 %s25, 1
        // Predicated region
        $region13: #{tpu_custom_call.1} parent=11 // pred_check
          %p344 = pneg %p72
        $region14: #{tpu_custom_call.1} parent=11 // pred_check_branch
          %346 = sbr.rel (%p344) target = $region16
        $region15: #{tpu_custom_call.1} parent=11 // pred_region
          _
        $region16: #{tpu_custom_call.1} parent=11 // pred_fallthru
          _
        // Predicated region
        $region17: #{tpu_custom_call.1} parent=11 // pred_check
          %p347 = pneg %p93
        $region18: #{tpu_custom_call.1} parent=11 // pred_check_branch
          %349 = sbr.rel (%p347) target = $region20
        $region19: #{tpu_custom_call.1} parent=11 // pred_region
          _
        $region20: #{tpu_custom_call.1} parent=11 // pred_fallthru
          _
        // Predicated region
        $region21: #{tpu_custom_call.1} parent=11 // pred_check
          %p350 = pneg %p114
        $region22: #{tpu_custom_call.1} parent=11 // pred_check_branch
          %352 = sbr.rel (%p350) target = $region24
        $region23: #{tpu_custom_call.1} parent=11 // pred_region
          _
        $region24: #{tpu_custom_call.1} parent=11 // pred_fallthru
          _
        // Predicated region
        $region25: #{tpu_custom_call.1} parent=11 // pred_check
          %p353 = pneg %p135
        $region26: #{tpu_custom_call.1} parent=11 // pred_check_branch
          %355 = sbr.rel (%p353) target = $region28
        $region27: #{tpu_custom_call.1} parent=11 // pred_region
          _
        $region28: #{tpu_custom_call.1} parent=11 // pred_fallthru
          _
        // Predicated region
        $region29: #{tpu_custom_call.1} parent=11 // pred_check
          %p356 = pneg %p156
        $region30: #{tpu_custom_call.1} parent=11 // pred_check_branch
          %358 = sbr.rel (%p356) target = $region32
        $region31: #{tpu_custom_call.1} parent=11 // pred_region
          _
        $region32: #{tpu_custom_call.1} parent=11 // pred_fallthru
          _
        // Predicated region
        $region33: #{tpu_custom_call.1} parent=11 // pred_check
          %p359 = pneg %p177
        $region34: #{tpu_custom_call.1} parent=11 // pred_check_branch
          %361 = sbr.rel (%p359) target = $region36
        $region35: #{tpu_custom_call.1} parent=11 // pred_region
          _
        $region36: #{tpu_custom_call.1} parent=11 // pred_fallthru
          _
        // Predicated region
        $region37: #{tpu_custom_call.1} parent=11 // pred_check
          %p362 = pneg %p198
        $region38: #{tpu_custom_call.1} parent=11 // pred_check_branch
          %364 = sbr.rel (%p362) target = $region40
        $region39: #{tpu_custom_call.1} parent=11 // pred_region
          %s366 = ssub.s32 16, 16
          %367 = vsyncadd [#allocation3], %s366
          %s369 = sshll.u32 [#allocation2], 4
          %s370 = int_to_ptr.vmem [resolvable:$true] %s369
          %372 = dma.hbm_to_vmem [thread:$0]  %s7, 16, %s370, [#allocation3]
        $region40: #{tpu_custom_call.1} parent=11 // pred_fallthru
          _
        // Predicated region
        $region41: #{tpu_custom_call.1} parent=11 // pred_check
          %p373 = pneg %p219
        $region42: #{tpu_custom_call.1} parent=11 // pred_check_branch
          %375 = sbr.rel (%p373) target = $region44
        $region43: #{tpu_custom_call.1} parent=11 // pred_region
          %s377 = ssub.s32 16, 16
          %378 = vsyncadd [#allocation6], %s377
          %s380 = sshll.u32 [#allocation5], 4
          %s381 = int_to_ptr.vmem [resolvable:$true] %s380
          %383 = dma.hbm_to_vmem [thread:$0]  %s8, 16, %s381, [#allocation6]
        $region44: #{tpu_custom_call.1} parent=11 // pred_fallthru
          _
        // Predicated region
        $region45: #{tpu_custom_call.1} parent=11 // pred_check
          %p384 = pneg %p240
        $region46: #{tpu_custom_call.1} parent=11 // pred_check_branch
          %386 = sbr.rel (%p384) target = $region48
        $region47: #{tpu_custom_call.1} parent=11 // pred_region
          %s388 = ssub.s32 256, 256
          %389 = vsyncadd [#allocation6], %s388
          %s390 = sshll.u32 [#allocation7], 4
          %s391 = int_to_ptr.vmem [resolvable:$true] %s390
          %396 = dma.hbm_to_vmem [thread:$0]  %s9, 256, %s391, [#allocation6], 64, 64, 4
        $region48: #{tpu_custom_call.1} parent=11 // pred_fallthru
          _
        // Predicated region
        $region49: #{tpu_custom_call.1} parent=11 // pred_check
          %p397 = pneg %p261
        $region50: #{tpu_custom_call.1} parent=11 // pred_check_branch
          %399 = sbr.rel (%p397) target = $region52
        $region51: #{tpu_custom_call.1} parent=11 // pred_region
          %s401 = ssub.s32 16, 16
          %402 = vsyncadd [#allocation9], %s401
          %s404 = sshll.u32 [#allocation8], 4
          %s405 = int_to_ptr.vmem [resolvable:$true] %s404
          %407 = dma.hbm_to_vmem [thread:$0]  %s10, 16, %s405, [#allocation9]
        $region52: #{tpu_custom_call.1} parent=11 // pred_fallthru
          _
        // Predicated region
        $region53: #{tpu_custom_call.1} parent=11 // pred_check
          %p408 = pneg %p282
        $region54: #{tpu_custom_call.1} parent=11 // pred_check_branch
          %410 = sbr.rel (%p408) target = $region56
        $region55: #{tpu_custom_call.1} parent=11 // pred_region
          _
        $region56: #{tpu_custom_call.1} parent=11 // pred_fallthru
          _
        // Predicated region
        $region57: #{tpu_custom_call.1} parent=11 // pred_check
          %p411 = pneg %p303
        $region58: #{tpu_custom_call.1} parent=11 // pred_check_branch
          %413 = sbr.rel (%p411) target = $region60
        $region59: #{tpu_custom_call.1} parent=11 // pred_region
          _
        $region60: #{tpu_custom_call.1} parent=11 // pred_fallthru
          _
      $region12: #{tpu_custom_call.1} parent=5 // pred_fallthru
        _
      %p414 = scmp.lt.s32.totalorder %s25, 2
      // Predicated region
      $region61: #{tpu_custom_call.1} parent=5 // pred_check
        %p415 = pneg %p414
      $region62: #{tpu_custom_call.1} parent=5 // pred_check_branch
        %417 = sbr.rel (%p415) target = $region64
      $region63: #{tpu_custom_call.1} parent=5 // pred_region
        // Predicated region
        $region65: #{tpu_custom_call.1} parent=63 // pred_check
          %p418 = pneg %p45
        $region66: #{tpu_custom_call.1} parent=63 // pred_check_branch
          %420 = sbr.rel (%p418) target = $region68
        $region67: #{tpu_custom_call.1} parent=63 // pred_region
          %p421 = scmp.lt.s32.totalorder %s25, 1
          %s422 = scalar_select %p421, %s25, 1
          %s423 = smul.addr %s422, 8
          %s424 = scalar_lea.vmem %s0, %s423
        $region68: #{tpu_custom_call.1} parent=63 // pred_fallthru
          _
      $region64: #{tpu_custom_call.1} parent=5 // pred_fallthru
        _
      %p425 = scmp.le.s32.totalorder 1, %s25
      %p426 = scmp.lt.s32.totalorder %s25, 3
      %p427 = pnand %p425, %p426
      %p428 = pneg %p427
      // Predicated region
      $region69: #{tpu_custom_call.1} parent=5 // pred_check
        _
      $region70: #{tpu_custom_call.1} parent=5 // pred_check_branch
        %430 = sbr.rel (%p427) target = $region72
      $region71: #{tpu_custom_call.1} parent=5 // pred_region
        %s431 = ssub.s32 %s25, 1
        // Predicated region
        $region73: #{tpu_custom_call.1} parent=71 // pred_check
          %p432 = pneg %p198
        $region74: #{tpu_custom_call.1} parent=71 // pred_check_branch
          %434 = sbr.rel (%p432) target = $region76
        $region75: #{tpu_custom_call.1} parent=71 // pred_region
          %435 = dma.done [#allocation3], 16
        $region76: #{tpu_custom_call.1} parent=71 // pred_fallthru
          _
        // Predicated region
        $region77: #{tpu_custom_call.1} parent=71 // pred_check
          %p436 = pneg %p219
        $region78: #{tpu_custom_call.1} parent=71 // pred_check_branch
          %438 = sbr.rel (%p436) target = $region80
        $region79: #{tpu_custom_call.1} parent=71 // pred_region
          %439 = dma.done [#allocation6], 16
        $region80: #{tpu_custom_call.1} parent=71 // pred_fallthru
          _
        // Predicated region
        $region81: #{tpu_custom_call.1} parent=71 // pred_check
          %p440 = pneg %p240
        $region82: #{tpu_custom_call.1} parent=71 // pred_check_branch
          %442 = sbr.rel (%p440) target = $region84
        $region83: #{tpu_custom_call.1} parent=71 // pred_region
          %443 = dma.done [#allocation6], 256
        $region84: #{tpu_custom_call.1} parent=71 // pred_fallthru
          _
        // Predicated region
        $region85: #{tpu_custom_call.1} parent=71 // pred_check
          %p444 = pneg %p261
        $region86: #{tpu_custom_call.1} parent=71 // pred_check_branch
          %446 = sbr.rel (%p444) target = $region88
        $region87: #{tpu_custom_call.1} parent=71 // pred_region
          %447 = dma.done [#allocation9], 16
        $region88: #{tpu_custom_call.1} parent=71 // pred_fallthru
          _
        %p448 = scmp.lt.s32.totalorder %s30, 1
        %s449 = scalar_select %p448, %s30, 1
        %s450 = smul.addr %s449, 8
        %s451 = scalar_lea.vmem %s0, %s450
        %p452 = pneg %p51
        %p453 = pneg %p48
        %p454 = pneg %p72
        %p455 = pneg %p69
        %p456 = pneg %p93
        %p457 = pneg %p90
        %p458 = pneg %p114
        %p459 = pneg %p111
        %p460 = pneg %p135
        %p461 = pneg %p132
        %p462 = pneg %p156
        %p463 = pneg %p153
        %p464 = pneg %p177
        %p465 = pneg %p174
        %p466 = pneg %p198
        %p467 = pneg %p195
        %p468 = pneg %p219
        %p469 = pneg %p216
        %p470 = pneg %p240
        %p471 = pneg %p237
        %p472 = pneg %p261
        %p473 = pneg %p258
        %p474 = pneg %p282
        %p475 = pneg %p279
        %p476 = pneg %p303
        %p477 = pneg %p300
        %p478 = pneg %p329
        %p479 = pneg %p326
        %s480 = sand.u32 %s316, 1
        %s481 = scalar_lea.sflag [#allocation4], %s480
        %s482 = sand.u32 %s316, 1
        %s483 = smul.addr %s482, 8
        %s484 = scalar_lea.vmem [#allocation10], %s483
        %p485 = scmp.lt.s32.totalorder %s30, 1
        %s486 = scalar_select %p485, %s30, 1
        %s487 = smul.addr %s486, 8
        %s488 = scalar_lea.vmem %s0, %s487
        %v490 = vld [vmem:[%s488] sm:$0xff]
        %v491 = vld [vmem:[%s1] sm:$0x1]
        %v492 = vld [vmem:[%s2] sm:$0x1]
        %vm493 = vcmask 261120
        %v494 = vsel %vm493, %v490, 0.0
        %495 = vadd.xlane.f32.xlu0 %v494
        %v496 = vpop.xlane.xlu0 %495
        %v497 = vrcp.pop 32.0
        %v498 = vmul.f32 %v496, %v497
        %v499 = vsub.f32 %v490, %v498
        %v500 = vmul.f32 %v499, %v499
        %v501 = vsel %vm493, %v500, 0.0
        %502 = vadd.xlane.f32.xlu0 %v501
        %v503 = vpop.xlane.xlu0 %502
        %v504 = vmul.f32 %v503, %v497
        %v505 = vadd.f32 %v504, 1e-05
        %v506 = vrsqrt.pop %v505
        %v507 = vmul.f32 %v499, %v506
        %v509 = vlaneseq
        %v510 = vshrl.u32 %v509, 7
        %v511 = vsub.s32 0, %v510
        %v512 = vrot.slane %v491, %v511
        %v514 = vmul.f32 %v507, %v512
        %v516 = vlaneseq
        %v517 = vshrl.u32 %v516, 7
        %v518 = vsub.s32 0, %v517
        %v519 = vrot.slane %v492, %v518
        %v521 = vadd.f32 %v514, %v519
        %v522 = vpack.c.bf16 %v521, %v521
        %v523 = vld [vmem:[%s3] sm:$0xf]
        %v524 = vld [vmem:[%s3 + $0x4] sm:$0xf]
        %v525 = vld [vmem:[%s3 + $0x8] sm:$0xf]
        %v526 = vld [vmem:[%s3 + $0xc] sm:$0xf]
        %v527 = vld [vmem:[%s4] sm:$0x1]
        %v529 = vlaneseq
        %v530 = vshrl.u32 %v529, 7
        %v531 = vsub.s32 0, %v530
        %v532 = vrot.slane %v527, %v531
        %v538 = vunpack.c.l.b16 %v523
        %v539 = vunpack.c.l.b16 %v524
        %v540 = vunpack.c.l.b16 %v525
        %v541 = vunpack.c.l.b16 %v526
        %v542 = vpack.c.b16 %v539, %v538
        %v543 = vpack.c.b16 %v541, %v540
        %v547 = vsel %vm493, %v522, 0
        %549 = vmatprep.subr.bf16.mxu0 0
        %550 = vmatpush1.bf16.msra.mxu0 0
        %551 = vmatprep.subr.bf16.mxu0 0
        %552 = vmatpush1.bf16.msra.mxu0 0
        %553 = vmatprep.subr.bf16.mxu0 0
        %554 = vmatpush1.bf16.msra.mxu0 0
        %555 = vmatprep.subr.bf16.mxu0 0
        %556 = vmatpush1.bf16.msra.mxu0 0
        %557 = vmatprep.subr.bf16.mxu0 0
        %558 = vmatpush1.bf16.msra.mxu0 0
        %559 = vmatprep.subr.bf16.mxu0 0
        %560 = vmatpush1.bf16.msra.mxu0 0
        %561 = vmatprep.subr.bf16.mxu0 0
        %562 = vmatpush1.bf16.msra.mxu0 %v543
        %563 = vmatprep.subr.bf16.mxu0 0
        %564 = vmatpush1.bf16.msra.mxu0 %v542
        %565 = vmatprep.subr.bf16.mxu0 0
        %566 = vmatpush2.bf16.msra.mxu0 0
        %567 = vmatprep.subr.bf16.mxu0 0
        %568 = vmatpush2.bf16.msra.mxu0 0
        %569 = vmatprep.subr.bf16.mxu0 0
        %570 = vmatpush2.bf16.msra.mxu0 0
        %571 = vmatprep.subr.bf16.mxu0 0
        %572 = vmatpush2.bf16.msra.mxu0 0
        %573 = vmatprep.subr.bf16.mxu0 0
        %574 = vmatpush2.bf16.msra.mxu0 0
        %575 = vmatprep.subr.bf16.mxu0 0
        %576 = vmatpush2.bf16.msra.mxu0 0
        %577 = vmatprep.subr.bf16.mxu0 0
        %578 = vmatpush2.bf16.msra.mxu0 0
        %579 = vmatprep.subr.bf16.mxu0 0
        %580 = vmatpush2.bf16.msra.mxu0 0
        %581 = vmatprep.mubr.bf16.mxu0 0
        %582 = vmatmul.mubr.bf16.gmra.mxu0 %v547
        %v583 = vpop.f32.mrf.mxu0
        %v584 = vadd.f32 %v532, %v583
        %v585 = vpop.f32.mrf.mxu0
        %v586 = vpop.f32.mrf.mxu0
        %v587 = vpop.f32.mrf.mxu0
        %588 = vdwg.mxu0
        %v589 = vmax.f32 %v584, 0.0
        %v590 = vpack.c.bf16 %v589, %v589
        %v591 = vlaneseq
        %v592 = vshrl.u32 %v591, 7
        %v593 = vlaneseq
        %v594 = vand.u32 %v593, 127
        %vm595 = vcmp.le.s32.totalorder %v594, %v592
        %v596 = vsel %vm595, 1, 0
        %v597 = vcvt.s32.f32 %v596
        %599 = vrot.lane.b32.xlu0 %v590, 96
        %v600 = vpop.permute.xlu0 %599
        %vm601 = vcmask 64512
        %v603 = vsel %vm601, %v590, 0
        %v606 = vsel %vm601, %v600, 0
        %608 = vmatprep.subr.bf16.mxu0 0
        %609 = vmatpush1.bf16.xpose.msra.mxu0 0
        %610 = vmatprep.subr.bf16.mxu0 0
        %611 = vmatpush1.bf16.xpose.msra.mxu0 0
        %612 = vmatprep.subr.bf16.mxu0 0
        %613 = vmatpush1.bf16.xpose.msra.mxu0 0
        %614 = vmatprep.subr.bf16.mxu0 0
        %615 = vmatpush1.bf16.xpose.msra.mxu0 0
        %616 = vmatprep.subr.bf16.mxu0 0
        %617 = vmatpush1.bf16.xpose.msra.mxu0 0
        %618 = vmatprep.subr.bf16.mxu0 0
        %619 = vmatpush1.bf16.xpose.msra.mxu0 0
        %620 = vmatprep.subr.bf16.mxu0 0
        %621 = vmatpush1.bf16.xpose.msra.mxu0 0
        %622 = vmatprep.subr.bf16.mxu0 0
        %623 = vmatpush1.bf16.xpose.msra.mxu0 %v606
        %624 = vmatprep.subr.bf16.mxu0 0
        %625 = vmatpush2.bf16.xpose.msra.mxu0 0
        %626 = vmatprep.subr.bf16.mxu0 0
        %627 = vmatpush2.bf16.xpose.msra.mxu0 0
        %628 = vmatprep.subr.bf16.mxu0 0
        %629 = vmatpush2.bf16.xpose.msra.mxu0 0
        %630 = vmatprep.subr.bf16.mxu0 0
        %631 = vmatpush2.bf16.xpose.msra.mxu0 0
        %632 = vmatprep.subr.bf16.mxu0 0
        %633 = vmatpush2.bf16.xpose.msra.mxu0 0
        %634 = vmatprep.subr.bf16.mxu0 0
        %635 = vmatpush2.bf16.xpose.msra.mxu0 0
        %636 = vmatprep.subr.bf16.mxu0 0
        %637 = vmatpush2.bf16.xpose.msra.mxu0 0
        %638 = vmatprep.subr.bf16.mxu0 0
        %639 = vmatpush2.bf16.xpose.msra.mxu0 0
        %640 = vmatprep.mubr.bf16.mxu0 0
        %641 = vmatmul.mubr.bf16.gmra.mxu0 %v603
        %v642 = vpop.f32.mrf.mxu0
        %v643 = vadd.f32 0.0, %v642
        %v644 = vpop.f32.mrf.mxu0
        %v645 = vpop.f32.mrf.mxu0
        %v646 = vpop.f32.mrf.mxu0
        %647 = vdwg.mxu0
        %v648 = vmax.f32 %v643, 0.0
        %v649 = vmul.f32 %v648, %v597
        %v650 = vpack.c.bf16 %v649, %v649
        %651 = vrot.lane.b32.xlu0 %v590, 64
        %v652 = vpop.permute.xlu0 %651
        %v654 = vsel %vm601, %v650, 0
        %vm656 = vcmask 1043456
        %v658 = vsel %vm656, %v652, 0
        %660 = vmatprep.subr.bf16.mxu0 0
        %661 = vmatpush1.bf16.msra.mxu0 0
        %662 = vmatprep.subr.bf16.mxu0 0
        %663 = vmatpush1.bf16.msra.mxu0 0
        %664 = vmatprep.subr.bf16.mxu0 0
        %665 = vmatpush1.bf16.msra.mxu0 0
        %666 = vmatprep.subr.bf16.mxu0 0
        %667 = vmatpush1.bf16.msra.mxu0 0
        %668 = vmatprep.subr.bf16.mxu0 0
        %669 = vmatpush1.bf16.msra.mxu0 0
        %670 = vmatprep.subr.bf16.mxu0 0
        %671 = vmatpush1.bf16.msra.mxu0 0
        %672 = vmatprep.subr.bf16.mxu0 0
        %673 = vmatpush1.bf16.msra.mxu0 0
        %674 = vmatprep.subr.bf16.mxu0 0
        %675 = vmatpush1.bf16.msra.mxu0 %v658
        %676 = vmatprep.subr.bf16.mxu0 0
        %677 = vmatpush2.bf16.msra.mxu0 0
        %678 = vmatprep.subr.bf16.mxu0 0
        %679 = vmatpush2.bf16.msra.mxu0 0
        %680 = vmatprep.subr.bf16.mxu0 0
        %681 = vmatpush2.bf16.msra.mxu0 0
        %682 = vmatprep.subr.bf16.mxu0 0
        %683 = vmatpush2.bf16.msra.mxu0 0
        %684 = vmatprep.subr.bf16.mxu0 0
        %685 = vmatpush2.bf16.msra.mxu0 0
        %686 = vmatprep.subr.bf16.mxu0 0
        %687 = vmatpush2.bf16.msra.mxu0 0
        %688 = vmatprep.subr.bf16.mxu0 0
        %689 = vmatpush2.bf16.msra.mxu0 0
        %690 = vmatprep.subr.bf16.mxu0 0
        %691 = vmatpush2.bf16.msra.mxu0 0
        %692 = vmatprep.mubr.bf16.mxu0 0
        %693 = vmatmul.mubr.bf16.gmra.mxu0 %v654
        %v694 = vpop.f32.mrf.mxu0
        %v695 = vadd.f32 0.0, %v694
        %v696 = vpop.f32.mrf.mxu0
        %v697 = vpop.f32.mrf.mxu0
        %v698 = vpop.f32.mrf.mxu0
        %699 = vdwg.mxu0
        %v700 = vpack.c.bf16 %v695, %v695
        %701 = vrot.lane.b32.xlu0 %v590, 120
        %v702 = vpop.permute.xlu0 %701
        %703 = vrot.lane.b32.xlu0 %v590, 88
        %v704 = vpop.permute.xlu0 %703
        %v706 = vsel %vm601, %v702, 0
        %v709 = vsel %vm601, %v704, 0
        %711 = vmatprep.subr.bf16.mxu0 0
        %712 = vmatpush1.bf16.xpose.msra.mxu0 0
        %713 = vmatprep.subr.bf16.mxu0 0
        %714 = vmatpush1.bf16.xpose.msra.mxu0 0
        %715 = vmatprep.subr.bf16.mxu0 0
        %716 = vmatpush1.bf16.xpose.msra.mxu0 0
        %717 = vmatprep.subr.bf16.mxu0 0
        %718 = vmatpush1.bf16.xpose.msra.mxu0 0
        %719 = vmatprep.subr.bf16.mxu0 0
        %720 = vmatpush1.bf16.xpose.msra.mxu0 0
        %721 = vmatprep.subr.bf16.mxu0 0
        %722 = vmatpush1.bf16.xpose.msra.mxu0 0
        %723 = vmatprep.subr.bf16.mxu0 0
        %724 = vmatpush1.bf16.xpose.msra.mxu0 0
        %725 = vmatprep.subr.bf16.mxu0 0
        %726 = vmatpush1.bf16.xpose.msra.mxu0 %v709
        %727 = vmatprep.subr.bf16.mxu0 0
        %728 = vmatpush2.bf16.xpose.msra.mxu0 0
        %729 = vmatprep.subr.bf16.mxu0 0
        %730 = vmatpush2.bf16.xpose.msra.mxu0 0
        %731 = vmatprep.subr.bf16.mxu0 0
        %732 = vmatpush2.bf16.xpose.msra.mxu0 0
        %733 = vmatprep.subr.bf16.mxu0 0
        %734 = vmatpush2.bf16.xpose.msra.mxu0 0
        %735 = vmatprep.subr.bf16.mxu0 0
        %736 = vmatpush2.bf16.xpose.msra.mxu0 0
        %737 = vmatprep.subr.bf16.mxu0 0
        %738 = vmatpush2.bf16.xpose.msra.mxu0 0
        %739 = vmatprep.subr.bf16.mxu0 0
        %740 = vmatpush2.bf16.xpose.msra.mxu0 0
        %741 = vmatprep.subr.bf16.mxu0 0
        %742 = vmatpush2.bf16.xpose.msra.mxu0 0
        %743 = vmatprep.mubr.bf16.mxu0 0
        %744 = vmatmul.mubr.bf16.gmra.mxu0 %v706
        %v745 = vpop.f32.mrf.mxu0
        %v746 = vadd.f32 0.0, %v745
        %v747 = vpop.f32.mrf.mxu0
        %v748 = vpop.f32.mrf.mxu0
        %v749 = vpop.f32.mrf.mxu0
        %750 = vdwg.mxu0
        %v751 = vmax.f32 %v746, 0.0
        %v752 = vmul.f32 %v751, %v597
        %v753 = vpack.c.bf16 %v752, %v752
        %754 = vrot.lane.b32.xlu0 %v590, 56
        %v755 = vpop.permute.xlu0 %754
        %v757 = vsel %vm601, %v753, 0
        %v760 = vsel %vm656, %v755, 0
        %762 = vmatprep.subr.bf16.mxu0 0
        %763 = vmatpush1.bf16.msra.mxu0 0
        %764 = vmatprep.subr.bf16.mxu0 0
        %765 = vmatpush1.bf16.msra.mxu0 0
        %766 = vmatprep.subr.bf16.mxu0 0
        %767 = vmatpush1.bf16.msra.mxu0 0
        %768 = vmatprep.subr.bf16.mxu0 0
        %769 = vmatpush1.bf16.msra.mxu0 0
        %770 = vmatprep.subr.bf16.mxu0 0
        %771 = vmatpush1.bf16.msra.mxu0 0
        %772 = vmatprep.subr.bf16.mxu0 0
        %773 = vmatpush1.bf16.msra.mxu0 0
        %774 = vmatprep.subr.bf16.mxu0 0
        %775 = vmatpush1.bf16.msra.mxu0 0
        %776 = vmatprep.subr.bf16.mxu0 0
        %777 = vmatpush1.bf16.msra.mxu0 %v760
        %778 = vmatprep.subr.bf16.mxu0 0
        %779 = vmatpush2.bf16.msra.mxu0 0
        %780 = vmatprep.subr.bf16.mxu0 0
        %781 = vmatpush2.bf16.msra.mxu0 0
        %782 = vmatprep.subr.bf16.mxu0 0
        %783 = vmatpush2.bf16.msra.mxu0 0
        %784 = vmatprep.subr.bf16.mxu0 0
        %785 = vmatpush2.bf16.msra.mxu0 0
        %786 = vmatprep.subr.bf16.mxu0 0
        %787 = vmatpush2.bf16.msra.mxu0 0
        %788 = vmatprep.subr.bf16.mxu0 0
        %789 = vmatpush2.bf16.msra.mxu0 0
        %790 = vmatprep.subr.bf16.mxu0 0
        %791 = vmatpush2.bf16.msra.mxu0 0
        %792 = vmatprep.subr.bf16.mxu0 0
        %793 = vmatpush2.bf16.msra.mxu0 0
        %794 = vmatprep.mubr.bf16.mxu0 0
        %795 = vmatmul.mubr.bf16.gmra.mxu0 %v757
        %v796 = vpop.f32.mrf.mxu0
        %v797 = vadd.f32 0.0, %v796
        %v798 = vpop.f32.mrf.mxu0
        %v799 = vpop.f32.mrf.mxu0
        %v800 = vpop.f32.mrf.mxu0
        %801 = vdwg.mxu0
        %v802 = vpack.c.bf16 %v797, %v797
        %803 = vrot.lane.b32.xlu0 %v590, 112
        %v804 = vpop.permute.xlu0 %803
        %805 = vrot.lane.b32.xlu0 %v590, 80
        %v806 = vpop.permute.xlu0 %805
        %v808 = vsel %vm601, %v804, 0
        %v811 = vsel %vm601, %v806, 0
        %813 = vmatprep.subr.bf16.mxu0 0
        %814 = vmatpush1.bf16.xpose.msra.mxu0 0
        %815 = vmatprep.subr.bf16.mxu0 0
        %816 = vmatpush1.bf16.xpose.msra.mxu0 0
        %817 = vmatprep.subr.bf16.mxu0 0
        %818 = vmatpush1.bf16.xpose.msra.mxu0 0
        %819 = vmatprep.subr.bf16.mxu0 0
        %820 = vmatpush1.bf16.xpose.msra.mxu0 0
        %821 = vmatprep.subr.bf16.mxu0 0
        %822 = vmatpush1.bf16.xpose.msra.mxu0 0
        %823 = vmatprep.subr.bf16.mxu0 0
        %824 = vmatpush1.bf16.xpose.msra.mxu0 0
        %825 = vmatprep.subr.bf16.mxu0 0
        %826 = vmatpush1.bf16.xpose.msra.mxu0 0
        %827 = vmatprep.subr.bf16.mxu0 0
        %828 = vmatpush1.bf16.xpose.msra.mxu0 %v811
        %829 = vmatprep.subr.bf16.mxu0 0
        %830 = vmatpush2.bf16.xpose.msra.mxu0 0
        %831 = vmatprep.subr.bf16.mxu0 0
        %832 = vmatpush2.bf16.xpose.msra.mxu0 0
        %833 = vmatprep.subr.bf16.mxu0 0
        %834 = vmatpush2.bf16.xpose.msra.mxu0 0
        %835 = vmatprep.subr.bf16.mxu0 0
        %836 = vmatpush2.bf16.xpose.msra.mxu0 0
        %837 = vmatprep.subr.bf16.mxu0 0
        %838 = vmatpush2.bf16.xpose.msra.mxu0 0
        %839 = vmatprep.subr.bf16.mxu0 0
        %840 = vmatpush2.bf16.xpose.msra.mxu0 0
        %841 = vmatprep.subr.bf16.mxu0 0
        %842 = vmatpush2.bf16.xpose.msra.mxu0 0
        %843 = vmatprep.subr.bf16.mxu0 0
        %844 = vmatpush2.bf16.xpose.msra.mxu0 0
        %845 = vmatprep.mubr.bf16.mxu0 0
        %846 = vmatmul.mubr.bf16.gmra.mxu0 %v808
        %v847 = vpop.f32.mrf.mxu0
        %v848 = vadd.f32 0.0, %v847
        %v849 = vpop.f32.mrf.mxu0
        %v850 = vpop.f32.mrf.mxu0
        %v851 = vpop.f32.mrf.mxu0
        %852 = vdwg.mxu0
        %v853 = vmax.f32 %v848, 0.0
        %v854 = vmul.f32 %v853, %v597
        %v855 = vpack.c.bf16 %v854, %v854
        %856 = vrot.lane.b32.xlu0 %v590, 48
        %v857 = vpop.permute.xlu0 %856
        %v859 = vsel %vm601, %v855, 0
        %v862 = vsel %vm656, %v857, 0
        %864 = vmatprep.subr.bf16.mxu0 0
        %865 = vmatpush1.bf16.msra.mxu0 0
        %866 = vmatprep.subr.bf16.mxu0 0
        %867 = vmatpush1.bf16.msra.mxu0 0
        %868 = vmatprep.subr.bf16.mxu0 0
        %869 = vmatpush1.bf16.msra.mxu0 0
        %870 = vmatprep.subr.bf16.mxu0 0
        %871 = vmatpush1.bf16.msra.mxu0 0
        %872 = vmatprep.subr.bf16.mxu0 0
        %873 = vmatpush1.bf16.msra.mxu0 0
        %874 = vmatprep.subr.bf16.mxu0 0
        %875 = vmatpush1.bf16.msra.mxu0 0
        %876 = vmatprep.subr.bf16.mxu0 0
        %877 = vmatpush1.bf16.msra.mxu0 0
        %878 = vmatprep.subr.bf16.mxu0 0
        %879 = vmatpush1.bf16.msra.mxu0 %v862
        %880 = vmatprep.subr.bf16.mxu0 0
        %881 = vmatpush2.bf16.msra.mxu0 0
        %882 = vmatprep.subr.bf16.mxu0 0
        %883 = vmatpush2.bf16.msra.mxu0 0
        %884 = vmatprep.subr.bf16.mxu0 0
        %885 = vmatpush2.bf16.msra.mxu0 0
        %886 = vmatprep.subr.bf16.mxu0 0
        %887 = vmatpush2.bf16.msra.mxu0 0
        %888 = vmatprep.subr.bf16.mxu0 0
        %889 = vmatpush2.bf16.msra.mxu0 0
        %890 = vmatprep.subr.bf16.mxu0 0
        %891 = vmatpush2.bf16.msra.mxu0 0
        %892 = vmatprep.subr.bf16.mxu0 0
        %893 = vmatpush2.bf16.msra.mxu0 0
        %894 = vmatprep.subr.bf16.mxu0 0
        %895 = vmatpush2.bf16.msra.mxu0 0
        %896 = vmatprep.mubr.bf16.mxu0 0
        %897 = vmatmul.mubr.bf16.gmra.mxu0 %v859
        %v898 = vpop.f32.mrf.mxu0
        %v899 = vadd.f32 0.0, %v898
        %v900 = vpop.f32.mrf.mxu0
        %v901 = vpop.f32.mrf.mxu0
        %v902 = vpop.f32.mrf.mxu0
        %903 = vdwg.mxu0
        %v904 = vpack.c.bf16 %v899, %v899
        %905 = vrot.lane.b32.xlu0 %v590, 104
        %v906 = vpop.permute.xlu0 %905
        %907 = vrot.lane.b32.xlu0 %v590, 72
        %v908 = vpop.permute.xlu0 %907
        %v910 = vsel %vm601, %v906, 0
        %v913 = vsel %vm601, %v908, 0
        %915 = vmatprep.subr.bf16.mxu0 0
        %916 = vmatpush1.bf16.xpose.msra.mxu0 0
        %917 = vmatprep.subr.bf16.mxu0 0
        %918 = vmatpush1.bf16.xpose.msra.mxu0 0
        %919 = vmatprep.subr.bf16.mxu0 0
        %920 = vmatpush1.bf16.xpose.msra.mxu0 0
        %921 = vmatprep.subr.bf16.mxu0 0
        %922 = vmatpush1.bf16.xpose.msra.mxu0 0
        %923 = vmatprep.subr.bf16.mxu0 0
        %924 = vmatpush1.bf16.xpose.msra.mxu0 0
        %925 = vmatprep.subr.bf16.mxu0 0
        %926 = vmatpush1.bf16.xpose.msra.mxu0 0
        %927 = vmatprep.subr.bf16.mxu0 0
        %928 = vmatpush1.bf16.xpose.msra.mxu0 0
        %929 = vmatprep.subr.bf16.mxu0 0
        %930 = vmatpush1.bf16.xpose.msra.mxu0 %v913
        %931 = vmatprep.subr.bf16.mxu0 0
        %932 = vmatpush2.bf16.xpose.msra.mxu0 0
        %933 = vmatprep.subr.bf16.mxu0 0
        %934 = vmatpush2.bf16.xpose.msra.mxu0 0
        %935 = vmatprep.subr.bf16.mxu0 0
        %936 = vmatpush2.bf16.xpose.msra.mxu0 0
        %937 = vmatprep.subr.bf16.mxu0 0
        %938 = vmatpush2.bf16.xpose.msra.mxu0 0
        %939 = vmatprep.subr.bf16.mxu0 0
        %940 = vmatpush2.bf16.xpose.msra.mxu0 0
        %941 = vmatprep.subr.bf16.mxu0 0
        %942 = vmatpush2.bf16.xpose.msra.mxu0 0
        %943 = vmatprep.subr.bf16.mxu0 0
        %944 = vmatpush2.bf16.xpose.msra.mxu0 0
        %945 = vmatprep.subr.bf16.mxu0 0
        %946 = vmatpush2.bf16.xpose.msra.mxu0 0
        %947 = vmatprep.mubr.bf16.mxu0 0
        %948 = vmatmul.mubr.bf16.gmra.mxu0 %v910
        %v949 = vpop.f32.mrf.mxu0
        %v950 = vadd.f32 0.0, %v949
        %v951 = vpop.f32.mrf.mxu0
        %v952 = vpop.f32.mrf.mxu0
        %v953 = vpop.f32.mrf.mxu0
        %954 = vdwg.mxu0
        %v955 = vmax.f32 %v950, 0.0
        %v956 = vmul.f32 %v955, %v597
        %v957 = vpack.c.bf16 %v956, %v956
        %958 = vrot.lane.b32.xlu0 %v590, 40
        %v959 = vpop.permute.xlu0 %958
        %v961 = vsel %vm601, %v957, 0
        %v964 = vsel %vm656, %v959, 0
        %966 = vmatprep.subr.bf16.mxu0 0
        %967 = vmatpush1.bf16.msra.mxu0 0
        %968 = vmatprep.subr.bf16.mxu0 0
        %969 = vmatpush1.bf16.msra.mxu0 0
        %970 = vmatprep.subr.bf16.mxu0 0
        %971 = vmatpush1.bf16.msra.mxu0 0
        %972 = vmatprep.subr.bf16.mxu0 0
        %973 = vmatpush1.bf16.msra.mxu0 0
        %974 = vmatprep.subr.bf16.mxu0 0
        %975 = vmatpush1.bf16.msra.mxu0 0
        %976 = vmatprep.subr.bf16.mxu0 0
        %977 = vmatpush1.bf16.msra.mxu0 0
        %978 = vmatprep.subr.bf16.mxu0 0
        %979 = vmatpush1.bf16.msra.mxu0 0
        %980 = vmatprep.subr.bf16.mxu0 0
        %981 = vmatpush1.bf16.msra.mxu0 %v964
        %982 = vmatprep.subr.bf16.mxu0 0
        %983 = vmatpush2.bf16.msra.mxu0 0
        %984 = vmatprep.subr.bf16.mxu0 0
        %985 = vmatpush2.bf16.msra.mxu0 0
        %986 = vmatprep.subr.bf16.mxu0 0
        %987 = vmatpush2.bf16.msra.mxu0 0
        %988 = vmatprep.subr.bf16.mxu0 0
        %989 = vmatpush2.bf16.msra.mxu0 0
        %990 = vmatprep.subr.bf16.mxu0 0
        %991 = vmatpush2.bf16.msra.mxu0 0
        %992 = vmatprep.subr.bf16.mxu0 0
        %993 = vmatpush2.bf16.msra.mxu0 0
        %994 = vmatprep.subr.bf16.mxu0 0
        %995 = vmatpush2.bf16.msra.mxu0 0
        %996 = vmatprep.subr.bf16.mxu0 0
        %997 = vmatpush2.bf16.msra.mxu0 0
        %998 = vmatprep.mubr.bf16.mxu0 0
        %999 = vmatmul.mubr.bf16.gmra.mxu0 %v961
        %v1000 = vpop.f32.mrf.mxu0
        %v1001 = vadd.f32 0.0, %v1000
        %v1002 = vpop.f32.mrf.mxu0
        %v1003 = vpop.f32.mrf.mxu0
        %v1004 = vpop.f32.mrf.mxu0
        %1005 = vdwg.mxu0
        %v1006 = vpack.c.bf16 %v1001, %v1001
        %1008 = vrot.lane.b32.xlu0 %v802, 8
        %v1009 = vpop.permute.xlu0 %1008
        %1011 = vrot.lane.b32.xlu0 %v904, 16
        %v1012 = vpop.permute.xlu0 %1011
        %1014 = vrot.lane.b32.xlu0 %v1006, 24
        %v1015 = vpop.permute.xlu0 %1014
        %v1018 = vsel %vm601, %v700, %v1009
        %vm1019 = vcmask 130048
        %v1021 = vsel %vm1019, %v1018, %v1012
        %vm1022 = vcmask 195584
        %v1024 = vsel %vm1022, %v1021, %v1015
        %v1025 = vld [vmem:[%s5] sm:$0xf]
        %v1026 = vld [vmem:[%s5 + $0x4] sm:$0xf]
        %v1027 = vld [vmem:[%s5 + $0x8] sm:$0xf]
        %v1028 = vld [vmem:[%s5 + $0xc] sm:$0xf]
        %v1029 = vld [vmem:[%s6] sm:$0x1]
        %v1031 = vlaneseq
        %v1032 = vshrl.u32 %v1031, 7
        %v1033 = vsub.s32 0, %v1032
        %v1034 = vrot.slane %v1029, %v1033
        %v1040 = vunpack.c.l.b16 %v1025
        %v1041 = vunpack.c.l.b16 %v1026
        %v1042 = vunpack.c.l.b16 %v1027
        %v1043 = vunpack.c.l.b16 %v1028
        %v1044 = vpack.c.b16 %v1041, %v1040
        %v1045 = vpack.c.b16 %v1043, %v1042
        %v1048 = vsel %vm493, %v1024, 0
        %1050 = vmatprep.subr.bf16.mxu0 0
        %1051 = vmatpush1.bf16.msra.mxu0 0
        %1052 = vmatprep.subr.bf16.mxu0 0
        %1053 = vmatpush1.bf16.msra.mxu0 0
        %1054 = vmatprep.subr.bf16.mxu0 0
        %1055 = vmatpush1.bf16.msra.mxu0 0
        %1056 = vmatprep.subr.bf16.mxu0 0
        %1057 = vmatpush1.bf16.msra.mxu0 0
        %1058 = vmatprep.subr.bf16.mxu0 0
        %1059 = vmatpush1.bf16.msra.mxu0 0
        %1060 = vmatprep.subr.bf16.mxu0 0
        %1061 = vmatpush1.bf16.msra.mxu0 0
        %1062 = vmatprep.subr.bf16.mxu0 0
        %1063 = vmatpush1.bf16.msra.mxu0 %v1045
        %1064 = vmatprep.subr.bf16.mxu0 0
        %1065 = vmatpush1.bf16.msra.mxu0 %v1044
        %1066 = vmatprep.subr.bf16.mxu0 0
        %1067 = vmatpush2.bf16.msra.mxu0 0
        %1068 = vmatprep.subr.bf16.mxu0 0
        %1069 = vmatpush2.bf16.msra.mxu0 0
        %1070 = vmatprep.subr.bf16.mxu0 0
        %1071 = vmatpush2.bf16.msra.mxu0 0
        %1072 = vmatprep.subr.bf16.mxu0 0
        %1073 = vmatpush2.bf16.msra.mxu0 0
        %1074 = vmatprep.subr.bf16.mxu0 0
        %1075 = vmatpush2.bf16.msra.mxu0 0
        %1076 = vmatprep.subr.bf16.mxu0 0
        %1077 = vmatpush2.bf16.msra.mxu0 0
        %1078 = vmatprep.subr.bf16.mxu0 0
        %1079 = vmatpush2.bf16.msra.mxu0 0
        %1080 = vmatprep.subr.bf16.mxu0 0
        %1081 = vmatpush2.bf16.msra.mxu0 0
        %1082 = vmatprep.mubr.bf16.mxu0 0
        %1083 = vmatmul.mubr.bf16.gmra.mxu0 %v1048
        %v1084 = vpop.f32.mrf.mxu0
        %v1085 = vadd.f32 %v1034, %v1084
        %v1086 = vpop.f32.mrf.mxu0
        %v1087 = vpop.f32.mrf.mxu0
        %v1088 = vpop.f32.mrf.mxu0
        %1089 = vdwg.mxu0
        %v1090 = vadd.f32 %v490, %v1085
        %v1091 = vld [vmem:[#allocation2] sm:$0x1]
        %v1092 = vld [vmem:[#allocation5] sm:$0x1]
        %v1093 = vsel %vm493, %v1090, 0.0
        %1094 = vadd.xlane.f32.xlu0 %v1093
        %v1095 = vpop.xlane.xlu0 %1094
        %v1096 = vmul.f32 %v1095, %v497
        %v1097 = vsub.f32 %v1090, %v1096
        %v1098 = vmul.f32 %v1097, %v1097
        %v1099 = vsel %vm493, %v1098, 0.0
        %1100 = vadd.xlane.f32.xlu0 %v1099
        %v1101 = vpop.xlane.xlu0 %1100
        %v1102 = vmul.f32 %v1101, %v497
        %v1103 = vadd.f32 %v1102, 1e-05
        %v1104 = vrsqrt.pop %v1103
        %v1105 = vmul.f32 %v1097, %v1104
        %v1107 = vlaneseq
        %v1108 = vshrl.u32 %v1107, 7
        %v1109 = vsub.s32 0, %v1108
        %v1110 = vrot.slane %v1091, %v1109
        %v1112 = vmul.f32 %v1105, %v1110
        %v1114 = vlaneseq
        %v1115 = vshrl.u32 %v1114, 7
        %v1116 = vsub.s32 0, %v1115
        %v1117 = vrot.slane %v1092, %v1116
        %v1119 = vadd.f32 %v1112, %v1117
        %v1120 = vpack.c.bf16 %v1119, %v1119
        %v1121 = vld [vmem:[#allocation7] sm:$0xf]
        %v1122 = vld [vmem:[#allocation7 + $0x4] sm:$0xf]
        %v1123 = vld [vmem:[#allocation7 + $0x8] sm:$0xf]
        %v1124 = vld [vmem:[#allocation7 + $0xc] sm:$0xf]
        %v1125 = vld [vmem:[#allocation8] sm:$0x1]
        %v1127 = vlaneseq
        %v1128 = vshrl.u32 %v1127, 7
        %v1129 = vsub.s32 0, %v1128
        %v1130 = vrot.slane %v1125, %v1129
        %v1136 = vunpack.c.l.b16 %v1121
        %v1137 = vunpack.c.l.b16 %v1122
        %v1138 = vunpack.c.l.b16 %v1123
        %v1139 = vunpack.c.l.b16 %v1124
        %v1140 = vpack.c.b16 %v1137, %v1136
        %v1141 = vpack.c.b16 %v1139, %v1138
        %v1145 = vsel %vm493, %v1120, 0
        %1147 = vmatprep.subr.bf16.mxu0 0
        %1148 = vmatpush1.bf16.msra.mxu0 0
        %1149 = vmatprep.subr.bf16.mxu0 0
        %1150 = vmatpush1.bf16.msra.mxu0 0
        %1151 = vmatprep.subr.bf16.mxu0 0
        %1152 = vmatpush1.bf16.msra.mxu0 0
        %1153 = vmatprep.subr.bf16.mxu0 0
        %1154 = vmatpush1.bf16.msra.mxu0 0
        %1155 = vmatprep.subr.bf16.mxu0 0
        %1156 = vmatpush1.bf16.msra.mxu0 0
        %1157 = vmatprep.subr.bf16.mxu0 0
        %1158 = vmatpush1.bf16.msra.mxu0 0
        %1159 = vmatprep.subr.bf16.mxu0 0
        %1160 = vmatpush1.bf16.msra.mxu0 %v1141
        %1161 = vmatprep.subr.bf16.mxu0 0
        %1162 = vmatpush1.bf16.msra.mxu0 %v1140
        %1163 = vmatprep.subr.bf16.mxu0 0
        %1164 = vmatpush2.bf16.msra.mxu0 0
        %1165 = vmatprep.subr.bf16.mxu0 0
        %1166 = vmatpush2.bf16.msra.mxu0 0
        %1167 = vmatprep.subr.bf16.mxu0 0
        %1168 = vmatpush2.bf16.msra.mxu0 0
        %1169 = vmatprep.subr.bf16.mxu0 0
        %1170 = vmatpush2.bf16.msra.mxu0 0
        %1171 = vmatprep.subr.bf16.mxu0 0
        %1172 = vmatpush2.bf16.msra.mxu0 0
        %1173 = vmatprep.subr.bf16.mxu0 0
        %1174 = vmatpush2.bf16.msra.mxu0 0
        %1175 = vmatprep.subr.bf16.mxu0 0
        %1176 = vmatpush2.bf16.msra.mxu0 0
        %1177 = vmatprep.subr.bf16.mxu0 0
        %1178 = vmatpush2.bf16.msra.mxu0 0
        %1179 = vmatprep.mubr.bf16.mxu0 0
        %1180 = vmatmul.mubr.bf16.gmra.mxu0 %v1145
        %v1181 = vpop.f32.mrf.mxu0
        %v1182 = vadd.f32 %v1130, %v1181
        %v1183 = vpop.f32.mrf.mxu0
        %v1184 = vpop.f32.mrf.mxu0
        %v1185 = vpop.f32.mrf.mxu0
        %1186 = vdwg.mxu0
        %v1187 = vmax.f32 %v1182, 0.0
        %v1188 = vpack.c.bf16 %v1187, %v1187
        %v1189 = vld [vmem:[%s11] sm:$0xf]
        %v1190 = vld [vmem:[%s11 + $0x4] sm:$0xf]
        %v1191 = vld [vmem:[%s11 + $0x8] sm:$0xf]
        %v1192 = vld [vmem:[%s11 + $0xc] sm:$0xf]
        %v1193 = vld [vmem:[%s11 + $0x10] sm:$0xf]
        %v1194 = vld [vmem:[%s11 + $0x14] sm:$0xf]
        %v1195 = vld [vmem:[%s11 + $0x18] sm:$0xf]
        %v1196 = vld [vmem:[%s11 + $0x1c] sm:$0xf]
        %v1197 = vld [vmem:[%s12] sm:$0x1]
        %v1199 = vlaneseq
        %v1200 = vshrl.u32 %v1199, 7
        %v1201 = vsub.s32 0, %v1200
        %v1202 = vrot.slane %v1197, %v1201
        %v1212 = vunpack.c.l.b16 %v1189
        %v1213 = vunpack.c.l.b16 %v1190
        %v1214 = vunpack.c.l.b16 %v1191
        %v1215 = vunpack.c.l.b16 %v1192
        %v1216 = vunpack.c.l.b16 %v1193
        %v1217 = vunpack.c.l.b16 %v1194
        %v1218 = vunpack.c.l.b16 %v1195
        %v1219 = vunpack.c.l.b16 %v1196
        %v1220 = vpack.c.b16 %v1213, %v1212
        %v1221 = vpack.c.b16 %v1215, %v1214
        %v1222 = vpack.c.b16 %v1217, %v1216
        %v1223 = vpack.c.b16 %v1219, %v1218
        %vm1228 = vcmask 523264
        %v1230 = vsel %vm1228, %v1188, 0
        %1232 = vmatprep.subr.bf16.mxu0 0
        %1233 = vmatpush1.bf16.msra.mxu0 0
        %1234 = vmatprep.subr.bf16.mxu0 0
        %1235 = vmatpush1.bf16.msra.mxu0 0
        %1236 = vmatprep.subr.bf16.mxu0 0
        %1237 = vmatpush1.bf16.msra.mxu0 0
        %1238 = vmatprep.subr.bf16.mxu0 0
        %1239 = vmatpush1.bf16.msra.mxu0 0
        %1240 = vmatprep.subr.bf16.mxu0 0
        %1241 = vmatpush1.bf16.msra.mxu0 %v1223
        %1242 = vmatprep.subr.bf16.mxu0 0
        %1243 = vmatpush1.bf16.msra.mxu0 %v1222
        %1244 = vmatprep.subr.bf16.mxu0 0
        %1245 = vmatpush1.bf16.msra.mxu0 %v1221
        %1246 = vmatprep.subr.bf16.mxu0 0
        %1247 = vmatpush1.bf16.msra.mxu0 %v1220
        %1248 = vmatprep.subr.bf16.mxu0 0
        %1249 = vmatpush2.bf16.msra.mxu0 0
        %1250 = vmatprep.subr.bf16.mxu0 0
        %1251 = vmatpush2.bf16.msra.mxu0 0
        %1252 = vmatprep.subr.bf16.mxu0 0
        %1253 = vmatpush2.bf16.msra.mxu0 0
        %1254 = vmatprep.subr.bf16.mxu0 0
        %1255 = vmatpush2.bf16.msra.mxu0 0
        %1256 = vmatprep.subr.bf16.mxu0 0
        %1257 = vmatpush2.bf16.msra.mxu0 0
        %1258 = vmatprep.subr.bf16.mxu0 0
        %1259 = vmatpush2.bf16.msra.mxu0 0
        %1260 = vmatprep.subr.bf16.mxu0 0
        %1261 = vmatpush2.bf16.msra.mxu0 0
        %1262 = vmatprep.subr.bf16.mxu0 0
        %1263 = vmatpush2.bf16.msra.mxu0 0
        %1264 = vmatprep.mubr.bf16.mxu0 0
        %1265 = vmatmul.mubr.bf16.gmra.mxu0 %v1230
        %v1266 = vpop.f32.mrf.mxu0
        %v1267 = vadd.f32 %v1202, %v1266
        %v1268 = vpop.f32.mrf.mxu0
        %v1269 = vpop.f32.mrf.mxu0
        %v1270 = vpop.f32.mrf.mxu0
        %1271 = vdwg.mxu0
        %v1272 = vadd.f32 %v1090, %v1267
        %1273 = vst.msk [vmem:[%s484] sm:$0xff] %vm493, %v1272
        %s1274 = sand.u32 %s316, 1
        %s1275 = scalar_lea.sflag [#allocation4], %s1274
        %s1276 = sand.u32 %s316, 1
        %s1277 = smul.addr %s1276, 8
        %s1278 = scalar_lea.vmem [#allocation10], %s1277
        // Predicated region
        $region89: #{tpu_custom_call.1} parent=71 // pred_check
          %p1279 = pneg %p326
        $region90: #{tpu_custom_call.1} parent=71 // pred_check_branch
          %1281 = sbr.rel (%p1279) target = $region92
        $region91: #{tpu_custom_call.1} parent=71 // pred_region
          %s1283 = ssub.s32 128, 128
          %1284 = vsyncadd %s1275, %s1283
          %s1285 = smul.addr %s30, 128
          %s1286 = scalar_lea.hbm %s13, %s1285
          %s1288 = sshll.u32 %s1278, 4
          %s1289 = int_to_ptr.vmem [resolvable:$true] %s1288
          %1291 = dma.vmem_to_hbm [thread:$0]  %s1289, 128, %s1286, %s1275
        $region92: #{tpu_custom_call.1} parent=71 // pred_fallthru
          _
      $region72: #{tpu_custom_call.1} parent=5 // pred_fallthru
        _
      %p1292 = scmp.le.s32.totalorder 2, %s25
      // Predicated region
      $region93: #{tpu_custom_call.1} parent=5 // pred_check
        %p1293 = pneg %p1292
      $region94: #{tpu_custom_call.1} parent=5 // pred_check_branch
        %1295 = sbr.rel (%p1293) target = $region96
      $region95: #{tpu_custom_call.1} parent=5 // pred_region
        %s1296 = ssub.s32 %s25, 2
        // Predicated region
        $region97: #{tpu_custom_call.1} parent=95 // pred_check
          %p1297 = pneg %p332
        $region98: #{tpu_custom_call.1} parent=95 // pred_check_branch
          %1299 = sbr.rel (%p1297) target = $region100
        $region99: #{tpu_custom_call.1} parent=95 // pred_region
          %s1300 = sand.u32 %s317, 1
          %s1301 = scalar_lea.sflag [#allocation4], %s1300
          %s1302 = sand.u32 %s317, 1
          %s1303 = smul.addr %s1302, 8
          %s1304 = scalar_lea.vmem [#allocation10], %s1303
          %1305 = dma.done %s1301, 128
        $region100: #{tpu_custom_call.1} parent=95 // pred_fallthru
          _
      $region96: #{tpu_custom_call.1} parent=5 // pred_fallthru
        _
    $region6: #{tpu_custom_call.1} parent=1 // loop_footer
      %s29 = sadd.s32 1, %s25
    $region7: #{tpu_custom_call.1} parent=1 // loop_footer_branch
      %24 = sbr.rel target = $region3
    $region8: #{tpu_custom_call.1} parent=1 // loop_exit
      _
    %1306 = vsyncpa [#allocation3], 1
    %s1307 = scalar_lea.sflag [#allocation3], 1
    %1308 = vsyncpa %s1307, 1
    %1309 = vsyncpa [#allocation6], 1
    %1310 = vsyncpa [#allocation9], 1
    %1311 = vsyncpa [#allocation4], 1
    %s1312 = scalar_lea.sflag [#allocation4], 1
    %1313 = vsyncpa %s1312, 1

// kernel: tpu_custom_call.1
$region0: #{tpu_custom_call.1}
  #allocation0 [shape = 'u32[]', space=smem, size = 0x4, offset = 0x4, fixed_abs, tag = 'smem constant byte address 0x4 - core index']
  #allocation1 [shape = 'u32[144,128]{1,0:T(1,128)}', space=vmem, size = 0x12000, scoped, tag = 'internal scratch']
  %s0 = inlined_call_operand.vmem [shape: f32[2,8,32], index: 0, kind: input, shape index: {}]
  %s1 = inlined_call_operand.vmem [shape: f32[1,32], index: 1, kind: input, shape index: {}]
  %s2 = inlined_call_operand.vmem [shape: f32[1,32], index: 2, kind: input, shape index: {}]
  %s3 = inlined_call_operand.vmem [shape: bf16[32,96], index: 3, kind: input, shape index: {}]
  %s4 = inlined_call_operand.vmem [shape: f32[1,96], index: 4, kind: input, shape index: {}]
  %s5 = inlined_call_operand.vmem [shape: bf16[32,32], index: 5, kind: input, shape index: {}]
  %s6 = inlined_call_operand.vmem [shape: f32[1,32], index: 6, kind: input, shape index: {}]
  %s7 = inlined_call_operand.hbm [shape: f32[1,32], index: 7, kind: input, shape index: {}]
  %s8 = inlined_call_operand.hbm [shape: f32[1,32], index: 8, kind: input, shape index: {}]
  %s9 = inlined_call_operand.hbm [shape: bf16[32,64], index: 9, kind: input, shape index: {}]
  %s10 = inlined_call_operand.hbm [shape: f32[1,64], index: 10, kind: input, shape index: {}]
  %s11 = inlined_call_operand.vmem [shape: bf16[64,32], index: 11, kind: input, shape index: {}]
  %s12 = inlined_call_operand.vmem [shape: f32[1,32], index: 12, kind: input, shape index: {}]
  %s13 = inlined_call_operand.hbm [shape: f32[2,8,32], index: 13, kind: output, shape index: {}]
  %s14 = sld [smem:[#allocation0]]
  $region101: #{tpu_custom_call.1} parent=0
    _
  %s16 = ssub.s32 1, %s14
  %s17 = scalar_select 0, %s16, %s14
  $region1: #{tpu_custom_call.1} parent=0
    #allocation2 [shape = 'u8[512]{0}', space=vmem, size = 0x400, scoped, tag = 'input window, operand 7, single buffered']
    #allocation3 [shape = 's32[2]{0}', space=sflag, size = 0x8, scoped, tag = 'scoped memory for tpu_custom_call.1']
    #allocation4 [shape = 's32[2]{0}', space=sflag, size = 0x8, scoped, tag = 'scoped memory for tpu_custom_call.1']
    #allocation5 [shape = 'u8[512]{0}', space=vmem, size = 0x400, scoped, tag = 'input window, operand 8, single buffered']
    #allocation6 [shape = 's32[1]{0}', space=sflag, size = 0x4, scoped, tag = 'scoped memory for tpu_custom_call.1']
    #allocation7 [shape = 'u8[8192]{0}', space=vmem, size = 0x2000, scoped, tag = 'input window, operand 9, single buffered']
    #allocation8 [shape = 'u8[512]{0}', space=vmem, size = 0x400, scoped, tag = 'input window, operand 10, single buffered']
    #allocation9 [shape = 's32[1]{0}', space=sflag, size = 0x4, scoped, tag = 'scoped memory for tpu_custom_call.1']
    #allocation10 [shape = 'u8[8192]{0}', space=vmem, size = 0x2000, scoped, tag = 'output window, operand 0']
    %18 = vsyncpa [#allocation3], 0
    %19 = vsyncpa [#allocation6], 0
    %20 = vsyncpa [#allocation9], 0
    %21 = vsyncpa [#allocation4], 0
    %s22 = scalar_lea.sflag [#allocation4], 1
    %23 = vsyncpa %s22, 0
    loop: start=0, step=1, limit=4
    $region2: #{tpu_custom_call.1} parent=1 // loop_pre_header
      _
    $region3: #{tpu_custom_call.1} parent=1 // loop_header
      %s25 = sphi 0, %s29
      %p26 = scmp.ge.s32.totalorder %s25, 4
      %s35 = sphi 0, %s37
      %s38 = sphi 0, %s35
      %s39 = sphi 0, %s38
      %s55 = sphi 0, %s39
      %s59 = sphi 0, %s59
      %s61 = sphi 0, %s59
      %s62 = sphi 0, %s61
      %s76 = sphi 0, %s62
      %s80 = sphi 0, %s80
      %s82 = sphi 0, %s80
      %s83 = sphi 0, %s82
      %s97 = sphi 0, %s83
      %s101 = sphi 0, %s101
      %s103 = sphi 0, %s101
      %s104 = sphi 0, %s103
      %s118 = sphi 0, %s104
      %s122 = sphi 0, %s122
      %s124 = sphi 0, %s122
      %s125 = sphi 0, %s124
      %s139 = sphi 0, %s125
      %s143 = sphi 0, %s143
      %s145 = sphi 0, %s143
      %s146 = sphi 0, %s145
      %s160 = sphi 0, %s146
      %s164 = sphi 0, %s164
      %s166 = sphi 0, %s164
      %s167 = sphi 0, %s166
      %s181 = sphi 0, %s167
      %s185 = sphi 0, %s185
      %s187 = sphi 0, %s185
      %s188 = sphi 0, %s187
      %s202 = sphi 0, %s188
      %s206 = sphi 0, %s206
      %s208 = sphi 0, %s206
      %s209 = sphi 0, %s208
      %s223 = sphi 0, %s209
      %s227 = sphi 0, %s227
      %s229 = sphi 0, %s227
      %s230 = sphi 0, %s229
      %s244 = sphi 0, %s230
      %s248 = sphi 0, %s248
      %s250 = sphi 0, %s248
      %s251 = sphi 0, %s250
      %s265 = sphi 0, %s251
      %s269 = sphi 0, %s269
      %s271 = sphi 0, %s269
      %s272 = sphi 0, %s271
      %s286 = sphi 0, %s272
      %s290 = sphi 0, %s290
      %s292 = sphi 0, %s290
      %s293 = sphi 0, %s292
      %s307 = sphi 0, %s293
      %s313 = sphi 0, %s315
      %s316 = sphi 0, %s313
      %s317 = sphi 0, %s316
      %s333 = sphi 0, %s317
    $region4: #{tpu_custom_call.1} parent=1 // loop_header_branch
      %28 = sbr.rel (%p26) target = $region8
    $region5: #{tpu_custom_call.1} parent=1 // loop_body
      %s30 = ssub.s32 %s25, 1
      %s31 = ssub.s32 %s25, 2
      %s32 = sadd.s32 %s25, 1
      %s33 = ssub.s32 %s25, %s32
      %p34 = scmp.eq.s32.totalorder %s33, 0
      %s36 = sadd.s32 %s35, 1
      %s37 = scalar_select %p34, %s35, %s36
      %p40 = pneg %p34
      %p41 = scmp.eq.s32.totalorder %s25, 1
      %p42 = por %p40, %p41
      %p43 = scmp.ne.s32.totalorder %s35, %s38
      %p44 = scmp.eq.s32.totalorder %s25, 0
      %p45 = por %p43, %p44
      %p46 = scmp.ne.s32.totalorder %s35, %s38
      %p47 = scmp.eq.s32.totalorder %s30, 1
      %p48 = por %p46, %p47
      %p49 = scmp.ne.s32.totalorder %s38, %s39
      %p50 = scmp.eq.s32.totalorder %s30, 0
      %p51 = por %p49, %p50
      %p52 = scmp.ne.s32.totalorder %s38, %s39
      %p53 = scmp.eq.s32.totalorder %s31, 1
      %p54 = por %p52, %p53
      %p56 = scmp.ne.s32.totalorder %s39, %s55
      %p57 = scmp.eq.s32.totalorder %s31, 0
      %p58 = por %p56, %p57
      %s60 = sadd.s32 %s59, 1
      %p63 = scmp.eq.s32.totalorder %s25, 1
      %p64 = scmp.ne.s32.totalorder %s59, %s61
      %p65 = scmp.eq.s32.totalorder %s25, 0
      %p66 = por %p64, %p65
      %p67 = scmp.ne.s32.totalorder %s59, %s61
      %p68 = scmp.eq.s32.totalorder %s30, 1
      %p69 = por %p67, %p68
      %p70 = scmp.ne.s32.totalorder %s61, %s62
      %p71 = scmp.eq.s32.totalorder %s30, 0
      %p72 = por %p70, %p71
      %p73 = scmp.ne.s32.totalorder %s61, %s62
      %p74 = scmp.eq.s32.totalorder %s31, 1
      %p75 = por %p73, %p74
      %p77 = scmp.ne.s32.totalorder %s62, %s76
      %p78 = scmp.eq.s32.totalorder %s31, 0
      %p79 = por %p77, %p78
      %s81 = sadd.s32 %s80, 1
      %p84 = scmp.eq.s32.totalorder %s25, 1
      %p85 = scmp.ne.s32.totalorder %s80, %s82
      %p86 = scmp.eq.s32.totalorder %s25, 0
      %p87 = por %p85, %p86
      %p88 = scmp.ne.s32.totalorder %s80, %s82
      %p89 = scmp.eq.s32.totalorder %s30, 1
      %p90 = por %p88, %p89
      %p91 = scmp.ne.s32.totalorder %s82, %s83
      %p92 = scmp.eq.s32.totalorder %s30, 0
      %p93 = por %p91, %p92
      %p94 = scmp.ne.s32.totalorder %s82, %s83
      %p95 = scmp.eq.s32.totalorder %s31, 1
      %p96 = por %p94, %p95
      %p98 = scmp.ne.s32.totalorder %s83, %s97
      %p99 = scmp.eq.s32.totalorder %s31, 0
      %p100 = por %p98, %p99
      %s102 = sadd.s32 %s101, 1
      %p105 = scmp.eq.s32.totalorder %s25, 1
      %p106 = scmp.ne.s32.totalorder %s101, %s103
      %p107 = scmp.eq.s32.totalorder %s25, 0
      %p108 = por %p106, %p107
      %p109 = scmp.ne.s32.totalorder %s101, %s103
      %p110 = scmp.eq.s32.totalorder %s30, 1
      %p111 = por %p109, %p110
      %p112 = scmp.ne.s32.totalorder %s103, %s104
      %p113 = scmp.eq.s32.totalorder %s30, 0
      %p114 = por %p112, %p113
      %p115 = scmp.ne.s32.totalorder %s103, %s104
      %p116 = scmp.eq.s32.totalorder %s31, 1
      %p117 = por %p115, %p116
      %p119 = scmp.ne.s32.totalorder %s104, %s118
      %p120 = scmp.eq.s32.totalorder %s31, 0
      %p121 = por %p119, %p120
      %s123 = sadd.s32 %s122, 1
      %p126 = scmp.eq.s32.totalorder %s25, 1
      %p127 = scmp.ne.s32.totalorder %s122, %s124
      %p128 = scmp.eq.s32.totalorder %s25, 0
      %p129 = por %p127, %p128
      %p130 = scmp.ne.s32.totalorder %s122, %s124
      %p131 = scmp.eq.s32.totalorder %s30, 1
      %p132 = por %p130, %p131
      %p133 = scmp.ne.s32.totalorder %s124, %s125
      %p134 = scmp.eq.s32.totalorder %s30, 0
      %p135 = por %p133, %p134
      %p136 = scmp.ne.s32.totalorder %s124, %s125
      %p137 = scmp.eq.s32.totalorder %s31, 1
      %p138 = por %p136, %p137
      %p140 = scmp.ne.s32.totalorder %s125, %s139
      %p141 = scmp.eq.s32.totalorder %s31, 0
      %p142 = por %p140, %p141
      %s144 = sadd.s32 %s143, 1
      %p147 = scmp.eq.s32.totalorder %s25, 1
      %p148 = scmp.ne.s32.totalorder %s143, %s145
      %p149 = scmp.eq.s32.totalorder %s25, 0
      %p150 = por %p148, %p149
      %p151 = scmp.ne.s32.totalorder %s143, %s145
      %p152 = scmp.eq.s32.totalorder %s30, 1
      %p153 = por %p151, %p152
      %p154 = scmp.ne.s32.totalorder %s145, %s146
      %p155 = scmp.eq.s32.totalorder %s30, 0
      %p156 = por %p154, %p155
      %p157 = scmp.ne.s32.totalorder %s145, %s146
      %p158 = scmp.eq.s32.totalorder %s31, 1
      %p159 = por %p157, %p158
      %p161 = scmp.ne.s32.totalorder %s146, %s160
      %p162 = scmp.eq.s32.totalorder %s31, 0
      %p163 = por %p161, %p162
      %s165 = sadd.s32 %s164, 1
      %p168 = scmp.eq.s32.totalorder %s25, 1
      %p169 = scmp.ne.s32.totalorder %s164, %s166
      %p170 = scmp.eq.s32.totalorder %s25, 0
      %p171 = por %p169, %p170
      %p172 = scmp.ne.s32.totalorder %s164, %s166
      %p173 = scmp.eq.s32.totalorder %s30, 1
      %p174 = por %p172, %p173
      %p175 = scmp.ne.s32.totalorder %s166, %s167
      %p176 = scmp.eq.s32.totalorder %s30, 0
      %p177 = por %p175, %p176
      %p178 = scmp.ne.s32.totalorder %s166, %s167
      %p179 = scmp.eq.s32.totalorder %s31, 1
      %p180 = por %p178, %p179
      %p182 = scmp.ne.s32.totalorder %s167, %s181
      %p183 = scmp.eq.s32.totalorder %s31, 0
      %p184 = por %p182, %p183
      %s186 = sadd.s32 %s185, 1
      %p189 = scmp.eq.s32.totalorder %s25, 1
      %p190 = scmp.ne.s32.totalorder %s185, %s187
      %p191 = scmp.eq.s32.totalorder %s25, 0
      %p192 = por %p190, %p191
      %p193 = scmp.ne.s32.totalorder %s185, %s187
      %p194 = scmp.eq.s32.totalorder %s30, 1
      %p195 = por %p193, %p194
      %p196 = scmp.ne.s32.totalorder %s187, %s188
      %p197 = scmp.eq.s32.totalorder %s30, 0
      %p198 = por %p196, %p197
      %p199 = scmp.ne.s32.totalorder %s187, %s188
      %p200 = scmp.eq.s32.totalorder %s31, 1
      %p201 = por %p199, %p200
      %p203 = scmp.ne.s32.totalorder %s188, %s202
      %p204 = scmp.eq.s32.totalorder %s31, 0
      %p205 = por %p203, %p204
      %s207 = sadd.s32 %s206, 1
      %p210 = scmp.eq.s32.totalorder %s25, 1
      %p211 = scmp.ne.s32.totalorder %s206, %s208
      %p212 = scmp.eq.s32.totalorder %s25, 0
      %p213 = por %p211, %p212
      %p214 = scmp.ne.s32.totalorder %s206, %s208
      %p215 = scmp.eq.s32.totalorder %s30, 1
      %p216 = por %p214, %p215
      %p217 = scmp.ne.s32.totalorder %s208, %s209
      %p218 = scmp.eq.s32.totalorder %s30, 0
      %p219 = por %p217, %p218
      %p220 = scmp.ne.s32.totalorder %s208, %s209
      %p221 = scmp.eq.s32.totalorder %s31, 1
      %p222 = por %p220, %p221
      %p224 = scmp.ne.s32.totalorder %s209, %s223
      %p225 = scmp.eq.s32.totalorder %s31, 0
      %p226 = por %p224, %p225
      %s228 = sadd.s32 %s227, 1
      %p231 = scmp.eq.s32.totalorder %s25, 1
      %p232 = scmp.ne.s32.totalorder %s227, %s229
      %p233 = scmp.eq.s32.totalorder %s25, 0
      %p234 = por %p232, %p233
      %p235 = scmp.ne.s32.totalorder %s227, %s229
      %p236 = scmp.eq.s32.totalorder %s30, 1
      %p237 = por %p235, %p236
      %p238 = scmp.ne.s32.totalorder %s229, %s230
      %p239 = scmp.eq.s32.totalorder %s30, 0
      %p240 = por %p238, %p239
      %p241 = scmp.ne.s32.totalorder %s229, %s230
      %p242 = scmp.eq.s32.totalorder %s31, 1
      %p243 = por %p241, %p242
      %p245 = scmp.ne.s32.totalorder %s230, %s244
      %p246 = scmp.eq.s32.totalorder %s31, 0
      %p247 = por %p245, %p246
      %s249 = sadd.s32 %s248, 1
      %p252 = scmp.eq.s32.totalorder %s25, 1
      %p253 = scmp.ne.s32.totalorder %s248, %s250
      %p254 = scmp.eq.s32.totalorder %s25, 0
      %p255 = por %p253, %p254
      %p256 = scmp.ne.s32.totalorder %s248, %s250
      %p257 = scmp.eq.s32.totalorder %s30, 1
      %p258 = por %p256, %p257
      %p259 = scmp.ne.s32.totalorder %s250, %s251
      %p260 = scmp.eq.s32.totalorder %s30, 0
      %p261 = por %p259, %p260
      %p262 = scmp.ne.s32.totalorder %s250, %s251
      %p263 = scmp.eq.s32.totalorder %s31, 1
      %p264 = por %p262, %p263
      %p266 = scmp.ne.s32.totalorder %s251, %s265
      %p267 = scmp.eq.s32.totalorder %s31, 0
      %p268 = por %p266, %p267
      %s270 = sadd.s32 %s269, 1
      %p273 = scmp.eq.s32.totalorder %s25, 1
      %p274 = scmp.ne.s32.totalorder %s269, %s271
      %p275 = scmp.eq.s32.totalorder %s25, 0
      %p276 = por %p274, %p275
      %p277 = scmp.ne.s32.totalorder %s269, %s271
      %p278 = scmp.eq.s32.totalorder %s30, 1
      %p279 = por %p277, %p278
      %p280 = scmp.ne.s32.totalorder %s271, %s272
      %p281 = scmp.eq.s32.totalorder %s30, 0
      %p282 = por %p280, %p281
      %p283 = scmp.ne.s32.totalorder %s271, %s272
      %p284 = scmp.eq.s32.totalorder %s31, 1
      %p285 = por %p283, %p284
      %p287 = scmp.ne.s32.totalorder %s272, %s286
      %p288 = scmp.eq.s32.totalorder %s31, 0
      %p289 = por %p287, %p288
      %s291 = sadd.s32 %s290, 1
      %p294 = scmp.eq.s32.totalorder %s25, 1
      %p295 = scmp.ne.s32.totalorder %s290, %s292
      %p296 = scmp.eq.s32.totalorder %s25, 0
      %p297 = por %p295, %p296
      %p298 = scmp.ne.s32.totalorder %s290, %s292
      %p299 = scmp.eq.s32.totalorder %s30, 1
      %p300 = por %p298, %p299
      %p301 = scmp.ne.s32.totalorder %s292, %s293
      %p302 = scmp.eq.s32.totalorder %s30, 0
      %p303 = por %p301, %p302
      %p304 = scmp.ne.s32.totalorder %s292, %s293
      %p305 = scmp.eq.s32.totalorder %s31, 1
      %p306 = por %p304, %p305
      %p308 = scmp.ne.s32.totalorder %s293, %s307
      %p309 = scmp.eq.s32.totalorder %s31, 0
      %p310 = por %p308, %p309
      %s311 = ssub.s32 %s25, %s32
      %p312 = scmp.eq.s32.totalorder %s311, 0
      %s314 = sadd.s32 %s313, 1
      %s315 = scalar_select %p312, %s313, %s314
      %p318 = pneg %p312
      %p319 = scmp.eq.s32.totalorder %s25, 1
      %p320 = por %p318, %p319
      %p321 = scmp.ne.s32.totalorder %s313, %s316
      %p322 = scmp.eq.s32.totalorder %s25, 0
      %p323 = por %p321, %p322
      %p324 = scmp.ne.s32.totalorder %s313, %s316
      %p325 = scmp.eq.s32.totalorder %s30, 1
      %p326 = por %p324, %p325
      %p327 = scmp.ne.s32.totalorder %s316, %s317
      %p328 = scmp.eq.s32.totalorder %s30, 0
      %p329 = por %p327, %p328
      %p330 = scmp.ne.s32.totalorder %s316, %s317
      %p331 = scmp.eq.s32.totalorder %s31, 1
      %p332 = por %p330, %p331
      %p334 = scmp.ne.s32.totalorder %s317, %s333
      %p335 = scmp.eq.s32.totalorder %s31, 0
      %p336 = por %p334, %p335
      %p337 = scmp.le.s32.totalorder 1, %s25
      %p338 = scmp.lt.s32.totalorder %s25, 3
      %p339 = pnand %p337, %p338
      %p340 = pneg %p339
      // Predicated region
      $region9: #{tpu_custom_call.1} parent=5 // pred_check
        _
      $region10: #{tpu_custom_call.1} parent=5 // pred_check_branch
        %342 = sbr.rel (%p339) target = $region12
      $region11: #{tpu_custom_call.1} parent=5 // pred_region
        %s343 = ssub.s32 %s25, 1
        // Predicated region
        $region13: #{tpu_custom_call.1} parent=11 // pred_check
          %p344 = pneg %p72
        $region14: #{tpu_custom_call.1} parent=11 // pred_check_branch
          %346 = sbr.rel (%p344) target = $region16
        $region15: #{tpu_custom_call.1} parent=11 // pred_region
          _
        $region16: #{tpu_custom_call.1} parent=11 // pred_fallthru
          _
        // Predicated region
        $region17: #{tpu_custom_call.1} parent=11 // pred_check
          %p347 = pneg %p93
        $region18: #{tpu_custom_call.1} parent=11 // pred_check_branch
          %349 = sbr.rel (%p347) target = $region20
        $region19: #{tpu_custom_call.1} parent=11 // pred_region
          _
        $region20: #{tpu_custom_call.1} parent=11 // pred_fallthru
          _
        // Predicated region
        $region21: #{tpu_custom_call.1} parent=11 // pred_check
          %p350 = pneg %p114
        $region22: #{tpu_custom_call.1} parent=11 // pred_check_branch
          %352 = sbr.rel (%p350) target = $region24
        $region23: #{tpu_custom_call.1} parent=11 // pred_region
          _
        $region24: #{tpu_custom_call.1} parent=11 // pred_fallthru
          _
        // Predicated region
        $region25: #{tpu_custom_call.1} parent=11 // pred_check
          %p353 = pneg %p135
        $region26: #{tpu_custom_call.1} parent=11 // pred_check_branch
          %355 = sbr.rel (%p353) target = $region28
        $region27: #{tpu_custom_call.1} parent=11 // pred_region
          _
        $region28: #{tpu_custom_call.1} parent=11 // pred_fallthru
          _
        // Predicated region
        $region29: #{tpu_custom_call.1} parent=11 // pred_check
          %p356 = pneg %p156
        $region30: #{tpu_custom_call.1} parent=11 // pred_check_branch
          %358 = sbr.rel (%p356) target = $region32
        $region31: #{tpu_custom_call.1} parent=11 // pred_region
          _
        $region32: #{tpu_custom_call.1} parent=11 // pred_fallthru
          _
        // Predicated region
        $region33: #{tpu_custom_call.1} parent=11 // pred_check
          %p359 = pneg %p177
        $region34: #{tpu_custom_call.1} parent=11 // pred_check_branch
          %361 = sbr.rel (%p359) target = $region36
        $region35: #{tpu_custom_call.1} parent=11 // pred_region
          _
        $region36: #{tpu_custom_call.1} parent=11 // pred_fallthru
          _
        // Predicated region
        $region37: #{tpu_custom_call.1} parent=11 // pred_check
          %p362 = pneg %p198
        $region38: #{tpu_custom_call.1} parent=11 // pred_check_branch
          %364 = sbr.rel (%p362) target = $region40
        $region39: #{tpu_custom_call.1} parent=11 // pred_region
          %s366 = ssub.s32 16, 16
          %367 = vsyncadd [#allocation3], %s366
          %s369 = sshll.u32 [#allocation2], 4
          %s370 = int_to_ptr.vmem [resolvable:$true] %s369
          %372 = dma.hbm_to_vmem [thread:$0]  %s7, 16, %s370, [#allocation3]
        $region40: #{tpu_custom_call.1} parent=11 // pred_fallthru
          _
        // Predicated region
        $region41: #{tpu_custom_call.1} parent=11 // pred_check
          %p373 = pneg %p219
        $region42: #{tpu_custom_call.1} parent=11 // pred_check_branch
          %375 = sbr.rel (%p373) target = $region44
        $region43: #{tpu_custom_call.1} parent=11 // pred_region
          %s377 = ssub.s32 16, 16
          %378 = vsyncadd [#allocation6], %s377
          %s380 = sshll.u32 [#allocation5], 4
          %s381 = int_to_ptr.vmem [resolvable:$true] %s380
          %383 = dma.hbm_to_vmem [thread:$0]  %s8, 16, %s381, [#allocation6]
        $region44: #{tpu_custom_call.1} parent=11 // pred_fallthru
          _
        // Predicated region
        $region45: #{tpu_custom_call.1} parent=11 // pred_check
          %p384 = pneg %p240
        $region46: #{tpu_custom_call.1} parent=11 // pred_check_branch
          %386 = sbr.rel (%p384) target = $region48
        $region47: #{tpu_custom_call.1} parent=11 // pred_region
          %s388 = ssub.s32 256, 256
          %389 = vsyncadd [#allocation6], %s388
          %s390 = sshll.u32 [#allocation7], 4
          %s391 = int_to_ptr.vmem [resolvable:$true] %s390
          %396 = dma.hbm_to_vmem [thread:$0]  %s9, 256, %s391, [#allocation6], 64, 64, 4
        $region48: #{tpu_custom_call.1} parent=11 // pred_fallthru
          _
        // Predicated region
        $region49: #{tpu_custom_call.1} parent=11 // pred_check
          %p397 = pneg %p261
        $region50: #{tpu_custom_call.1} parent=11 // pred_check_branch
          %399 = sbr.rel (%p397) target = $region52
        $region51: #{tpu_custom_call.1} parent=11 // pred_region
          %s401 = ssub.s32 16, 16
          %402 = vsyncadd [#allocation9], %s401
          %s404 = sshll.u32 [#allocation8], 4
          %s405 = int_to_ptr.vmem [resolvable:$true] %s404
          %407 = dma.hbm_to_vmem [thread:$0]  %s10, 16, %s405, [#allocation9]
        $region52: #{tpu_custom_call.1} parent=11 // pred_fallthru
          _
        // Predicated region
        $region53: #{tpu_custom_call.1} parent=11 // pred_check
          %p408 = pneg %p282
        $region54: #{tpu_custom_call.1} parent=11 // pred_check_branch
          %410 = sbr.rel (%p408) target = $region56
        $region55: #{tpu_custom_call.1} parent=11 // pred_region
          _
        $region56: #{tpu_custom_call.1} parent=11 // pred_fallthru
          _
        // Predicated region
        $region57: #{tpu_custom_call.1} parent=11 // pred_check
          %p411 = pneg %p303
        $region58: #{tpu_custom_call.1} parent=11 // pred_check_branch
          %413 = sbr.rel (%p411) target = $region60
        $region59: #{tpu_custom_call.1} parent=11 // pred_region
          _
        $region60: #{tpu_custom_call.1} parent=11 // pred_fallthru
          _
      $region12: #{tpu_custom_call.1} parent=5 // pred_fallthru
        _
      %p414 = scmp.lt.s32.totalorder %s25, 2
      // Predicated region
      $region61: #{tpu_custom_call.1} parent=5 // pred_check
        %p415 = pneg %p414
      $region62: #{tpu_custom_call.1} parent=5 // pred_check_branch
        %417 = sbr.rel (%p415) target = $region64
      $region63: #{tpu_custom_call.1} parent=5 // pred_region
        // Predicated region
        $region65: #{tpu_custom_call.1} parent=63 // pred_check
          %p418 = pneg %p45
        $region66: #{tpu_custom_call.1} parent=63 // pred_check_branch
          %420 = sbr.rel (%p418) target = $region68
        $region67: #{tpu_custom_call.1} parent=63 // pred_region
          %p421 = scmp.lt.s32.totalorder %s25, 1
          %s422 = scalar_select %p421, %s25, 1
          %s423 = smul.addr %s422, 8
          %s424 = scalar_lea.vmem %s0, %s423
        $region68: #{tpu_custom_call.1} parent=63 // pred_fallthru
          _
      $region64: #{tpu_custom_call.1} parent=5 // pred_fallthru
        _
      %p425 = scmp.le.s32.totalorder 1, %s25
      %p426 = scmp.lt.s32.totalorder %s25, 3
      %p427 = pnand %p425, %p426
      %p428 = pneg %p427
      // Predicated region
      $region69: #{tpu_custom_call.1} parent=5 // pred_check
        _
      $region70: #{tpu_custom_call.1} parent=5 // pred_check_branch
        %430 = sbr.rel (%p427) target = $region72
      $region71: #{tpu_custom_call.1} parent=5 // pred_region
        %s431 = ssub.s32 %s25, 1
        // Predicated region
        $region73: #{tpu_custom_call.1} parent=71 // pred_check
          %p432 = pneg %p198
        $region74: #{tpu_custom_call.1} parent=71 // pred_check_branch
          %434 = sbr.rel (%p432) target = $region76
        $region75: #{tpu_custom_call.1} parent=71 // pred_region
          %435 = dma.done [#allocation3], 16
        $region76: #{tpu_custom_call.1} parent=71 // pred_fallthru
          _
        // Predicated region
        $region77: #{tpu_custom_call.1} parent=71 // pred_check
          %p436 = pneg %p219
        $region78: #{tpu_custom_call.1} parent=71 // pred_check_branch
          %438 = sbr.rel (%p436) target = $region80
        $region79: #{tpu_custom_call.1} parent=71 // pred_region
          %439 = dma.done [#allocation6], 16
        $region80: #{tpu_custom_call.1} parent=71 // pred_fallthru
          _
        // Predicated region
        $region81: #{tpu_custom_call.1} parent=71 // pred_check
          %p440 = pneg %p240
        $region82: #{tpu_custom_call.1} parent=71 // pred_check_branch
          %442 = sbr.rel (%p440) target = $region84
        $region83: #{tpu_custom_call.1} parent=71 // pred_region
          %443 = dma.done [#allocation6], 256
        $region84: #{tpu_custom_call.1} parent=71 // pred_fallthru
          _
        // Predicated region
        $region85: #{tpu_custom_call.1} parent=71 // pred_check
          %p444 = pneg %p261
        $region86: #{tpu_custom_call.1} parent=71 // pred_check_branch
          %446 = sbr.rel (%p444) target = $region88
        $region87: #{tpu_custom_call.1} parent=71 // pred_region
          %447 = dma.done [#allocation9], 16
        $region88: #{tpu_custom_call.1} parent=71 // pred_fallthru
          _
        %p448 = scmp.lt.s32.totalorder %s30, 1
        %s449 = scalar_select %p448, %s30, 1
        %s450 = smul.addr %s449, 8
        %s451 = scalar_lea.vmem %s0, %s450
        %p452 = pneg %p51
        %p453 = pneg %p48
        %p454 = pneg %p72
        %p455 = pneg %p69
        %p456 = pneg %p93
        %p457 = pneg %p90
        %p458 = pneg %p114
        %p459 = pneg %p111
        %p460 = pneg %p135
        %p461 = pneg %p132
        %p462 = pneg %p156
        %p463 = pneg %p153
        %p464 = pneg %p177
        %p465 = pneg %p174
        %p466 = pneg %p198
        %p467 = pneg %p195
        %p468 = pneg %p219
        %p469 = pneg %p216
        %p470 = pneg %p240
        %p471 = pneg %p237
        %p472 = pneg %p261
        %p473 = pneg %p258
        %p474 = pneg %p282
        %p475 = pneg %p279
        %p476 = pneg %p303
        %p477 = pneg %p300
        %p478 = pneg %p329
        %p479 = pneg %p326
        %s480 = sand.u32 %s316, 1
        %s481 = scalar_lea.sflag [#allocation4], %s480
        %s482 = sand.u32 %s316, 1
        %s483 = smul.addr %s482, 8
        %s484 = scalar_lea.vmem [#allocation10], %s483
        %p485 = scmp.lt.s32.totalorder %s30, 1
        %s486 = scalar_select %p485, %s30, 1
        %s487 = smul.addr %s486, 8
        %s488 = scalar_lea.vmem %s0, %s487
        %v490 = vld [vmem:[%s488] sm:$0xff]
        %v491 = vld [vmem:[%s1] sm:$0x1]
        %v492 = vld [vmem:[%s2] sm:$0x1]
        %vm493 = vcmask 261120
        %v494 = vsel %vm493, %v490, 0.0
        %495 = vadd.xlane.f32.xlu0 %v494
        %v496 = vpop.xlane.xlu0 %495
        %v497 = vrcp.pop 32.0
        %v498 = vmul.f32 %v496, %v497
        %v499 = vsub.f32 %v490, %v498
        %v500 = vmul.f32 %v499, %v499
        %v501 = vsel %vm493, %v500, 0.0
        %502 = vadd.xlane.f32.xlu0 %v501
        %v503 = vpop.xlane.xlu0 %502
        %v504 = vmul.f32 %v503, %v497
        %v505 = vadd.f32 %v504, 1e-05
        %v506 = vrsqrt.pop %v505
        %v507 = vmul.f32 %v499, %v506
        %v509 = vlaneseq
        %v510 = vshrl.u32 %v509, 7
        %v511 = vsub.s32 0, %v510
        %v512 = vrot.slane %v491, %v511
        %v514 = vmul.f32 %v507, %v512
        %v516 = vlaneseq
        %v517 = vshrl.u32 %v516, 7
        %v518 = vsub.s32 0, %v517
        %v519 = vrot.slane %v492, %v518
        %v521 = vadd.f32 %v514, %v519
        %v522 = vpack.c.bf16 %v521, %v521
        %v523 = vld [vmem:[%s3] sm:$0xf]
        %v524 = vld [vmem:[%s3 + $0x4] sm:$0xf]
        %v525 = vld [vmem:[%s3 + $0x8] sm:$0xf]
        %v526 = vld [vmem:[%s3 + $0xc] sm:$0xf]
        %v527 = vld [vmem:[%s4] sm:$0x1]
        %v529 = vlaneseq
        %v530 = vshrl.u32 %v529, 7
        %v531 = vsub.s32 0, %v530
        %v532 = vrot.slane %v527, %v531
        %v538 = vunpack.c.l.b16 %v523
        %v539 = vunpack.c.l.b16 %v524
        %v540 = vunpack.c.l.b16 %v525
        %v541 = vunpack.c.l.b16 %v526
        %v542 = vpack.c.b16 %v539, %v538
        %v543 = vpack.c.b16 %v541, %v540
        %v547 = vsel %vm493, %v522, 0
        %549 = vmatprep.subr.bf16.mxu0 0
        %550 = vmatpush1.bf16.msra.mxu0 0
        %551 = vmatprep.subr.bf16.mxu0 0
        %552 = vmatpush1.bf16.msra.mxu0 0
        %553 = vmatprep.subr.bf16.mxu0 0
        %554 = vmatpush1.bf16.msra.mxu0 0
        %555 = vmatprep.subr.bf16.mxu0 0
        %556 = vmatpush1.bf16.msra.mxu0 0
        %557 = vmatprep.subr.bf16.mxu0 0
        %558 = vmatpush1.bf16.msra.mxu0 0
        %559 = vmatprep.subr.bf16.mxu0 0
        %560 = vmatpush1.bf16.msra.mxu0 0
        %561 = vmatprep.subr.bf16.mxu0 0
        %562 = vmatpush1.bf16.msra.mxu0 %v543
        %563 = vmatprep.subr.bf16.mxu0 0
        %564 = vmatpush1.bf16.msra.mxu0 %v542
        %565 = vmatprep.subr.bf16.mxu0 0
        %566 = vmatpush2.bf16.msra.mxu0 0
        %567 = vmatprep.subr.bf16.mxu0 0
        %568 = vmatpush2.bf16.msra.mxu0 0
        %569 = vmatprep.subr.bf16.mxu0 0
        %570 = vmatpush2.bf16.msra.mxu0 0
        %571 = vmatprep.subr.bf16.mxu0 0
        %572 = vmatpush2.bf16.msra.mxu0 0
        %573 = vmatprep.subr.bf16.mxu0 0
        %574 = vmatpush2.bf16.msra.mxu0 0
        %575 = vmatprep.subr.bf16.mxu0 0
        %576 = vmatpush2.bf16.msra.mxu0 0
        %577 = vmatprep.subr.bf16.mxu0 0
        %578 = vmatpush2.bf16.msra.mxu0 0
        %579 = vmatprep.subr.bf16.mxu0 0
        %580 = vmatpush2.bf16.msra.mxu0 0
        %581 = vmatprep.mubr.bf16.mxu0 0
        %582 = vmatmul.mubr.bf16.gmra.mxu0 %v547
        %v583 = vpop.f32.mrf.mxu0
        %v584 = vadd.f32 %v532, %v583
        %v585 = vpop.f32.mrf.mxu0
        %v586 = vpop.f32.mrf.mxu0
        %v587 = vpop.f32.mrf.mxu0
        %588 = vdwg.mxu0
        %v589 = vmax.f32 %v584, 0.0
        %v590 = vpack.c.bf16 %v589, %v589
        %v591 = vlaneseq
        %v592 = vshrl.u32 %v591, 7
        %v593 = vlaneseq
        %v594 = vand.u32 %v593, 127
        %vm595 = vcmp.le.s32.totalorder %v594, %v592
        %v596 = vsel %vm595, 1, 0
        %v597 = vcvt.s32.f32 %v596
        %599 = vrot.lane.b32.xlu0 %v590, 96
        %v600 = vpop.permute.xlu0 %599
        %vm601 = vcmask 64512
        %v603 = vsel %vm601, %v590, 0
        %v606 = vsel %vm601, %v600, 0
        %608 = vmatprep.subr.bf16.mxu0 0
        %609 = vmatpush1.bf16.xpose.msra.mxu0 0
        %610 = vmatprep.subr.bf16.mxu0 0
        %611 = vmatpush1.bf16.xpose.msra.mxu0 0
        %612 = vmatprep.subr.bf16.mxu0 0
        %613 = vmatpush1.bf16.xpose.msra.mxu0 0
        %614 = vmatprep.subr.bf16.mxu0 0
        %615 = vmatpush1.bf16.xpose.msra.mxu0 0
        %616 = vmatprep.subr.bf16.mxu0 0
        %617 = vmatpush1.bf16.xpose.msra.mxu0 0
        %618 = vmatprep.subr.bf16.mxu0 0
        %619 = vmatpush1.bf16.xpose.msra.mxu0 0
        %620 = vmatprep.subr.bf16.mxu0 0
        %621 = vmatpush1.bf16.xpose.msra.mxu0 0
        %622 = vmatprep.subr.bf16.mxu0 0
        %623 = vmatpush1.bf16.xpose.msra.mxu0 %v606
        %624 = vmatprep.subr.bf16.mxu0 0
        %625 = vmatpush2.bf16.xpose.msra.mxu0 0
        %626 = vmatprep.subr.bf16.mxu0 0
        %627 = vmatpush2.bf16.xpose.msra.mxu0 0
        %628 = vmatprep.subr.bf16.mxu0 0
        %629 = vmatpush2.bf16.xpose.msra.mxu0 0
        %630 = vmatprep.subr.bf16.mxu0 0
        %631 = vmatpush2.bf16.xpose.msra.mxu0 0
        %632 = vmatprep.subr.bf16.mxu0 0
        %633 = vmatpush2.bf16.xpose.msra.mxu0 0
        %634 = vmatprep.subr.bf16.mxu0 0
        %635 = vmatpush2.bf16.xpose.msra.mxu0 0
        %636 = vmatprep.subr.bf16.mxu0 0
        %637 = vmatpush2.bf16.xpose.msra.mxu0 0
        %638 = vmatprep.subr.bf16.mxu0 0
        %639 = vmatpush2.bf16.xpose.msra.mxu0 0
        %640 = vmatprep.mubr.bf16.mxu0 0
        %641 = vmatmul.mubr.bf16.gmra.mxu0 %v603
        %v642 = vpop.f32.mrf.mxu0
        %v643 = vadd.f32 0.0, %v642
        %v644 = vpop.f32.mrf.mxu0
        %v645 = vpop.f32.mrf.mxu0
        %v646 = vpop.f32.mrf.mxu0
        %647 = vdwg.mxu0
        %v648 = vmax.f32 %v643, 0.0
        %v649 = vmul.f32 %v648, %v597
        %v650 = vpack.c.bf16 %v649, %v649
        %651 = vrot.lane.b32.xlu0 %v590, 64
        %v652 = vpop.permute.xlu0 %651
        %v654 = vsel %vm601, %v650, 0
        %vm656 = vcmask 1043456
        %v658 = vsel %vm656, %v652, 0
        %660 = vmatprep.subr.bf16.mxu0 0
        %661 = vmatpush1.bf16.msra.mxu0 0
        %662 = vmatprep.subr.bf16.mxu0 0
        %663 = vmatpush1.bf16.msra.mxu0 0
        %664 = vmatprep.subr.bf16.mxu0 0
        %665 = vmatpush1.bf16.msra.mxu0 0
        %666 = vmatprep.subr.bf16.mxu0 0
        %667 = vmatpush1.bf16.msra.mxu0 0
        %668 = vmatprep.subr.bf16.mxu0 0
        %669 = vmatpush1.bf16.msra.mxu0 0
        %670 = vmatprep.subr.bf16.mxu0 0
        %671 = vmatpush1.bf16.msra.mxu0 0
        %672 = vmatprep.subr.bf16.mxu0 0
        %673 = vmatpush1.bf16.msra.mxu0 0
        %674 = vmatprep.subr.bf16.mxu0 0
        %675 = vmatpush1.bf16.msra.mxu0 %v658
        %676 = vmatprep.subr.bf16.mxu0 0
        %677 = vmatpush2.bf16.msra.mxu0 0
        %678 = vmatprep.subr.bf16.mxu0 0
        %679 = vmatpush2.bf16.msra.mxu0 0
        %680 = vmatprep.subr.bf16.mxu0 0
        %681 = vmatpush2.bf16.msra.mxu0 0
        %682 = vmatprep.subr.bf16.mxu0 0
        %683 = vmatpush2.bf16.msra.mxu0 0
        %684 = vmatprep.subr.bf16.mxu0 0
        %685 = vmatpush2.bf16.msra.mxu0 0
        %686 = vmatprep.subr.bf16.mxu0 0
        %687 = vmatpush2.bf16.msra.mxu0 0
        %688 = vmatprep.subr.bf16.mxu0 0
        %689 = vmatpush2.bf16.msra.mxu0 0
        %690 = vmatprep.subr.bf16.mxu0 0
        %691 = vmatpush2.bf16.msra.mxu0 0
        %692 = vmatprep.mubr.bf16.mxu0 0
        %693 = vmatmul.mubr.bf16.gmra.mxu0 %v654
        %v694 = vpop.f32.mrf.mxu0
        %v695 = vadd.f32 0.0, %v694
        %v696 = vpop.f32.mrf.mxu0
        %v697 = vpop.f32.mrf.mxu0
        %v698 = vpop.f32.mrf.mxu0
        %699 = vdwg.mxu0
        %v700 = vpack.c.bf16 %v695, %v695
        %701 = vrot.lane.b32.xlu0 %v590, 120
        %v702 = vpop.permute.xlu0 %701
        %703 = vrot.lane.b32.xlu0 %v590, 88
        %v704 = vpop.permute.xlu0 %703
        %v706 = vsel %vm601, %v702, 0
        %v709 = vsel %vm601, %v704, 0
        %711 = vmatprep.subr.bf16.mxu0 0
        %712 = vmatpush1.bf16.xpose.msra.mxu0 0
        %713 = vmatprep.subr.bf16.mxu0 0
        %714 = vmatpush1.bf16.xpose.msra.mxu0 0
        %715 = vmatprep.subr.bf16.mxu0 0
        %716 = vmatpush1.bf16.xpose.msra.mxu0 0
        %717 = vmatprep.subr.bf16.mxu0 0
        %718 = vmatpush1.bf16.xpose.msra.mxu0 0
        %719 = vmatprep.subr.bf16.mxu0 0
        %720 = vmatpush1.bf16.xpose.msra.mxu0 0
        %721 = vmatprep.subr.bf16.mxu0 0
        %722 = vmatpush1.bf16.xpose.msra.mxu0 0
        %723 = vmatprep.subr.bf16.mxu0 0
        %724 = vmatpush1.bf16.xpose.msra.mxu0 0
        %725 = vmatprep.subr.bf16.mxu0 0
        %726 = vmatpush1.bf16.xpose.msra.mxu0 %v709
        %727 = vmatprep.subr.bf16.mxu0 0
        %728 = vmatpush2.bf16.xpose.msra.mxu0 0
        %729 = vmatprep.subr.bf16.mxu0 0
        %730 = vmatpush2.bf16.xpose.msra.mxu0 0
        %731 = vmatprep.subr.bf16.mxu0 0
        %732 = vmatpush2.bf16.xpose.msra.mxu0 0
        %733 = vmatprep.subr.bf16.mxu0 0
        %734 = vmatpush2.bf16.xpose.msra.mxu0 0
        %735 = vmatprep.subr.bf16.mxu0 0
        %736 = vmatpush2.bf16.xpose.msra.mxu0 0
        %737 = vmatprep.subr.bf16.mxu0 0
        %738 = vmatpush2.bf16.xpose.msra.mxu0 0
        %739 = vmatprep.subr.bf16.mxu0 0
        %740 = vmatpush2.bf16.xpose.msra.mxu0 0
        %741 = vmatprep.subr.bf16.mxu0 0
        %742 = vmatpush2.bf16.xpose.msra.mxu0 0
        %743 = vmatprep.mubr.bf16.mxu0 0
        %744 = vmatmul.mubr.bf16.gmra.mxu0 %v706
        %v745 = vpop.f32.mrf.mxu0
        %v746 = vadd.f32 0.0, %v745
        %v747 = vpop.f32.mrf.mxu0
        %v748 = vpop.f32.mrf.mxu0
        %v749 = vpop.f32.mrf.mxu0
        %750 = vdwg.mxu0
        %v751 = vmax.f32 %v746, 0.0
        %v752 = vmul.f32 %v751, %v597
        %v753 = vpack.c.bf16 %v752, %v752
        %754 = vrot.lane.b32.xlu0 %v590, 56
        %v755 = vpop.permute.xlu0 %754
        %v757 = vsel %vm601, %v753, 0
        %v760 = vsel %vm656, %v755, 0
        %762 = vmatprep.subr.bf16.mxu0 0
        %763 = vmatpush1.bf16.msra.mxu0 0
        %764 = vmatprep.subr.bf16.mxu0 0
        %765 = vmatpush1.bf16.msra.mxu0 0
        %766 = vmatprep.subr.bf16.mxu0 0
        %767 = vmatpush1.bf16.msra.mxu0 0
        %768 = vmatprep.subr.bf16.mxu0 0
        %769 = vmatpush1.bf16.msra.mxu0 0
        %770 = vmatprep.subr.bf16.mxu0 0
        %771 = vmatpush1.bf16.msra.mxu0 0
        %772 = vmatprep.subr.bf16.mxu0 0
        %773 = vmatpush1.bf16.msra.mxu0 0
        %774 = vmatprep.subr.bf16.mxu0 0
        %775 = vmatpush1.bf16.msra.mxu0 0
        %776 = vmatprep.subr.bf16.mxu0 0
        %777 = vmatpush1.bf16.msra.mxu0 %v760
        %778 = vmatprep.subr.bf16.mxu0 0
        %779 = vmatpush2.bf16.msra.mxu0 0
        %780 = vmatprep.subr.bf16.mxu0 0
        %781 = vmatpush2.bf16.msra.mxu0 0
        %782 = vmatprep.subr.bf16.mxu0 0
        %783 = vmatpush2.bf16.msra.mxu0 0
        %784 = vmatprep.subr.bf16.mxu0 0
        %785 = vmatpush2.bf16.msra.mxu0 0
        %786 = vmatprep.subr.bf16.mxu0 0
        %787 = vmatpush2.bf16.msra.mxu0 0
        %788 = vmatprep.subr.bf16.mxu0 0
        %789 = vmatpush2.bf16.msra.mxu0 0
        %790 = vmatprep.subr.bf16.mxu0 0
        %791 = vmatpush2.bf16.msra.mxu0 0
        %792 = vmatprep.subr.bf16.mxu0 0
        %793 = vmatpush2.bf16.msra.mxu0 0
        %794 = vmatprep.mubr.bf16.mxu0 0
        %795 = vmatmul.mubr.bf16.gmra.mxu0 %v757
        %v796 = vpop.f32.mrf.mxu0
        %v797 = vadd.f32 0.0, %v796
        %v798 = vpop.f32.mrf.mxu0
        %v799 = vpop.f32.mrf.mxu0
        %v800 = vpop.f32.mrf.mxu0
        %801 = vdwg.mxu0
        %v802 = vpack.c.bf16 %v797, %v797
        %803 = vrot.lane.b32.xlu0 %v590, 112
        %v804 = vpop.permute.xlu0 %803
        %805 = vrot.lane.b32.xlu0 %v590, 80
        %v806 = vpop.permute.xlu0 %805
        %v808 = vsel %vm601, %v804, 0
        %v811 = vsel %vm601, %v806, 0
        %813 = vmatprep.subr.bf16.mxu0 0
        %814 = vmatpush1.bf16.xpose.msra.mxu0 0
        %815 = vmatprep.subr.bf16.mxu0 0
        %816 = vmatpush1.bf16.xpose.msra.mxu0 0
        %817 = vmatprep.subr.bf16.mxu0 0
        %818 = vmatpush1.bf16.xpose.msra.mxu0 0
        %819 = vmatprep.subr.bf16.mxu0 0
        %820 = vmatpush1.bf16.xpose.msra.mxu0 0
        %821 = vmatprep.subr.bf16.mxu0 0
        %822 = vmatpush1.bf16.xpose.msra.mxu0 0
        %823 = vmatprep.subr.bf16.mxu0 0
        %824 = vmatpush1.bf16.xpose.msra.mxu0 0
        %825 = vmatprep.subr.bf16.mxu0 0
        %826 = vmatpush1.bf16.xpose.msra.mxu0 0
        %827 = vmatprep.subr.bf16.mxu0 0
        %828 = vmatpush1.bf16.xpose.msra.mxu0 %v811
        %829 = vmatprep.subr.bf16.mxu0 0
        %830 = vmatpush2.bf16.xpose.msra.mxu0 0
        %831 = vmatprep.subr.bf16.mxu0 0
        %832 = vmatpush2.bf16.xpose.msra.mxu0 0
        %833 = vmatprep.subr.bf16.mxu0 0
        %834 = vmatpush2.bf16.xpose.msra.mxu0 0
        %835 = vmatprep.subr.bf16.mxu0 0
        %836 = vmatpush2.bf16.xpose.msra.mxu0 0
        %837 = vmatprep.subr.bf16.mxu0 0
        %838 = vmatpush2.bf16.xpose.msra.mxu0 0
        %839 = vmatprep.subr.bf16.mxu0 0
        %840 = vmatpush2.bf16.xpose.msra.mxu0 0
        %841 = vmatprep.subr.bf16.mxu0 0
        %842 = vmatpush2.bf16.xpose.msra.mxu0 0
        %843 = vmatprep.subr.bf16.mxu0 0
        %844 = vmatpush2.bf16.xpose.msra.mxu0 0
        %845 = vmatprep.mubr.bf16.mxu0 0
        %846 = vmatmul.mubr.bf16.gmra.mxu0 %v808
        %v847 = vpop.f32.mrf.mxu0
        %v848 = vadd.f32 0.0, %v847
        %v849 = vpop.f32.mrf.mxu0
        %v850 = vpop.f32.mrf.mxu0
        %v851 = vpop.f32.mrf.mxu0
        %852 = vdwg.mxu0
        %v853 = vmax.f32 %v848, 0.0
        %v854 = vmul.f32 %v853, %v597
        %v855 = vpack.c.bf16 %v854, %v854
        %856 = vrot.lane.b32.xlu0 %v590, 48
        %v857 = vpop.permute.xlu0 %856
        %v859 = vsel %vm601, %v855, 0
        %v862 = vsel %vm656, %v857, 0
        %864 = vmatprep.subr.bf16.mxu0 0
        %865 = vmatpush1.bf16.msra.mxu0 0
        %866 = vmatprep.subr.bf16.mxu0 0
        %867 = vmatpush1.bf16.msra.mxu0 0
        %868 = vmatprep.subr.bf16.mxu0 0
        %869 = vmatpush1.bf16.msra.mxu0 0
        %870 = vmatprep.subr.bf16.mxu0 0
        %871 = vmatpush1.bf16.msra.mxu0 0
        %872 = vmatprep.subr.bf16.mxu0 0
        %873 = vmatpush1.bf16.msra.mxu0 0
        %874 = vmatprep.subr.bf16.mxu0 0
        %875 = vmatpush1.bf16.msra.mxu0 0
        %876 = vmatprep.subr.bf16.mxu0 0
        %877 = vmatpush1.bf16.msra.mxu0 0
        %878 = vmatprep.subr.bf16.mxu0 0
        %879 = vmatpush1.bf16.msra.mxu0 %v862
        %880 = vmatprep.subr.bf16.mxu0 0
        %881 = vmatpush2.bf16.msra.mxu0 0
        %882 = vmatprep.subr.bf16.mxu0 0
        %883 = vmatpush2.bf16.msra.mxu0 0
        %884 = vmatprep.subr.bf16.mxu0 0
        %885 = vmatpush2.bf16.msra.mxu0 0
        %886 = vmatprep.subr.bf16.mxu0 0
        %887 = vmatpush2.bf16.msra.mxu0 0
        %888 = vmatprep.subr.bf16.mxu0 0
        %889 = vmatpush2.bf16.msra.mxu0 0
        %890 = vmatprep.subr.bf16.mxu0 0
        %891 = vmatpush2.bf16.msra.mxu0 0
        %892 = vmatprep.subr.bf16.mxu0 0
        %893 = vmatpush2.bf16.msra.mxu0 0
        %894 = vmatprep.subr.bf16.mxu0 0
        %895 = vmatpush2.bf16.msra.mxu0 0
        %896 = vmatprep.mubr.bf16.mxu0 0
        %897 = vmatmul.mubr.bf16.gmra.mxu0 %v859
        %v898 = vpop.f32.mrf.mxu0
        %v899 = vadd.f32 0.0, %v898
        %v900 = vpop.f32.mrf.mxu0
        %v901 = vpop.f32.mrf.mxu0
        %v902 = vpop.f32.mrf.mxu0
        %903 = vdwg.mxu0
        %v904 = vpack.c.bf16 %v899, %v899
        %905 = vrot.lane.b32.xlu0 %v590, 104
        %v906 = vpop.permute.xlu0 %905
        %907 = vrot.lane.b32.xlu0 %v590, 72
        %v908 = vpop.permute.xlu0 %907
        %v910 = vsel %vm601, %v906, 0
        %v913 = vsel %vm601, %v908, 0
        %915 = vmatprep.subr.bf16.mxu0 0
        %916 = vmatpush1.bf16.xpose.msra.mxu0 0
        %917 = vmatprep.subr.bf16.mxu0 0
        %918 = vmatpush1.bf16.xpose.msra.mxu0 0
        %919 = vmatprep.subr.bf16.mxu0 0
        %920 = vmatpush1.bf16.xpose.msra.mxu0 0
        %921 = vmatprep.subr.bf16.mxu0 0
        %922 = vmatpush1.bf16.xpose.msra.mxu0 0
        %923 = vmatprep.subr.bf16.mxu0 0
        %924 = vmatpush1.bf16.xpose.msra.mxu0 0
        %925 = vmatprep.subr.bf16.mxu0 0
        %926 = vmatpush1.bf16.xpose.msra.mxu0 0
        %927 = vmatprep.subr.bf16.mxu0 0
        %928 = vmatpush1.bf16.xpose.msra.mxu0 0
        %929 = vmatprep.subr.bf16.mxu0 0
        %930 = vmatpush1.bf16.xpose.msra.mxu0 %v913
        %931 = vmatprep.subr.bf16.mxu0 0
        %932 = vmatpush2.bf16.xpose.msra.mxu0 0
        %933 = vmatprep.subr.bf16.mxu0 0
        %934 = vmatpush2.bf16.xpose.msra.mxu0 0
        %935 = vmatprep.subr.bf16.mxu0 0
        %936 = vmatpush2.bf16.xpose.msra.mxu0 0
        %937 = vmatprep.subr.bf16.mxu0 0
        %938 = vmatpush2.bf16.xpose.msra.mxu0 0
        %939 = vmatprep.subr.bf16.mxu0 0
        %940 = vmatpush2.bf16.xpose.msra.mxu0 0
        %941 = vmatprep.subr.bf16.mxu0 0
        %942 = vmatpush2.bf16.xpose.msra.mxu0 0
        %943 = vmatprep.subr.bf16.mxu0 0
        %944 = vmatpush2.bf16.xpose.msra.mxu0 0
        %945 = vmatprep.subr.bf16.mxu0 0
        %946 = vmatpush2.bf16.xpose.msra.mxu0 0
        %947 = vmatprep.mubr.bf16.mxu0 0
        %948 = vmatmul.mubr.bf16.gmra.mxu0 %v910
        %v949 = vpop.f32.mrf.mxu0
        %v950 = vadd.f32 0.0, %v949
        %v951 = vpop.f32.mrf.mxu0
        %v952 = vpop.f32.mrf.mxu0
        %v953 = vpop.f32.mrf.mxu0
        %954 = vdwg.mxu0
        %v955 = vmax.f32 %v950, 0.0
        %v956 = vmul.f32 %v955, %v597
        %v957 = vpack.c.bf16 %v956, %v956
        %958 = vrot.lane.b32.xlu0 %v590, 40
        %v959 = vpop.permute.xlu0 %958
        %v961 = vsel %vm601, %v957, 0
        %v964 = vsel %vm656, %v959, 0
        %966 = vmatprep.subr.bf16.mxu0 0
        %967 = vmatpush1.bf16.msra.mxu0 0
        %968 = vmatprep.subr.bf16.mxu0 0
        %969 = vmatpush1.bf16.msra.mxu0 0
        %970 = vmatprep.subr.bf16.mxu0 0
        %971 = vmatpush1.bf16.msra.mxu0 0
        %972 = vmatprep.subr.bf16.mxu0 0
        %973 = vmatpush1.bf16.msra.mxu0 0
        %974 = vmatprep.subr.bf16.mxu0 0
        %975 = vmatpush1.bf16.msra.mxu0 0
        %976 = vmatprep.subr.bf16.mxu0 0
        %977 = vmatpush1.bf16.msra.mxu0 0
        %978 = vmatprep.subr.bf16.mxu0 0
        %979 = vmatpush1.bf16.msra.mxu0 0
        %980 = vmatprep.subr.bf16.mxu0 0
        %981 = vmatpush1.bf16.msra.mxu0 %v964
        %982 = vmatprep.subr.bf16.mxu0 0
        %983 = vmatpush2.bf16.msra.mxu0 0
        %984 = vmatprep.subr.bf16.mxu0 0
        %985 = vmatpush2.bf16.msra.mxu0 0
        %986 = vmatprep.subr.bf16.mxu0 0
        %987 = vmatpush2.bf16.msra.mxu0 0
        %988 = vmatprep.subr.bf16.mxu0 0
        %989 = vmatpush2.bf16.msra.mxu0 0
        %990 = vmatprep.subr.bf16.mxu0 0
        %991 = vmatpush2.bf16.msra.mxu0 0
        %992 = vmatprep.subr.bf16.mxu0 0
        %993 = vmatpush2.bf16.msra.mxu0 0
        %994 = vmatprep.subr.bf16.mxu0 0
        %995 = vmatpush2.bf16.msra.mxu0 0
        %996 = vmatprep.subr.bf16.mxu0 0
        %997 = vmatpush2.bf16.msra.mxu0 0
        %998 = vmatprep.mubr.bf16.mxu0 0
        %999 = vmatmul.mubr.bf16.gmra.mxu0 %v961
        %v1000 = vpop.f32.mrf.mxu0
        %v1001 = vadd.f32 0.0, %v1000
        %v1002 = vpop.f32.mrf.mxu0
        %v1003 = vpop.f32.mrf.mxu0
        %v1004 = vpop.f32.mrf.mxu0
        %1005 = vdwg.mxu0
        %v1006 = vpack.c.bf16 %v1001, %v1001
        %1008 = vrot.lane.b32.xlu0 %v802, 8
        %v1009 = vpop.permute.xlu0 %1008
        %1011 = vrot.lane.b32.xlu0 %v904, 16
        %v1012 = vpop.permute.xlu0 %1011
        %1014 = vrot.lane.b32.xlu0 %v1006, 24
        %v1015 = vpop.permute.xlu0 %1014
        %v1018 = vsel %vm601, %v700, %v1009
        %vm1019 = vcmask 130048
        %v1021 = vsel %vm1019, %v1018, %v1012
        %vm1022 = vcmask 195584
        %v1024 = vsel %vm1022, %v1021, %v1015
        %v1025 = vld [vmem:[%s5] sm:$0xf]
        %v1026 = vld [vmem:[%s5 + $0x4] sm:$0xf]
        %v1027 = vld [vmem:[%s5 + $0x8] sm:$0xf]
        %v1028 = vld [vmem:[%s5 + $0xc] sm:$0xf]
        %v1029 = vld [vmem:[%s6] sm:$0x1]
        %v1031 = vlaneseq
        %v1032 = vshrl.u32 %v1031, 7
        %v1033 = vsub.s32 0, %v1032
        %v1034 = vrot.slane %v1029, %v1033
        %v1040 = vunpack.c.l.b16 %v1025
        %v1041 = vunpack.c.l.b16 %v1026
        %v1042 = vunpack.c.l.b16 %v1027
        %v1043 = vunpack.c.l.b16 %v1028
        %v1044 = vpack.c.b16 %v1041, %v1040
        %v1045 = vpack.c.b16 %v1043, %v1042
        %v1048 = vsel %vm493, %v1024, 0
        %1050 = vmatprep.subr.bf16.mxu0 0
        %1051 = vmatpush1.bf16.msra.mxu0 0
        %1052 = vmatprep.subr.bf16.mxu0 0
        %1053 = vmatpush1.bf16.msra.mxu0 0
        %1054 = vmatprep.subr.bf16.mxu0 0
        %1055 = vmatpush1.bf16.msra.mxu0 0
        %1056 = vmatprep.subr.bf16.mxu0 0
        %1057 = vmatpush1.bf16.msra.mxu0 0
        %1058 = vmatprep.subr.bf16.mxu0 0
        %1059 = vmatpush1.bf16.msra.mxu0 0
        %1060 = vmatprep.subr.bf16.mxu0 0
        %1061 = vmatpush1.bf16.msra.mxu0 0
        %1062 = vmatprep.subr.bf16.mxu0 0
        %1063 = vmatpush1.bf16.msra.mxu0 %v1045
        %1064 = vmatprep.subr.bf16.mxu0 0
        %1065 = vmatpush1.bf16.msra.mxu0 %v1044
        %1066 = vmatprep.subr.bf16.mxu0 0
        %1067 = vmatpush2.bf16.msra.mxu0 0
        %1068 = vmatprep.subr.bf16.mxu0 0
        %1069 = vmatpush2.bf16.msra.mxu0 0
        %1070 = vmatprep.subr.bf16.mxu0 0
        %1071 = vmatpush2.bf16.msra.mxu0 0
        %1072 = vmatprep.subr.bf16.mxu0 0
        %1073 = vmatpush2.bf16.msra.mxu0 0
        %1074 = vmatprep.subr.bf16.mxu0 0
        %1075 = vmatpush2.bf16.msra.mxu0 0
        %1076 = vmatprep.subr.bf16.mxu0 0
        %1077 = vmatpush2.bf16.msra.mxu0 0
        %1078 = vmatprep.subr.bf16.mxu0 0
        %1079 = vmatpush2.bf16.msra.mxu0 0
        %1080 = vmatprep.subr.bf16.mxu0 0
        %1081 = vmatpush2.bf16.msra.mxu0 0
        %1082 = vmatprep.mubr.bf16.mxu0 0
        %1083 = vmatmul.mubr.bf16.gmra.mxu0 %v1048
        %v1084 = vpop.f32.mrf.mxu0
        %v1085 = vadd.f32 %v1034, %v1084
        %v1086 = vpop.f32.mrf.mxu0
        %v1087 = vpop.f32.mrf.mxu0
        %v1088 = vpop.f32.mrf.mxu0
        %1089 = vdwg.mxu0
        %v1090 = vadd.f32 %v490, %v1085
        %v1091 = vld [vmem:[#allocation2] sm:$0x1]
        %v1092 = vld [vmem:[#allocation5] sm:$0x1]
        %v1093 = vsel %vm493, %v1090, 0.0
        %1094 = vadd.xlane.f32.xlu0 %v1093
        %v1095 = vpop.xlane.xlu0 %1094
        %v1096 = vmul.f32 %v1095, %v497
        %v1097 = vsub.f32 %v1090, %v1096
        %v1098 = vmul.f32 %v1097, %v1097
        %v1099 = vsel %vm493, %v1098, 0.0
        %1100 = vadd.xlane.f32.xlu0 %v1099
        %v1101 = vpop.xlane.xlu0 %1100
        %v1102 = vmul.f32 %v1101, %v497
        %v1103 = vadd.f32 %v1102, 1e-05
        %v1104 = vrsqrt.pop %v1103
        %v1105 = vmul.f32 %v1097, %v1104
        %v1107 = vlaneseq
        %v1108 = vshrl.u32 %v1107, 7
        %v1109 = vsub.s32 0, %v1108
        %v1110 = vrot.slane %v1091, %v1109
        %v1112 = vmul.f32 %v1105, %v1110
        %v1114 = vlaneseq
        %v1115 = vshrl.u32 %v1114, 7
        %v1116 = vsub.s32 0, %v1115
        %v1117 = vrot.slane %v1092, %v1116
        %v1119 = vadd.f32 %v1112, %v1117
        %v1120 = vpack.c.bf16 %v1119, %v1119
        %v1121 = vld [vmem:[#allocation7] sm:$0xf]
        %v1122 = vld [vmem:[#allocation7 + $0x4] sm:$0xf]
        %v1123 = vld [vmem:[#allocation7 + $0x8] sm:$0xf]
        %v1124 = vld [vmem:[#allocation7 + $0xc] sm:$0xf]
        %v1125 = vld [vmem:[#allocation8] sm:$0x1]
        %v1127 = vlaneseq
        %v1128 = vshrl.u32 %v1127, 7
        %v1129 = vsub.s32 0, %v1128
        %v1130 = vrot.slane %v1125, %v1129
        %v1136 = vunpack.c.l.b16 %v1121
        %v1137 = vunpack.c.l.b16 %v1122
        %v1138 = vunpack.c.l.b16 %v1123
        %v1139 = vunpack.c.l.b16 %v1124
        %v1140 = vpack.c.b16 %v1137, %v1136
        %v1141 = vpack.c.b16 %v1139, %v1138
        %v1145 = vsel %vm493, %v1120, 0
        %1147 = vmatprep.subr.bf16.mxu0 0
        %1148 = vmatpush1.bf16.msra.mxu0 0
        %1149 = vmatprep.subr.bf16.mxu0 0
        %1150 = vmatpush1.bf16.msra.mxu0 0
        %1151 = vmatprep.subr.bf16.mxu0 0
        %1152 = vmatpush1.bf16.msra.mxu0 0
        %1153 = vmatprep.subr.bf16.mxu0 0
        %1154 = vmatpush1.bf16.msra.mxu0 0
        %1155 = vmatprep.subr.bf16.mxu0 0
        %1156 = vmatpush1.bf16.msra.mxu0 0
        %1157 = vmatprep.subr.bf16.mxu0 0
        %1158 = vmatpush1.bf16.msra.mxu0 0
        %1159 = vmatprep.subr.bf16.mxu0 0
        %1160 = vmatpush1.bf16.msra.mxu0 %v1141
        %1161 = vmatprep.subr.bf16.mxu0 0
        %1162 = vmatpush1.bf16.msra.mxu0 %v1140
        %1163 = vmatprep.subr.bf16.mxu0 0
        %1164 = vmatpush2.bf16.msra.mxu0 0
        %1165 = vmatprep.subr.bf16.mxu0 0
        %1166 = vmatpush2.bf16.msra.mxu0 0
        %1167 = vmatprep.subr.bf16.mxu0 0
        %1168 = vmatpush2.bf16.msra.mxu0 0
        %1169 = vmatprep.subr.bf16.mxu0 0
        %1170 = vmatpush2.bf16.msra.mxu0 0
        %1171 = vmatprep.subr.bf16.mxu0 0
        %1172 = vmatpush2.bf16.msra.mxu0 0
        %1173 = vmatprep.subr.bf16.mxu0 0
        %1174 = vmatpush2.bf16.msra.mxu0 0
        %1175 = vmatprep.subr.bf16.mxu0 0
        %1176 = vmatpush2.bf16.msra.mxu0 0
        %1177 = vmatprep.subr.bf16.mxu0 0
        %1178 = vmatpush2.bf16.msra.mxu0 0
        %1179 = vmatprep.mubr.bf16.mxu0 0
        %1180 = vmatmul.mubr.bf16.gmra.mxu0 %v1145
        %v1181 = vpop.f32.mrf.mxu0
        %v1182 = vadd.f32 %v1130, %v1181
        %v1183 = vpop.f32.mrf.mxu0
        %v1184 = vpop.f32.mrf.mxu0
        %v1185 = vpop.f32.mrf.mxu0
        %1186 = vdwg.mxu0
        %v1187 = vmax.f32 %v1182, 0.0
        %v1188 = vpack.c.bf16 %v1187, %v1187
        %v1189 = vld [vmem:[%s11] sm:$0xf]
        %v1190 = vld [vmem:[%s11 + $0x4] sm:$0xf]
        %v1191 = vld [vmem:[%s11 + $0x8] sm:$0xf]
        %v1192 = vld [vmem:[%s11 + $0xc] sm:$0xf]
        %v1193 = vld [vmem:[%s11 + $0x10] sm:$0xf]
        %v1194 = vld [vmem:[%s11 + $0x14] sm:$0xf]
        %v1195 = vld [vmem:[%s11 + $0x18] sm:$0xf]
        %v1196 = vld [vmem:[%s11 + $0x1c] sm:$0xf]
        %v1197 = vld [vmem:[%s12] sm:$0x1]
        %v1199 = vlaneseq
        %v1200 = vshrl.u32 %v1199, 7
        %v1201 = vsub.s32 0, %v1200
        %v1202 = vrot.slane %v1197, %v1201
        %v1212 = vunpack.c.l.b16 %v1189
        %v1213 = vunpack.c.l.b16 %v1190
        %v1214 = vunpack.c.l.b16 %v1191
        %v1215 = vunpack.c.l.b16 %v1192
        %v1216 = vunpack.c.l.b16 %v1193
        %v1217 = vunpack.c.l.b16 %v1194
        %v1218 = vunpack.c.l.b16 %v1195
        %v1219 = vunpack.c.l.b16 %v1196
        %v1220 = vpack.c.b16 %v1213, %v1212
        %v1221 = vpack.c.b16 %v1215, %v1214
        %v1222 = vpack.c.b16 %v1217, %v1216
        %v1223 = vpack.c.b16 %v1219, %v1218
        %vm1228 = vcmask 523264
        %v1230 = vsel %vm1228, %v1188, 0
        %1232 = vmatprep.subr.bf16.mxu0 0
        %1233 = vmatpush1.bf16.msra.mxu0 0
        %1234 = vmatprep.subr.bf16.mxu0 0
        %1235 = vmatpush1.bf16.msra.mxu0 0
        %1236 = vmatprep.subr.bf16.mxu0 0
        %1237 = vmatpush1.bf16.msra.mxu0 0
        %1238 = vmatprep.subr.bf16.mxu0 0
        %1239 = vmatpush1.bf16.msra.mxu0 0
        %1240 = vmatprep.subr.bf16.mxu0 0
        %1241 = vmatpush1.bf16.msra.mxu0 %v1223
        %1242 = vmatprep.subr.bf16.mxu0 0
        %1243 = vmatpush1.bf16.msra.mxu0 %v1222
        %1244 = vmatprep.subr.bf16.mxu0 0
        %1245 = vmatpush1.bf16.msra.mxu0 %v1221
        %1246 = vmatprep.subr.bf16.mxu0 0
        %1247 = vmatpush1.bf16.msra.mxu0 %v1220
        %1248 = vmatprep.subr.bf16.mxu0 0
        %1249 = vmatpush2.bf16.msra.mxu0 0
        %1250 = vmatprep.subr.bf16.mxu0 0
        %1251 = vmatpush2.bf16.msra.mxu0 0
        %1252 = vmatprep.subr.bf16.mxu0 0
        %1253 = vmatpush2.bf16.msra.mxu0 0
        %1254 = vmatprep.subr.bf16.mxu0 0
        %1255 = vmatpush2.bf16.msra.mxu0 0
        %1256 = vmatprep.subr.bf16.mxu0 0
        %1257 = vmatpush2.bf16.msra.mxu0 0
        %1258 = vmatprep.subr.bf16.mxu0 0
        %1259 = vmatpush2.bf16.msra.mxu0 0
        %1260 = vmatprep.subr.bf16.mxu0 0
        %1261 = vmatpush2.bf16.msra.mxu0 0
        %1262 = vmatprep.subr.bf16.mxu0 0
        %1263 = vmatpush2.bf16.msra.mxu0 0
        %1264 = vmatprep.mubr.bf16.mxu0 0
        %1265 = vmatmul.mubr.bf16.gmra.mxu0 %v1230
        %v1266 = vpop.f32.mrf.mxu0
        %v1267 = vadd.f32 %v1202, %v1266
        %v1268 = vpop.f32.mrf.mxu0
        %v1269 = vpop.f32.mrf.mxu0
        %v1270 = vpop.f32.mrf.mxu0
        %1271 = vdwg.mxu0
        %v1272 = vadd.f32 %v1090, %v1267
        %1273 = vst.msk [vmem:[%s484] sm:$0xff] %vm493, %v1272
        %s1274 = sand.u32 %s316, 1
        %s1275 = scalar_lea.sflag [#allocation4], %s1274
        %s1276 = sand.u32 %s316, 1
        %s1277 = smul.addr %s1276, 8
        %s1278 = scalar_lea.vmem [#allocation10], %s1277
        // Predicated region
        $region89: #{tpu_custom_call.1} parent=71 // pred_check
          %p1279 = pneg %p326
        $region90: #{tpu_custom_call.1} parent=71 // pred_check_branch
          %1281 = sbr.rel (%p1279) target = $region92
        $region91: #{tpu_custom_call.1} parent=71 // pred_region
          %s1283 = ssub.s32 128, 128
          %1284 = vsyncadd %s1275, %s1283
          %s1285 = smul.addr %s30, 128
          %s1286 = scalar_lea.hbm %s13, %s1285
          %s1288 = sshll.u32 %s1278, 4
          %s1289 = int_to_ptr.vmem [resolvable:$true] %s1288
          %1291 = dma.vmem_to_hbm [thread:$0]  %s1289, 128, %s1286, %s1275
        $region92: #{tpu_custom_call.1} parent=71 // pred_fallthru
          _
      $region72: #{tpu_custom_call.1} parent=5 // pred_fallthru
        _
      %p1292 = scmp.le.s32.totalorder 2, %s25
      // Predicated region
      $region93: #{tpu_custom_call.1} parent=5 // pred_check
        %p1293 = pneg %p1292
      $region94: #{tpu_custom_call.1} parent=5 // pred_check_branch
        %1295 = sbr.rel (%p1293) target = $region96
      $region95: #{tpu_custom_call.1} parent=5 // pred_region
        %s1296 = ssub.s32 %s25, 2
        // Predicated region
        $region97: #{tpu_custom_call.1} parent=95 // pred_check
          %p1297 = pneg %p332
        $region98: #{tpu_custom_call.1} parent=95 // pred_check_branch
          %1299 = sbr.rel (%p1297) target = $region100
        $region99: #{tpu_custom_call.1} parent=95 // pred_region
          %s1300 = sand.u32 %s317, 1
          %s1301 = scalar_lea.sflag [#allocation4], %s1300
          %s1302 = sand.u32 %s317, 1
          %s1303 = smul.addr %s1302, 8
          %s1304 = scalar_lea.vmem [#allocation10], %s1303
          %1305 = dma.done %s1301, 128
        $region100: #{tpu_custom_call.1} parent=95 // pred_fallthru
          _
      $region96: #{tpu_custom_call.1} parent=5 // pred_fallthru
        _
    $region6: #{tpu_custom_call.1} parent=1 // loop_footer
      %s29 = sadd.s32 1, %s25
    $region7: #{tpu_custom_call.1} parent=1 // loop_footer_branch
      %24 = sbr.rel target = $region3
    $region8: #{tpu_custom_call.1} parent=1 // loop_exit
      _
    %1306 = vsyncpa [#allocation3], 1
    %s1307 = scalar_lea.sflag [#allocation3], 1
    %1308 = vsyncpa %s1307, 1
    %1309 = vsyncpa [#allocation6], 1
    %1310 = vsyncpa [#allocation9], 1
    %1311 = vsyncpa [#allocation4], 1
    %s1312 = scalar_lea.sflag [#allocation4], 1
    %1313 = vsyncpa %s1312, 1

</llo_original>
